<compile_context>
chip_gen: v5e
topology: v5e:2x2
jax: 0.10.0
libtpu: 0.0.40
codegen_flags: <defaults>
</compile_context>

<pallas_src>
import jax
import jax.numpy as jnp
import numpy as np
from jax.experimental import pallas as pl
from jax.experimental.pallas import tpu as pltpu

DEGREE = 4
NUM_VARS = 5          # input channels / polynomial variables
NUM_OUT = 3           # output channels
ROWS = 16             # sublane packing factor: one bf16 (16,128) tile per slab


def generate_powers(order, n_variables):
    """Verbatim port of ChannelPolyLayer.generate_powers (defines term order)."""
    pattern = [0] * n_variables
    yield tuple(pattern)
    for current_sum in range(1, order + 1):
        pattern[0] = current_sum
        yield tuple(pattern)
        while pattern[-1] < current_sum:
            for i in range(2, n_variables + 1):
                if 0 < pattern[n_variables - i]:
                    pattern[n_variables - i] -= 1
                    if 2 < i:
                        pattern[n_variables - i + 1] = 1 + pattern[-1]
                        pattern[-1] = 0
                    else:
                        pattern[-1] += 1
                    break
            yield tuple(pattern)
        pattern[-1] = 0


POWERS = tuple(generate_powers(DEGREE, NUM_VARS))
NUM_COEFFS = len(POWERS)                 # C(5+4, 4) = 126
POW_INDEX = {pw: k for k, pw in enumerate(POWERS)}
K_PACKED = NUM_COEFFS * ROWS             # 2016 (no padding needed)


def _round_up(x, m):
    return ((x + m - 1) // m) * m


def _emit_monomials(write, chs):
    """DFS emission: each degree>=2 monomial is one f32 multiply of its parent,
    which is still live in vregs (no basis reloads).  Exactly 120 multiplies."""
    write(POW_INDEX[(0,) * NUM_VARS], jnp.ones_like(chs[0]))

    def rec(val, pw, start, depth):
        for i in range(start, NUM_VARS):
            new_pw = list(pw)
            new_pw[i] += 1
            new_pw = tuple(new_pw)
            new_val = chs[i] if val is None else val * chs[i]
            write(POW_INDEX[new_pw], new_val)
            if depth + 1 < DEGREE:
                rec(new_val, new_pw, i, depth + 1)

    rec(None, (0,) * NUM_VARS, 0, 0)


# ------------------------------- kernel --------------------------------------
def _make_kernel(tl, chunk):
    n_chunks = tl // chunk

    def kernel(cf_ref, img_ref, out_ref, basis_ref):
        # cf_ref    : (1, 48, 2016)  bf16  block-diag expanded coefficients
        # img_ref   : (1, 80, tl)    input; channel v occupies rows [16v, 16v+16)
        # out_ref   : (1, 48, tl)    f32;   out channel c at rows [16c, 16c+16)
        # basis_ref : (2016, tl)     bf16 scratch; monomial k at rows [16k, 16k+16)
        for c in range(n_chunks):
            cols = slice(c * chunk, (c + 1) * chunk)
            # f32 channel slabs for this lane chunk (bounded vreg pressure).
            chs = [img_ref[0, v * ROWS:(v + 1) * ROWS, cols].astype(jnp.float32)
                   for v in range(NUM_VARS)]

            def write(k, val, _cols=cols):
                # One bf16 rounding per monomial; aligned (16,128)-tile stores.
                basis_ref[k * ROWS:(k + 1) * ROWS, _cols] = val.astype(jnp.bfloat16)

            _emit_monomials(write, chs)

        # (48, 2016) @ (2016, tl) bf16 MXU contraction, f32 accumulation.
        out_ref[0] = jnp.dot(cf_ref[0], basis_ref[...],
                             preferred_element_type=jnp.float32)

    return kernel


# ------------------------------- wrapper --------------------------------------
def deg4_mobile_poly_forward(img, coeffs, *, tile_lanes=2048, chunk_lanes=256):
    """img: (B, 5, H, W); coeffs: reshapable to (B, 3, 126). Returns (B, 3, H, W)."""
    B, C, H, W = img.shape
    assert C == NUM_VARS, "There should be a polynomial variable per channel"
    N = H * W

    # Block-diagonal expansion: CF[c*16+s, k*16+t] = coeffs[c, k] * (s == t),
    # so the 16-row sublane packing becomes a plain 2-D MXU matmul.  bf16.
    coeffs = coeffs.reshape(B, NUM_OUT, NUM_COEFFS).astype(jnp.float32)
    eye = jnp.eye(ROWS, dtype=jnp.float32)
    cf_big = jnp.einsum("bck,st->bcskt", coeffs, eye)
    cf_big = cf_big.reshape(B, NUM_OUT * ROWS, K_PACKED).astype(jnp.bfloat16)

    # Lane geometry: pixel p of a channel -> (row p // L, lane p % L).
    # Pad L UP to a multiple of the lane tile (never collapse the tile).
    tile_lanes = max(128, (tile_lanes // 128) * 128)
    L0 = _round_up(-(-N // ROWS), 128)
    tl = L0 if L0 <= tile_lanes else tile_lanes
    L = _round_up(L0, tl)
    Np = ROWS * L

    chunk = max(128, (min(chunk_lanes, tl) // 128) * 128)
    while tl % chunk:
        chunk -= 128

    # Keep the input in its native dtype if it's already f32/bf16 (no wrapper upcast).
    x = img.reshape(B, C, N)
    if x.dtype not in (jnp.dtype(jnp.float32), jnp.dtype(jnp.bfloat16)):
        x = x.astype(jnp.float32)
    if Np != N:
        x = jnp.pad(x, ((0, 0), (0, 0), (0, Np - N)))
    x = x.reshape(B, C, ROWS, L).reshape(B, C * ROWS, L)

    out = pl.pallas_call(
        _make_kernel(tl, chunk),
        out_shape=jax.ShapeDtypeStruct((B, NUM_OUT * ROWS, L), jnp.float32),
        grid_spec=pltpu.PrefetchScalarGridSpec(
            num_scalar_prefetch=0,
            grid=(B, L // tl),
            in_specs=[
                pl.BlockSpec((1, NUM_OUT * ROWS, K_PACKED), lambda b, j: (b, 0, 0)),
                pl.BlockSpec((1, NUM_VARS * ROWS, tl), lambda b, j: (b, 0, j)),
            ],
            out_specs=pl.BlockSpec((1, NUM_OUT * ROWS, tl), lambda b, j: (b, 0, j)),
            scratch_shapes=[pltpu.VMEM((K_PACKED, tl), jnp.bfloat16)],
        ),
        compiler_params=pltpu.CompilerParams(
            dimension_semantics=("parallel", "parallel")),
    )(cf_big, x)

    out = out.reshape(B, NUM_OUT, ROWS, L).reshape(B, NUM_OUT, Np)[:, :, :N]
    return out.reshape(B, NUM_OUT, H, W)


# ----------------------------- pure-JAX reference -----------------------------
def _reference_forward(img, coeffs):
    B, C, H, W = img.shape
    x = img.reshape(B, C, H * W).astype(jnp.float32)
    terms = []
    for pw in POWERS:
        t = jnp.ones((B, H * W), jnp.float32)
        for i, p in enumerate(pw):
            if p:
                t = t * x[:, i, :] ** p
        terms.append(t)
    basis = jnp.stack(terms, axis=1)                       # (B, 126, N)
    cf = coeffs.reshape(B, NUM_OUT, NUM_COEFFS).astype(jnp.float32)
    out = jnp.einsum("bck,bkn->bcn", cf, basis,
                     precision=jax.lax.Precision.HIGHEST)
    return out.reshape(B, NUM_OUT, H, W)


def _check(B, H, W, key):
    k_img, k_cf = jax.random.split(key)
    img = jax.random.uniform(k_img, (B, NUM_VARS, H, W), jnp.float32)
    coeffs = 0.1 * jax.random.normal(k_cf, (B, NUM_OUT, NUM_COEFFS), jnp.float32)

    out = deg4_mobile_poly_forward(img, coeffs)
    out = jax.block_until_ready(out)
    assert out.shape == (B, NUM_OUT, H, W)

    ref = _reference_forward(img, coeffs)
    # Basis/coefficients are bf16-quantised (one rounding each); accumulation is
    # f32, so errors stay well inside these bounds.
    np.testing.assert_allclose(np.asarray(out), np.asarray(ref),
                               rtol=2e-2, atol=5e-3)


if __name__ == "__main__":
    assert NUM_COEFFS == 126, "C(5+4,4) should be 126"
    key = jax.random.PRNGKey(0)
    k1, k2 = jax.random.split(key)

    # Small shape (single 128-lane tile, single chunk).
    _check(B=2, H=16, W=16, key=k1)
    # Larger shape exercising the inner chunk loop (tl=512, two 256-lane chunks).
    _check(B=2, H=80, W=80, key=k2)

    print("KERNEL_OK")
</pallas_src>

<mosaic_0001>
module attributes {stable_mosaic.version = 11 : i64} {
  func.func @kernel(%arg0: i32, %arg1: i32, %arg2: memref<1x48x2016xbf16, #tpu.memory_space<vmem>>, %arg3: memref<1x80x128xf32, #tpu.memory_space<vmem>>, %arg4: memref<1x48x128xf32, #tpu.memory_space<vmem>>, %arg5: memref<2016x128xbf16, #tpu.memory_space<vmem>>) attributes {dimension_semantics = [#tpu.dimension_semantics<parallel>, #tpu.dimension_semantics<parallel>], iteration_bounds = array<i64: 2, 1>, scalar_prefetch = 0 : i64, scratch_operands = 1 : i64, tpu.core_type = #tpu.core_type<tc>, window_params = [{transform_indices = @transform_0, window_bounds = array<i64: 1, 48, 2016>}, {transform_indices = @transform_1, window_bounds = array<i64: 1, 80, 128>}, {transform_indices = @transform_2, window_bounds = array<i64: 1, 48, 128>}]} {
    %c0 = arith.constant 0 : index
    %c0_0 = arith.constant 0 : index
    %c0_1 = arith.constant 0 : index
    %0 = vector.load %arg3[%c0, %c0_0, %c0_1] : memref<1x80x128xf32, #tpu.memory_space<vmem>>, vector<1x16x128xf32>
    %1 = vector.shape_cast %0 : vector<1x16x128xf32> to vector<16x128xf32>
    %c0_2 = arith.constant 0 : index
    %c16 = arith.constant 16 : index
    %c0_3 = arith.constant 0 : index
    %2 = vector.load %arg3[%c0_2, %c16, %c0_3] : memref<1x80x128xf32, #tpu.memory_space<vmem>>, vector<1x16x128xf32>
    %3 = vector.shape_cast %2 : vector<1x16x128xf32> to vector<16x128xf32>
    %c0_4 = arith.constant 0 : index
    %c32 = arith.constant 32 : index
    %c0_5 = arith.constant 0 : index
    %4 = vector.load %arg3[%c0_4, %c32, %c0_5] : memref<1x80x128xf32, #tpu.memory_space<vmem>>, vector<1x16x128xf32>
    %5 = vector.shape_cast %4 : vector<1x16x128xf32> to vector<16x128xf32>
    %c0_6 = arith.constant 0 : index
    %c48 = arith.constant 48 : index
    %c0_7 = arith.constant 0 : index
    %6 = vector.load %arg3[%c0_6, %c48, %c0_7] : memref<1x80x128xf32, #tpu.memory_space<vmem>>, vector<1x16x128xf32>
    %7 = vector.shape_cast %6 : vector<1x16x128xf32> to vector<16x128xf32>
    %c0_8 = arith.constant 0 : index
    %c64 = arith.constant 64 : index
    %c0_9 = arith.constant 0 : index
    %8 = vector.load %arg3[%c0_8, %c64, %c0_9] : memref<1x80x128xf32, #tpu.memory_space<vmem>>, vector<1x16x128xf32>
    %9 = vector.shape_cast %8 : vector<1x16x128xf32> to vector<16x128xf32>
    %cst = arith.constant 1.000000e+00 : f32
    %10 = vector.broadcast %cst : f32 to vector<16x128xf32>
    %11 = arith.truncf %10 : vector<16x128xf32> to vector<16x128xbf16>
    %c0_10 = arith.constant 0 : index
    %c0_11 = arith.constant 0 : index
    %12 = vector.load %arg5[%c0_10, %c0_11] : memref<2016x128xbf16, #tpu.memory_space<vmem>>, vector<16x128xbf16>
    tpu.vector_store %arg5[%c0_10, %c0_11], %11 {strides = array<i32>} : memref<2016x128xbf16, #tpu.memory_space<vmem>>, vector<16x128xbf16>,
    %13 = arith.truncf %1 : vector<16x128xf32> to vector<16x128xbf16>
    %c16_12 = arith.constant 16 : index
    %c0_13 = arith.constant 0 : index
    %14 = vector.load %arg5[%c16_12, %c0_13] : memref<2016x128xbf16, #tpu.memory_space<vmem>>, vector<16x128xbf16>
    tpu.vector_store %arg5[%c16_12, %c0_13], %13 {strides = array<i32>} : memref<2016x128xbf16, #tpu.memory_space<vmem>>, vector<16x128xbf16>,
    %15 = arith.mulf %1, %1 : vector<16x128xf32>
    %16 = arith.truncf %15 : vector<16x128xf32> to vector<16x128xbf16>
    %c96 = arith.constant 96 : index
    %c0_14 = arith.constant 0 : index
    %17 = vector.load %arg5[%c96, %c0_14] : memref<2016x128xbf16, #tpu.memory_space<vmem>>, vector<16x128xbf16>
    tpu.vector_store %arg5[%c96, %c0_14], %16 {strides = array<i32>} : memref<2016x128xbf16, #tpu.memory_space<vmem>>, vector<16x128xbf16>,
    %18 = arith.mulf %15, %1 : vector<16x128xf32>
    %19 = arith.truncf %18 : vector<16x128xf32> to vector<16x128xbf16>
    %c336 = arith.constant 336 : index
    %c0_15 = arith.constant 0 : index
    %20 = vector.load %arg5[%c336, %c0_15] : memref<2016x128xbf16, #tpu.memory_space<vmem>>, vector<16x128xbf16>
    tpu.vector_store %arg5[%c336, %c0_15], %19 {strides = array<i32>} : memref<2016x128xbf16, #tpu.memory_space<vmem>>, vector<16x128xbf16>,
    %21 = arith.mulf %18, %1 : vector<16x128xf32>
    %22 = arith.truncf %21 : vector<16x128xf32> to vector<16x128xbf16>
    %c896 = arith.constant 896 : index
    %c0_16 = arith.constant 0 : index
    %23 = vector.load %arg5[%c896, %c0_16] : memref<2016x128xbf16, #tpu.memory_space<vmem>>, vector<16x128xbf16>
    tpu.vector_store %arg5[%c896, %c0_16], %22 {strides = array<i32>} : memref<2016x128xbf16, #tpu.memory_space<vmem>>, vector<16x128xbf16>,
    %24 = arith.mulf %18, %3 : vector<16x128xf32>
    %25 = arith.truncf %24 : vector<16x128xf32> to vector<16x128xbf16>
    %c912 = arith.constant 912 : index
    %c0_17 = arith.constant 0 : index
    %26 = vector.load %arg5[%c912, %c0_17] : memref<2016x128xbf16, #tpu.memory_space<vmem>>, vector<16x128xbf16>
    tpu.vector_store %arg5[%c912, %c0_17], %25 {strides = array<i32>} : memref<2016x128xbf16, #tpu.memory_space<vmem>>, vector<16x128xbf16>,
    %27 = arith.mulf %18, %5 : vector<16x128xf32>
    %28 = arith.truncf %27 : vector<16x128xf32> to vector<16x128xbf16>
    %c928 = arith.constant 928 : index
    %c0_18 = arith.constant 0 : index
    %29 = vector.load %arg5[%c928, %c0_18] : memref<2016x128xbf16, #tpu.memory_space<vmem>>, vector<16x128xbf16>
    tpu.vector_store %arg5[%c928, %c0_18], %28 {strides = array<i32>} : memref<2016x128xbf16, #tpu.memory_space<vmem>>, vector<16x128xbf16>,
    %30 = arith.mulf %18, %7 : vector<16x128xf32>
    %31 = arith.truncf %30 : vector<16x128xf32> to vector<16x128xbf16>
    %c944 = arith.constant 944 : index
    %c0_19 = arith.constant 0 : index
    %32 = vector.load %arg5[%c944, %c0_19] : memref<2016x128xbf16, #tpu.memory_space<vmem>>, vector<16x128xbf16>
    tpu.vector_store %arg5[%c944, %c0_19], %31 {strides = array<i32>} : memref<2016x128xbf16, #tpu.memory_space<vmem>>, vector<16x128xbf16>,
    %33 = arith.mulf %18, %9 : vector<16x128xf32>
    %34 = arith.truncf %33 : vector<16x128xf32> to vector<16x128xbf16>
    %c960 = arith.constant 960 : index
    %c0_20 = arith.constant 0 : index
    %35 = vector.load %arg5[%c960, %c0_20] : memref<2016x128xbf16, #tpu.memory_space<vmem>>, vector<16x128xbf16>
    tpu.vector_store %arg5[%c960, %c0_20], %34 {strides = array<i32>} : memref<2016x128xbf16, #tpu.memory_space<vmem>>, vector<16x128xbf16>,
    %36 = arith.mulf %15, %3 : vector<16x128xf32>
    %37 = arith.truncf %36 : vector<16x128xf32> to vector<16x128xbf16>
    %c352 = arith.constant 352 : index
    %c0_21 = arith.constant 0 : index
    %38 = vector.load %arg5[%c352, %c0_21] : memref<2016x128xbf16, #tpu.memory_space<vmem>>, vector<16x128xbf16>
    tpu.vector_store %arg5[%c352, %c0_21], %37 {strides = array<i32>} : memref<2016x128xbf16, #tpu.memory_space<vmem>>, vector<16x128xbf16>,
    %39 = arith.mulf %36, %3 : vector<16x128xf32>
    %40 = arith.truncf %39 : vector<16x128xf32> to vector<16x128xbf16>
    %c976 = arith.constant 976 : index
    %c0_22 = arith.constant 0 : index
    %41 = vector.load %arg5[%c976, %c0_22] : memref<2016x128xbf16, #tpu.memory_space<vmem>>, vector<16x128xbf16>
    tpu.vector_store %arg5[%c976, %c0_22], %40 {strides = array<i32>} : memref<2016x128xbf16, #tpu.memory_space<vmem>>, vector<16x128xbf16>,
    %42 = arith.mulf %36, %5 : vector<16x128xf32>
    %43 = arith.truncf %42 : vector<16x128xf32> to vector<16x128xbf16>
    %c992 = arith.constant 992 : index
    %c0_23 = arith.constant 0 : index
    %44 = vector.load %arg5[%c992, %c0_23] : memref<2016x128xbf16, #tpu.memory_space<vmem>>, vector<16x128xbf16>
    tpu.vector_store %arg5[%c992, %c0_23], %43 {strides = array<i32>} : memref<2016x128xbf16, #tpu.memory_space<vmem>>, vector<16x128xbf16>,
    %45 = arith.mulf %36, %7 : vector<16x128xf32>
    %46 = arith.truncf %45 : vector<16x128xf32> to vector<16x128xbf16>
    %c1008 = arith.constant 1008 : index
    %c0_24 = arith.constant 0 : index
    %47 = vector.load %arg5[%c1008, %c0_24] : memref<2016x128xbf16, #tpu.memory_space<vmem>>, vector<16x128xbf16>
    tpu.vector_store %arg5[%c1008, %c0_24], %46 {strides = array<i32>} : memref<2016x128xbf16, #tpu.memory_space<vmem>>, vector<16x128xbf16>,
    %48 = arith.mulf %36, %9 : vector<16x128xf32>
    %49 = arith.truncf %48 : vector<16x128xf32> to vector<16x128xbf16>
    %c1024 = arith.constant 1024 : index
    %c0_25 = arith.constant 0 : index
    %50 = vector.load %arg5[%c1024, %c0_25] : memref<2016x128xbf16, #tpu.memory_space<vmem>>, vector<16x128xbf16>
    tpu.vector_store %arg5[%c1024, %c0_25], %49 {strides = array<i32>} : memref<2016x128xbf16, #tpu.memory_space<vmem>>, vector<16x128xbf16>,
    %51 = arith.mulf %15, %5 : vector<16x128xf32>
    %52 = arith.truncf %51 : vector<16x128xf32> to vector<16x128xbf16>
    %c368 = arith.constant 368 : index
    %c0_26 = arith.constant 0 : index
    %53 = vector.load %arg5[%c368, %c0_26] : memref<2016x128xbf16, #tpu.memory_space<vmem>>, vector<16x128xbf16>
    tpu.vector_store %arg5[%c368, %c0_26], %52 {strides = array<i32>} : memref<2016x128xbf16, #tpu.memory_space<vmem>>, vector<16x128xbf16>,
    %54 = arith.mulf %51, %5 : vector<16x128xf32>
    %55 = arith.truncf %54 : vector<16x128xf32> to vector<16x128xbf16>
    %c1040 = arith.constant 1040 : index
    %c0_27 = arith.constant 0 : index
    %56 = vector.load %arg5[%c1040, %c0_27] : memref<2016x128xbf16, #tpu.memory_space<vmem>>, vector<16x128xbf16>
    tpu.vector_store %arg5[%c1040, %c0_27], %55 {strides = array<i32>} : memref<2016x128xbf16, #tpu.memory_space<vmem>>, vector<16x128xbf16>,
    %57 = arith.mulf %51, %7 : vector<16x128xf32>
    %58 = arith.truncf %57 : vector<16x128xf32> to vector<16x128xbf16>
    %c1056 = arith.constant 1056 : index
    %c0_28 = arith.constant 0 : index
    %59 = vector.load %arg5[%c1056, %c0_28] : memref<2016x128xbf16, #tpu.memory_space<vmem>>, vector<16x128xbf16>
    tpu.vector_store %arg5[%c1056, %c0_28], %58 {strides = array<i32>} : memref<2016x128xbf16, #tpu.memory_space<vmem>>, vector<16x128xbf16>,
    %60 = arith.mulf %51, %9 : vector<16x128xf32>
    %61 = arith.truncf %60 : vector<16x128xf32> to vector<16x128xbf16>
    %c1072 = arith.constant 1072 : index
    %c0_29 = arith.constant 0 : index
    %62 = vector.load %arg5[%c1072, %c0_29] : memref<2016x128xbf16, #tpu.memory_space<vmem>>, vector<16x128xbf16>
    tpu.vector_store %arg5[%c1072, %c0_29], %61 {strides = array<i32>} : memref<2016x128xbf16, #tpu.memory_space<vmem>>, vector<16x128xbf16>,
    %63 = arith.mulf %15, %7 : vector<16x128xf32>
    %64 = arith.truncf %63 : vector<16x128xf32> to vector<16x128xbf16>
    %c384 = arith.constant 384 : index
    %c0_30 = arith.constant 0 : index
    %65 = vector.load %arg5[%c384, %c0_30] : memref<2016x128xbf16, #tpu.memory_space<vmem>>, vector<16x128xbf16>
    tpu.vector_store %arg5[%c384, %c0_30], %64 {strides = array<i32>} : memref<2016x128xbf16, #tpu.memory_space<vmem>>, vector<16x128xbf16>,
    %66 = arith.mulf %63, %7 : vector<16x128xf32>
    %67 = arith.truncf %66 : vector<16x128xf32> to vector<16x128xbf16>
    %c1088 = arith.constant 1088 : index
    %c0_31 = arith.constant 0 : index
    %68 = vector.load %arg5[%c1088, %c0_31] : memref<2016x128xbf16, #tpu.memory_space<vmem>>, vector<16x128xbf16>
    tpu.vector_store %arg5[%c1088, %c0_31], %67 {strides = array<i32>} : memref<2016x128xbf16, #tpu.memory_space<vmem>>, vector<16x128xbf16>,
    %69 = arith.mulf %63, %9 : vector<16x128xf32>
    %70 = arith.truncf %69 : vector<16x128xf32> to vector<16x128xbf16>
    %c1104 = arith.constant 1104 : index
    %c0_32 = arith.constant 0 : index
    %71 = vector.load %arg5[%c1104, %c0_32] : memref<2016x128xbf16, #tpu.memory_space<vmem>>, vector<16x128xbf16>
    tpu.vector_store %arg5[%c1104, %c0_32], %70 {strides = array<i32>} : memref<2016x128xbf16, #tpu.memory_space<vmem>>, vector<16x128xbf16>,
    %72 = arith.mulf %15, %9 : vector<16x128xf32>
    %73 = arith.truncf %72 : vector<16x128xf32> to vector<16x128xbf16>
    %c400 = arith.constant 400 : index
    %c0_33 = arith.constant 0 : index
    %74 = vector.load %arg5[%c400, %c0_33] : memref<2016x128xbf16, #tpu.memory_space<vmem>>, vector<16x128xbf16>
    tpu.vector_store %arg5[%c400, %c0_33], %73 {strides = array<i32>} : memref<2016x128xbf16, #tpu.memory_space<vmem>>, vector<16x128xbf16>,
    %75 = arith.mulf %72, %9 : vector<16x128xf32>
    %76 = arith.truncf %75 : vector<16x128xf32> to vector<16x128xbf16>
    %c1120 = arith.constant 1120 : index
    %c0_34 = arith.constant 0 : index
    %77 = vector.load %arg5[%c1120, %c0_34] : memref<2016x128xbf16, #tpu.memory_space<vmem>>, vector<16x128xbf16>
    tpu.vector_store %arg5[%c1120, %c0_34], %76 {strides = array<i32>} : memref<2016x128xbf16, #tpu.memory_space<vmem>>, vector<16x128xbf16>,
    %78 = arith.mulf %1, %3 : vector<16x128xf32>
    %79 = arith.truncf %78 : vector<16x128xf32> to vector<16x128xbf16>
    %c112 = arith.constant 112 : index
    %c0_35 = arith.constant 0 : index
    %80 = vector.load %arg5[%c112, %c0_35] : memref<2016x128xbf16, #tpu.memory_space<vmem>>, vector<16x128xbf16>
    tpu.vector_store %arg5[%c112, %c0_35], %79 {strides = array<i32>} : memref<2016x128xbf16, #tpu.memory_space<vmem>>, vector<16x128xbf16>,
    %81 = arith.mulf %78, %3 : vector<16x128xf32>
    %82 = arith.truncf %81 : vector<16x128xf32> to vector<16x128xbf16>
    %c416 = arith.constant 416 : index
    %c0_36 = arith.constant 0 : index
    %83 = vector.load %arg5[%c416, %c0_36] : memref<2016x128xbf16, #tpu.memory_space<vmem>>, vector<16x128xbf16>
    tpu.vector_store %arg5[%c416, %c0_36], %82 {strides = array<i32>} : memref<2016x128xbf16, #tpu.memory_space<vmem>>, vector<16x128xbf16>,
    %84 = arith.mulf %81, %3 : vector<16x128xf32>
    %85 = arith.truncf %84 : vector<16x128xf32> to vector<16x128xbf16>
    %c1136 = arith.constant 1136 : index
    %c0_37 = arith.constant 0 : index
    %86 = vector.load %arg5[%c1136, %c0_37] : memref<2016x128xbf16, #tpu.memory_space<vmem>>, vector<16x128xbf16>
    tpu.vector_store %arg5[%c1136, %c0_37], %85 {strides = array<i32>} : memref<2016x128xbf16, #tpu.memory_space<vmem>>, vector<16x128xbf16>,
    %87 = arith.mulf %81, %5 : vector<16x128xf32>
    %88 = arith.truncf %87 : vector<16x128xf32> to vector<16x128xbf16>
    %c1152 = arith.constant 1152 : index
    %c0_38 = arith.constant 0 : index
    %89 = vector.load %arg5[%c1152, %c0_38] : memref<2016x128xbf16, #tpu.memory_space<vmem>>, vector<16x128xbf16>
    tpu.vector_store %arg5[%c1152, %c0_38], %88 {strides = array<i32>} : memref<2016x128xbf16, #tpu.memory_space<vmem>>, vector<16x128xbf16>,
    %90 = arith.mulf %81, %7 : vector<16x128xf32>
    %91 = arith.truncf %90 : vector<16x128xf32> to vector<16x128xbf16>
    %c1168 = arith.constant 1168 : index
    %c0_39 = arith.constant 0 : index
    %92 = vector.load %arg5[%c1168, %c0_39] : memref<2016x128xbf16, #tpu.memory_space<vmem>>, vector<16x128xbf16>
    tpu.vector_store %arg5[%c1168, %c0_39], %91 {strides = array<i32>} : memref<2016x128xbf16, #tpu.memory_space<vmem>>, vector<16x128xbf16>,
    %93 = arith.mulf %81, %9 : vector<16x128xf32>
    %94 = arith.truncf %93 : vector<16x128xf32> to vector<16x128xbf16>
    %c1184 = arith.constant 1184 : index
    %c0_40 = arith.constant 0 : index
    %95 = vector.load %arg5[%c1184, %c0_40] : memref<2016x128xbf16, #tpu.memory_space<vmem>>, vector<16x128xbf16>
    tpu.vector_store %arg5[%c1184, %c0_40], %94 {strides = array<i32>} : memref<2016x128xbf16, #tpu.memory_space<vmem>>, vector<16x128xbf16>,
    %96 = arith.mulf %78, %5 : vector<16x128xf32>
    %97 = arith.truncf %96 : vector<16x128xf32> to vector<16x128xbf16>
    %c432 = arith.constant 432 : index
    %c0_41 = arith.constant 0 : index
    %98 = vector.load %arg5[%c432, %c0_41] : memref<2016x128xbf16, #tpu.memory_space<vmem>>, vector<16x128xbf16>
    tpu.vector_store %arg5[%c432, %c0_41], %97 {strides = array<i32>} : memref<2016x128xbf16, #tpu.memory_space<vmem>>, vector<16x128xbf16>,
    %99 = arith.mulf %96, %5 : vector<16x128xf32>
    %100 = arith.truncf %99 : vector<16x128xf32> to vector<16x128xbf16>
    %c1200 = arith.constant 1200 : index
    %c0_42 = arith.constant 0 : index
    %101 = vector.load %arg5[%c1200, %c0_42] : memref<2016x128xbf16, #tpu.memory_space<vmem>>, vector<16x128xbf16>
    tpu.vector_store %arg5[%c1200, %c0_42], %100 {strides = array<i32>} : memref<2016x128xbf16, #tpu.memory_space<vmem>>, vector<16x128xbf16>,
    %102 = arith.mulf %96, %7 : vector<16x128xf32>
    %103 = arith.truncf %102 : vector<16x128xf32> to vector<16x128xbf16>
    %c1216 = arith.constant 1216 : index
    %c0_43 = arith.constant 0 : index
    %104 = vector.load %arg5[%c1216, %c0_43] : memref<2016x128xbf16, #tpu.memory_space<vmem>>, vector<16x128xbf16>
    tpu.vector_store %arg5[%c1216, %c0_43], %103 {strides = array<i32>} : memref<2016x128xbf16, #tpu.memory_space<vmem>>, vector<16x128xbf16>,
    %105 = arith.mulf %96, %9 : vector<16x128xf32>
    %106 = arith.truncf %105 : vector<16x128xf32> to vector<16x128xbf16>
    %c1232 = arith.constant 1232 : index
    %c0_44 = arith.constant 0 : index
    %107 = vector.load %arg5[%c1232, %c0_44] : memref<2016x128xbf16, #tpu.memory_space<vmem>>, vector<16x128xbf16>
    tpu.vector_store %arg5[%c1232, %c0_44], %106 {strides = array<i32>} : memref<2016x128xbf16, #tpu.memory_space<vmem>>, vector<16x128xbf16>,
    %108 = arith.mulf %78, %7 : vector<16x128xf32>
    %109 = arith.truncf %108 : vector<16x128xf32> to vector<16x128xbf16>
    %c448 = arith.constant 448 : index
    %c0_45 = arith.constant 0 : index
    %110 = vector.load %arg5[%c448, %c0_45] : memref<2016x128xbf16, #tpu.memory_space<vmem>>, vector<16x128xbf16>
    tpu.vector_store %arg5[%c448, %c0_45], %109 {strides = array<i32>} : memref<2016x128xbf16, #tpu.memory_space<vmem>>, vector<16x128xbf16>,
    %111 = arith.mulf %108, %7 : vector<16x128xf32>
    %112 = arith.truncf %111 : vector<16x128xf32> to vector<16x128xbf16>
    %c1248 = arith.constant 1248 : index
    %c0_46 = arith.constant 0 : index
    %113 = vector.load %arg5[%c1248, %c0_46] : memref<2016x128xbf16, #tpu.memory_space<vmem>>, vector<16x128xbf16>
    tpu.vector_store %arg5[%c1248, %c0_46], %112 {strides = array<i32>} : memref<2016x128xbf16, #tpu.memory_space<vmem>>, vector<16x128xbf16>,
    %114 = arith.mulf %108, %9 : vector<16x128xf32>
    %115 = arith.truncf %114 : vector<16x128xf32> to vector<16x128xbf16>
    %c1264 = arith.constant 1264 : index
    %c0_47 = arith.constant 0 : index
    %116 = vector.load %arg5[%c1264, %c0_47] : memref<2016x128xbf16, #tpu.memory_space<vmem>>, vector<16x128xbf16>
    tpu.vector_store %arg5[%c1264, %c0_47], %115 {strides = array<i32>} : memref<2016x128xbf16, #tpu.memory_space<vmem>>, vector<16x128xbf16>,
    %117 = arith.mulf %78, %9 : vector<16x128xf32>
    %118 = arith.truncf %117 : vector<16x128xf32> to vector<16x128xbf16>
    %c464 = arith.constant 464 : index
    %c0_48 = arith.constant 0 : index
    %119 = vector.load %arg5[%c464, %c0_48] : memref<2016x128xbf16, #tpu.memory_space<vmem>>, vector<16x128xbf16>
    tpu.vector_store %arg5[%c464, %c0_48], %118 {strides = array<i32>} : memref<2016x128xbf16, #tpu.memory_space<vmem>>, vector<16x128xbf16>,
    %120 = arith.mulf %117, %9 : vector<16x128xf32>
    %121 = arith.truncf %120 : vector<16x128xf32> to vector<16x128xbf16>
    %c1280 = arith.constant 1280 : index
    %c0_49 = arith.constant 0 : index
    %122 = vector.load %arg5[%c1280, %c0_49] : memref<2016x128xbf16, #tpu.memory_space<vmem>>, vector<16x128xbf16>
    tpu.vector_store %arg5[%c1280, %c0_49], %121 {strides = array<i32>} : memref<2016x128xbf16, #tpu.memory_space<vmem>>, vector<16x128xbf16>,
    %123 = arith.mulf %1, %5 : vector<16x128xf32>
    %124 = arith.truncf %123 : vector<16x128xf32> to vector<16x128xbf16>
    %c128 = arith.constant 128 : index
    %c0_50 = arith.constant 0 : index
    %125 = vector.load %arg5[%c128, %c0_50] : memref<2016x128xbf16, #tpu.memory_space<vmem>>, vector<16x128xbf16>
    tpu.vector_store %arg5[%c128, %c0_50], %124 {strides = array<i32>} : memref<2016x128xbf16, #tpu.memory_space<vmem>>, vector<16x128xbf16>,
    %126 = arith.mulf %123, %5 : vector<16x128xf32>
    %127 = arith.truncf %126 : vector<16x128xf32> to vector<16x128xbf16>
    %c480 = arith.constant 480 : index
    %c0_51 = arith.constant 0 : index
    %128 = vector.load %arg5[%c480, %c0_51] : memref<2016x128xbf16, #tpu.memory_space<vmem>>, vector<16x128xbf16>
    tpu.vector_store %arg5[%c480, %c0_51], %127 {strides = array<i32>} : memref<2016x128xbf16, #tpu.memory_space<vmem>>, vector<16x128xbf16>,
    %129 = arith.mulf %126, %5 : vector<16x128xf32>
    %130 = arith.truncf %129 : vector<16x128xf32> to vector<16x128xbf16>
    %c1296 = arith.constant 1296 : index
    %c0_52 = arith.constant 0 : index
    %131 = vector.load %arg5[%c1296, %c0_52] : memref<2016x128xbf16, #tpu.memory_space<vmem>>, vector<16x128xbf16>
    tpu.vector_store %arg5[%c1296, %c0_52], %130 {strides = array<i32>} : memref<2016x128xbf16, #tpu.memory_space<vmem>>, vector<16x128xbf16>,
    %132 = arith.mulf %126, %7 : vector<16x128xf32>
    %133 = arith.truncf %132 : vector<16x128xf32> to vector<16x128xbf16>
    %c1312 = arith.constant 1312 : index
    %c0_53 = arith.constant 0 : index
    %134 = vector.load %arg5[%c1312, %c0_53] : memref<2016x128xbf16, #tpu.memory_space<vmem>>, vector<16x128xbf16>
    tpu.vector_store %arg5[%c1312, %c0_53], %133 {strides = array<i32>} : memref<2016x128xbf16, #tpu.memory_space<vmem>>, vector<16x128xbf16>,
    %135 = arith.mulf %126, %9 : vector<16x128xf32>
    %136 = arith.truncf %135 : vector<16x128xf32> to vector<16x128xbf16>
    %c1328 = arith.constant 1328 : index
    %c0_54 = arith.constant 0 : index
    %137 = vector.load %arg5[%c1328, %c0_54] : memref<2016x128xbf16, #tpu.memory_space<vmem>>, vector<16x128xbf16>
    tpu.vector_store %arg5[%c1328, %c0_54], %136 {strides = array<i32>} : memref<2016x128xbf16, #tpu.memory_space<vmem>>, vector<16x128xbf16>,
    %138 = arith.mulf %123, %7 : vector<16x128xf32>
    %139 = arith.truncf %138 : vector<16x128xf32> to vector<16x128xbf16>
    %c496 = arith.constant 496 : index
    %c0_55 = arith.constant 0 : index
    %140 = vector.load %arg5[%c496, %c0_55] : memref<2016x128xbf16, #tpu.memory_space<vmem>>, vector<16x128xbf16>
    tpu.vector_store %arg5[%c496, %c0_55], %139 {strides = array<i32>} : memref<2016x128xbf16, #tpu.memory_space<vmem>>, vector<16x128xbf16>,
    %141 = arith.mulf %138, %7 : vector<16x128xf32>
    %142 = arith.truncf %141 : vector<16x128xf32> to vector<16x128xbf16>
    %c1344 = arith.constant 1344 : index
    %c0_56 = arith.constant 0 : index
    %143 = vector.load %arg5[%c1344, %c0_56] : memref<2016x128xbf16, #tpu.memory_space<vmem>>, vector<16x128xbf16>
    tpu.vector_store %arg5[%c1344, %c0_56], %142 {strides = array<i32>} : memref<2016x128xbf16, #tpu.memory_space<vmem>>, vector<16x128xbf16>,
    %144 = arith.mulf %138, %9 : vector<16x128xf32>
    %145 = arith.truncf %144 : vector<16x128xf32> to vector<16x128xbf16>
    %c1360 = arith.constant 1360 : index
    %c0_57 = arith.constant 0 : index
    %146 = vector.load %arg5[%c1360, %c0_57] : memref<2016x128xbf16, #tpu.memory_space<vmem>>, vector<16x128xbf16>
    tpu.vector_store %arg5[%c1360, %c0_57], %145 {strides = array<i32>} : memref<2016x128xbf16, #tpu.memory_space<vmem>>, vector<16x128xbf16>,
    %147 = arith.mulf %123, %9 : vector<16x128xf32>
    %148 = arith.truncf %147 : vector<16x128xf32> to vector<16x128xbf16>
    %c512 = arith.constant 512 : index
    %c0_58 = arith.constant 0 : index
    %149 = vector.load %arg5[%c512, %c0_58] : memref<2016x128xbf16, #tpu.memory_space<vmem>>, vector<16x128xbf16>
    tpu.vector_store %arg5[%c512, %c0_58], %148 {strides = array<i32>} : memref<2016x128xbf16, #tpu.memory_space<vmem>>, vector<16x128xbf16>,
    %150 = arith.mulf %147, %9 : vector<16x128xf32>
    %151 = arith.truncf %150 : vector<16x128xf32> to vector<16x128xbf16>
    %c1376 = arith.constant 1376 : index
    %c0_59 = arith.constant 0 : index
    %152 = vector.load %arg5[%c1376, %c0_59] : memref<2016x128xbf16, #tpu.memory_space<vmem>>, vector<16x128xbf16>
    tpu.vector_store %arg5[%c1376, %c0_59], %151 {strides = array<i32>} : memref<2016x128xbf16, #tpu.memory_space<vmem>>, vector<16x128xbf16>,
    %153 = arith.mulf %1, %7 : vector<16x128xf32>
    %154 = arith.truncf %153 : vector<16x128xf32> to vector<16x128xbf16>
    %c144 = arith.constant 144 : index
    %c0_60 = arith.constant 0 : index
    %155 = vector.load %arg5[%c144, %c0_60] : memref<2016x128xbf16, #tpu.memory_space<vmem>>, vector<16x128xbf16>
    tpu.vector_store %arg5[%c144, %c0_60], %154 {strides = array<i32>} : memref<2016x128xbf16, #tpu.memory_space<vmem>>, vector<16x128xbf16>,
    %156 = arith.mulf %153, %7 : vector<16x128xf32>
    %157 = arith.truncf %156 : vector<16x128xf32> to vector<16x128xbf16>
    %c528 = arith.constant 528 : index
    %c0_61 = arith.constant 0 : index
    %158 = vector.load %arg5[%c528, %c0_61] : memref<2016x128xbf16, #tpu.memory_space<vmem>>, vector<16x128xbf16>
    tpu.vector_store %arg5[%c528, %c0_61], %157 {strides = array<i32>} : memref<2016x128xbf16, #tpu.memory_space<vmem>>, vector<16x128xbf16>,
    %159 = arith.mulf %156, %7 : vector<16x128xf32>
    %160 = arith.truncf %159 : vector<16x128xf32> to vector<16x128xbf16>
    %c1392 = arith.constant 1392 : index
    %c0_62 = arith.constant 0 : index
    %161 = vector.load %arg5[%c1392, %c0_62] : memref<2016x128xbf16, #tpu.memory_space<vmem>>, vector<16x128xbf16>
    tpu.vector_store %arg5[%c1392, %c0_62], %160 {strides = array<i32>} : memref<2016x128xbf16, #tpu.memory_space<vmem>>, vector<16x128xbf16>,
    %162 = arith.mulf %156, %9 : vector<16x128xf32>
    %163 = arith.truncf %162 : vector<16x128xf32> to vector<16x128xbf16>
    %c1408 = arith.constant 1408 : index
    %c0_63 = arith.constant 0 : index
    %164 = vector.load %arg5[%c1408, %c0_63] : memref<2016x128xbf16, #tpu.memory_space<vmem>>, vector<16x128xbf16>
    tpu.vector_store %arg5[%c1408, %c0_63], %163 {strides = array<i32>} : memref<2016x128xbf16, #tpu.memory_space<vmem>>, vector<16x128xbf16>,
    %165 = arith.mulf %153, %9 : vector<16x128xf32>
    %166 = arith.truncf %165 : vector<16x128xf32> to vector<16x128xbf16>
    %c544 = arith.constant 544 : index
    %c0_64 = arith.constant 0 : index
    %167 = vector.load %arg5[%c544, %c0_64] : memref<2016x128xbf16, #tpu.memory_space<vmem>>, vector<16x128xbf16>
    tpu.vector_store %arg5[%c544, %c0_64], %166 {strides = array<i32>} : memref<2016x128xbf16, #tpu.memory_space<vmem>>, vector<16x128xbf16>,
    %168 = arith.mulf %165, %9 : vector<16x128xf32>
    %169 = arith.truncf %168 : vector<16x128xf32> to vector<16x128xbf16>
    %c1424 = arith.constant 1424 : index
    %c0_65 = arith.constant 0 : index
    %170 = vector.load %arg5[%c1424, %c0_65] : memref<2016x128xbf16, #tpu.memory_space<vmem>>, vector<16x128xbf16>
    tpu.vector_store %arg5[%c1424, %c0_65], %169 {strides = array<i32>} : memref<2016x128xbf16, #tpu.memory_space<vmem>>, vector<16x128xbf16>,
    %171 = arith.mulf %1, %9 : vector<16x128xf32>
    %172 = arith.truncf %171 : vector<16x128xf32> to vector<16x128xbf16>
    %c160 = arith.constant 160 : index
    %c0_66 = arith.constant 0 : index
    %173 = vector.load %arg5[%c160, %c0_66] : memref<2016x128xbf16, #tpu.memory_space<vmem>>, vector<16x128xbf16>
    tpu.vector_store %arg5[%c160, %c0_66], %172 {strides = array<i32>} : memref<2016x128xbf16, #tpu.memory_space<vmem>>, vector<16x128xbf16>,
    %174 = arith.mulf %171, %9 : vector<16x128xf32>
    %175 = arith.truncf %174 : vector<16x128xf32> to vector<16x128xbf16>
    %c560 = arith.constant 560 : index
    %c0_67 = arith.constant 0 : index
    %176 = vector.load %arg5[%c560, %c0_67] : memref<2016x128xbf16, #tpu.memory_space<vmem>>, vector<16x128xbf16>
    tpu.vector_store %arg5[%c560, %c0_67], %175 {strides = array<i32>} : memref<2016x128xbf16, #tpu.memory_space<vmem>>, vector<16x128xbf16>,
    %177 = arith.mulf %174, %9 : vector<16x128xf32>
    %178 = arith.truncf %177 : vector<16x128xf32> to vector<16x128xbf16>
    %c1440 = arith.constant 1440 : index
    %c0_68 = arith.constant 0 : index
    %179 = vector.load %arg5[%c1440, %c0_68] : memref<2016x128xbf16, #tpu.memory_space<vmem>>, vector<16x128xbf16>
    tpu.vector_store %arg5[%c1440, %c0_68], %178 {strides = array<i32>} : memref<2016x128xbf16, #tpu.memory_space<vmem>>, vector<16x128xbf16>,
    %180 = arith.truncf %3 : vector<16x128xf32> to vector<16x128xbf16>
    %c32_69 = arith.constant 32 : index
    %c0_70 = arith.constant 0 : index
    %181 = vector.load %arg5[%c32_69, %c0_70] : memref<2016x128xbf16, #tpu.memory_space<vmem>>, vector<16x128xbf16>
    tpu.vector_store %arg5[%c32_69, %c0_70], %180 {strides = array<i32>} : memref<2016x128xbf16, #tpu.memory_space<vmem>>, vector<16x128xbf16>,
    %182 = arith.mulf %3, %3 : vector<16x128xf32>
    %183 = arith.truncf %182 : vector<16x128xf32> to vector<16x128xbf16>
    %c176 = arith.constant 176 : index
    %c0_71 = arith.constant 0 : index
    %184 = vector.load %arg5[%c176, %c0_71] : memref<2016x128xbf16, #tpu.memory_space<vmem>>, vector<16x128xbf16>
    tpu.vector_store %arg5[%c176, %c0_71], %183 {strides = array<i32>} : memref<2016x128xbf16, #tpu.memory_space<vmem>>, vector<16x128xbf16>,
    %185 = arith.mulf %182, %3 : vector<16x128xf32>
    %186 = arith.truncf %185 : vector<16x128xf32> to vector<16x128xbf16>
    %c576 = arith.constant 576 : index
    %c0_72 = arith.constant 0 : index
    %187 = vector.load %arg5[%c576, %c0_72] : memref<2016x128xbf16, #tpu.memory_space<vmem>>, vector<16x128xbf16>
    tpu.vector_store %arg5[%c576, %c0_72], %186 {strides = array<i32>} : memref<2016x128xbf16, #tpu.memory_space<vmem>>, vector<16x128xbf16>,
    %188 = arith.mulf %185, %3 : vector<16x128xf32>
    %189 = arith.truncf %188 : vector<16x128xf32> to vector<16x128xbf16>
    %c1456 = arith.constant 1456 : index
    %c0_73 = arith.constant 0 : index
    %190 = vector.load %arg5[%c1456, %c0_73] : memref<2016x128xbf16, #tpu.memory_space<vmem>>, vector<16x128xbf16>
    tpu.vector_store %arg5[%c1456, %c0_73], %189 {strides = array<i32>} : memref<2016x128xbf16, #tpu.memory_space<vmem>>, vector<16x128xbf16>,
    %191 = arith.mulf %185, %5 : vector<16x128xf32>
    %192 = arith.truncf %191 : vector<16x128xf32> to vector<16x128xbf16>
    %c1472 = arith.constant 1472 : index
    %c0_74 = arith.constant 0 : index
    %193 = vector.load %arg5[%c1472, %c0_74] : memref<2016x128xbf16, #tpu.memory_space<vmem>>, vector<16x128xbf16>
    tpu.vector_store %arg5[%c1472, %c0_74], %192 {strides = array<i32>} : memref<2016x128xbf16, #tpu.memory_space<vmem>>, vector<16x128xbf16>,
    %194 = arith.mulf %185, %7 : vector<16x128xf32>
    %195 = arith.truncf %194 : vector<16x128xf32> to vector<16x128xbf16>
    %c1488 = arith.constant 1488 : index
    %c0_75 = arith.constant 0 : index
    %196 = vector.load %arg5[%c1488, %c0_75] : memref<2016x128xbf16, #tpu.memory_space<vmem>>, vector<16x128xbf16>
    tpu.vector_store %arg5[%c1488, %c0_75], %195 {strides = array<i32>} : memref<2016x128xbf16, #tpu.memory_space<vmem>>, vector<16x128xbf16>,
    %197 = arith.mulf %185, %9 : vector<16x128xf32>
    %198 = arith.truncf %197 : vector<16x128xf32> to vector<16x128xbf16>
    %c1504 = arith.constant 1504 : index
    %c0_76 = arith.constant 0 : index
    %199 = vector.load %arg5[%c1504, %c0_76] : memref<2016x128xbf16, #tpu.memory_space<vmem>>, vector<16x128xbf16>
    tpu.vector_store %arg5[%c1504, %c0_76], %198 {strides = array<i32>} : memref<2016x128xbf16, #tpu.memory_space<vmem>>, vector<16x128xbf16>,
    %200 = arith.mulf %182, %5 : vector<16x128xf32>
    %201 = arith.truncf %200 : vector<16x128xf32> to vector<16x128xbf16>
    %c592 = arith.constant 592 : index
    %c0_77 = arith.constant 0 : index
    %202 = vector.load %arg5[%c592, %c0_77] : memref<2016x128xbf16, #tpu.memory_space<vmem>>, vector<16x128xbf16>
    tpu.vector_store %arg5[%c592, %c0_77], %201 {strides = array<i32>} : memref<2016x128xbf16, #tpu.memory_space<vmem>>, vector<16x128xbf16>,
    %203 = arith.mulf %200, %5 : vector<16x128xf32>
    %204 = arith.truncf %203 : vector<16x128xf32> to vector<16x128xbf16>
    %c1520 = arith.constant 1520 : index
    %c0_78 = arith.constant 0 : index
    %205 = vector.load %arg5[%c1520, %c0_78] : memref<2016x128xbf16, #tpu.memory_space<vmem>>, vector<16x128xbf16>
    tpu.vector_store %arg5[%c1520, %c0_78], %204 {strides = array<i32>} : memref<2016x128xbf16, #tpu.memory_space<vmem>>, vector<16x128xbf16>,
    %206 = arith.mulf %200, %7 : vector<16x128xf32>
    %207 = arith.truncf %206 : vector<16x128xf32> to vector<16x128xbf16>
    %c1536 = arith.constant 1536 : index
    %c0_79 = arith.constant 0 : index
    %208 = vector.load %arg5[%c1536, %c0_79] : memref<2016x128xbf16, #tpu.memory_space<vmem>>, vector<16x128xbf16>
    tpu.vector_store %arg5[%c1536, %c0_79], %207 {strides = array<i32>} : memref<2016x128xbf16, #tpu.memory_space<vmem>>, vector<16x128xbf16>,
    %209 = arith.mulf %200, %9 : vector<16x128xf32>
    %210 = arith.truncf %209 : vector<16x128xf32> to vector<16x128xbf16>
    %c1552 = arith.constant 1552 : index
    %c0_80 = arith.constant 0 : index
    %211 = vector.load %arg5[%c1552, %c0_80] : memref<2016x128xbf16, #tpu.memory_space<vmem>>, vector<16x128xbf16>
    tpu.vector_store %arg5[%c1552, %c0_80], %210 {strides = array<i32>} : memref<2016x128xbf16, #tpu.memory_space<vmem>>, vector<16x128xbf16>,
    %212 = arith.mulf %182, %7 : vector<16x128xf32>
    %213 = arith.truncf %212 : vector<16x128xf32> to vector<16x128xbf16>
    %c608 = arith.constant 608 : index
    %c0_81 = arith.constant 0 : index
    %214 = vector.load %arg5[%c608, %c0_81] : memref<2016x128xbf16, #tpu.memory_space<vmem>>, vector<16x128xbf16>
    tpu.vector_store %arg5[%c608, %c0_81], %213 {strides = array<i32>} : memref<2016x128xbf16, #tpu.memory_space<vmem>>, vector<16x128xbf16>,
    %215 = arith.mulf %212, %7 : vector<16x128xf32>
    %216 = arith.truncf %215 : vector<16x128xf32> to vector<16x128xbf16>
    %c1568 = arith.constant 1568 : index
    %c0_82 = arith.constant 0 : index
    %217 = vector.load %arg5[%c1568, %c0_82] : memref<2016x128xbf16, #tpu.memory_space<vmem>>, vector<16x128xbf16>
    tpu.vector_store %arg5[%c1568, %c0_82], %216 {strides = array<i32>} : memref<2016x128xbf16, #tpu.memory_space<vmem>>, vector<16x128xbf16>,
    %218 = arith.mulf %212, %9 : vector<16x128xf32>
    %219 = arith.truncf %218 : vector<16x128xf32> to vector<16x128xbf16>
    %c1584 = arith.constant 1584 : index
    %c0_83 = arith.constant 0 : index
    %220 = vector.load %arg5[%c1584, %c0_83] : memref<2016x128xbf16, #tpu.memory_space<vmem>>, vector<16x128xbf16>
    tpu.vector_store %arg5[%c1584, %c0_83], %219 {strides = array<i32>} : memref<2016x128xbf16, #tpu.memory_space<vmem>>, vector<16x128xbf16>,
    %221 = arith.mulf %182, %9 : vector<16x128xf32>
    %222 = arith.truncf %221 : vector<16x128xf32> to vector<16x128xbf16>
    %c624 = arith.constant 624 : index
    %c0_84 = arith.constant 0 : index
    %223 = vector.load %arg5[%c624, %c0_84] : memref<2016x128xbf16, #tpu.memory_space<vmem>>, vector<16x128xbf16>
    tpu.vector_store %arg5[%c624, %c0_84], %222 {strides = array<i32>} : memref<2016x128xbf16, #tpu.memory_space<vmem>>, vector<16x128xbf16>,
    %224 = arith.mulf %221, %9 : vector<16x128xf32>
    %225 = arith.truncf %224 : vector<16x128xf32> to vector<16x128xbf16>
    %c1600 = arith.constant 1600 : index
    %c0_85 = arith.constant 0 : index
    %226 = vector.load %arg5[%c1600, %c0_85] : memref<2016x128xbf16, #tpu.memory_space<vmem>>, vector<16x128xbf16>
    tpu.vector_store %arg5[%c1600, %c0_85], %225 {strides = array<i32>} : memref<2016x128xbf16, #tpu.memory_space<vmem>>, vector<16x128xbf16>,
    %227 = arith.mulf %3, %5 : vector<16x128xf32>
    %228 = arith.truncf %227 : vector<16x128xf32> to vector<16x128xbf16>
    %c192 = arith.constant 192 : index
    %c0_86 = arith.constant 0 : index
    %229 = vector.load %arg5[%c192, %c0_86] : memref<2016x128xbf16, #tpu.memory_space<vmem>>, vector<16x128xbf16>
    tpu.vector_store %arg5[%c192, %c0_86], %228 {strides = array<i32>} : memref<2016x128xbf16, #tpu.memory_space<vmem>>, vector<16x128xbf16>,
    %230 = arith.mulf %227, %5 : vector<16x128xf32>
    %231 = arith.truncf %230 : vector<16x128xf32> to vector<16x128xbf16>
    %c640 = arith.constant 640 : index
    %c0_87 = arith.constant 0 : index
    %232 = vector.load %arg5[%c640, %c0_87] : memref<2016x128xbf16, #tpu.memory_space<vmem>>, vector<16x128xbf16>
    tpu.vector_store %arg5[%c640, %c0_87], %231 {strides = array<i32>} : memref<2016x128xbf16, #tpu.memory_space<vmem>>, vector<16x128xbf16>,
    %233 = arith.mulf %230, %5 : vector<16x128xf32>
    %234 = arith.truncf %233 : vector<16x128xf32> to vector<16x128xbf16>
    %c1616 = arith.constant 1616 : index
    %c0_88 = arith.constant 0 : index
    %235 = vector.load %arg5[%c1616, %c0_88] : memref<2016x128xbf16, #tpu.memory_space<vmem>>, vector<16x128xbf16>
    tpu.vector_store %arg5[%c1616, %c0_88], %234 {strides = array<i32>} : memref<2016x128xbf16, #tpu.memory_space<vmem>>, vector<16x128xbf16>,
    %236 = arith.mulf %230, %7 : vector<16x128xf32>
    %237 = arith.truncf %236 : vector<16x128xf32> to vector<16x128xbf16>
    %c1632 = arith.constant 1632 : index
    %c0_89 = arith.constant 0 : index
    %238 = vector.load %arg5[%c1632, %c0_89] : memref<2016x128xbf16, #tpu.memory_space<vmem>>, vector<16x128xbf16>
    tpu.vector_store %arg5[%c1632, %c0_89], %237 {strides = array<i32>} : memref<2016x128xbf16, #tpu.memory_space<vmem>>, vector<16x128xbf16>,
    %239 = arith.mulf %230, %9 : vector<16x128xf32>
    %240 = arith.truncf %239 : vector<16x128xf32> to vector<16x128xbf16>
    %c1648 = arith.constant 1648 : index
    %c0_90 = arith.constant 0 : index
    %241 = vector.load %arg5[%c1648, %c0_90] : memref<2016x128xbf16, #tpu.memory_space<vmem>>, vector<16x128xbf16>
    tpu.vector_store %arg5[%c1648, %c0_90], %240 {strides = array<i32>} : memref<2016x128xbf16, #tpu.memory_space<vmem>>, vector<16x128xbf16>,
    %242 = arith.mulf %227, %7 : vector<16x128xf32>
    %243 = arith.truncf %242 : vector<16x128xf32> to vector<16x128xbf16>
    %c656 = arith.constant 656 : index
    %c0_91 = arith.constant 0 : index
    %244 = vector.load %arg5[%c656, %c0_91] : memref<2016x128xbf16, #tpu.memory_space<vmem>>, vector<16x128xbf16>
    tpu.vector_store %arg5[%c656, %c0_91], %243 {strides = array<i32>} : memref<2016x128xbf16, #tpu.memory_space<vmem>>, vector<16x128xbf16>,
    %245 = arith.mulf %242, %7 : vector<16x128xf32>
    %246 = arith.truncf %245 : vector<16x128xf32> to vector<16x128xbf16>
    %c1664 = arith.constant 1664 : index
    %c0_92 = arith.constant 0 : index
    %247 = vector.load %arg5[%c1664, %c0_92] : memref<2016x128xbf16, #tpu.memory_space<vmem>>, vector<16x128xbf16>
    tpu.vector_store %arg5[%c1664, %c0_92], %246 {strides = array<i32>} : memref<2016x128xbf16, #tpu.memory_space<vmem>>, vector<16x128xbf16>,
    %248 = arith.mulf %242, %9 : vector<16x128xf32>
    %249 = arith.truncf %248 : vector<16x128xf32> to vector<16x128xbf16>
    %c1680 = arith.constant 1680 : index
    %c0_93 = arith.constant 0 : index
    %250 = vector.load %arg5[%c1680, %c0_93] : memref<2016x128xbf16, #tpu.memory_space<vmem>>, vector<16x128xbf16>
    tpu.vector_store %arg5[%c1680, %c0_93], %249 {strides = array<i32>} : memref<2016x128xbf16, #tpu.memory_space<vmem>>, vector<16x128xbf16>,
    %251 = arith.mulf %227, %9 : vector<16x128xf32>
    %252 = arith.truncf %251 : vector<16x128xf32> to vector<16x128xbf16>
    %c672 = arith.constant 672 : index
    %c0_94 = arith.constant 0 : index
    %253 = vector.load %arg5[%c672, %c0_94] : memref<2016x128xbf16, #tpu.memory_space<vmem>>, vector<16x128xbf16>
    tpu.vector_store %arg5[%c672, %c0_94], %252 {strides = array<i32>} : memref<2016x128xbf16, #tpu.memory_space<vmem>>, vector<16x128xbf16>,
    %254 = arith.mulf %251, %9 : vector<16x128xf32>
    %255 = arith.truncf %254 : vector<16x128xf32> to vector<16x128xbf16>
    %c1696 = arith.constant 1696 : index
    %c0_95 = arith.constant 0 : index
    %256 = vector.load %arg5[%c1696, %c0_95] : memref<2016x128xbf16, #tpu.memory_space<vmem>>, vector<16x128xbf16>
    tpu.vector_store %arg5[%c1696, %c0_95], %255 {strides = array<i32>} : memref<2016x128xbf16, #tpu.memory_space<vmem>>, vector<16x128xbf16>,
    %257 = arith.mulf %3, %7 : vector<16x128xf32>
    %258 = arith.truncf %257 : vector<16x128xf32> to vector<16x128xbf16>
    %c208 = arith.constant 208 : index
    %c0_96 = arith.constant 0 : index
    %259 = vector.load %arg5[%c208, %c0_96] : memref<2016x128xbf16, #tpu.memory_space<vmem>>, vector<16x128xbf16>
    tpu.vector_store %arg5[%c208, %c0_96], %258 {strides = array<i32>} : memref<2016x128xbf16, #tpu.memory_space<vmem>>, vector<16x128xbf16>,
    %260 = arith.mulf %257, %7 : vector<16x128xf32>
    %261 = arith.truncf %260 : vector<16x128xf32> to vector<16x128xbf16>
    %c688 = arith.constant 688 : index
    %c0_97 = arith.constant 0 : index
    %262 = vector.load %arg5[%c688, %c0_97] : memref<2016x128xbf16, #tpu.memory_space<vmem>>, vector<16x128xbf16>
    tpu.vector_store %arg5[%c688, %c0_97], %261 {strides = array<i32>} : memref<2016x128xbf16, #tpu.memory_space<vmem>>, vector<16x128xbf16>,
    %263 = arith.mulf %260, %7 : vector<16x128xf32>
    %264 = arith.truncf %263 : vector<16x128xf32> to vector<16x128xbf16>
    %c1712 = arith.constant 1712 : index
    %c0_98 = arith.constant 0 : index
    %265 = vector.load %arg5[%c1712, %c0_98] : memref<2016x128xbf16, #tpu.memory_space<vmem>>, vector<16x128xbf16>
    tpu.vector_store %arg5[%c1712, %c0_98], %264 {strides = array<i32>} : memref<2016x128xbf16, #tpu.memory_space<vmem>>, vector<16x128xbf16>,
    %266 = arith.mulf %260, %9 : vector<16x128xf32>
    %267 = arith.truncf %266 : vector<16x128xf32> to vector<16x128xbf16>
    %c1728 = arith.constant 1728 : index
    %c0_99 = arith.constant 0 : index
    %268 = vector.load %arg5[%c1728, %c0_99] : memref<2016x128xbf16, #tpu.memory_space<vmem>>, vector<16x128xbf16>
    tpu.vector_store %arg5[%c1728, %c0_99], %267 {strides = array<i32>} : memref<2016x128xbf16, #tpu.memory_space<vmem>>, vector<16x128xbf16>,
    %269 = arith.mulf %257, %9 : vector<16x128xf32>
    %270 = arith.truncf %269 : vector<16x128xf32> to vector<16x128xbf16>
    %c704 = arith.constant 704 : index
    %c0_100 = arith.constant 0 : index
    %271 = vector.load %arg5[%c704, %c0_100] : memref<2016x128xbf16, #tpu.memory_space<vmem>>, vector<16x128xbf16>
    tpu.vector_store %arg5[%c704, %c0_100], %270 {strides = array<i32>} : memref<2016x128xbf16, #tpu.memory_space<vmem>>, vector<16x128xbf16>,
    %272 = arith.mulf %269, %9 : vector<16x128xf32>
    %273 = arith.truncf %272 : vector<16x128xf32> to vector<16x128xbf16>
    %c1744 = arith.constant 1744 : index
    %c0_101 = arith.constant 0 : index
    %274 = vector.load %arg5[%c1744, %c0_101] : memref<2016x128xbf16, #tpu.memory_space<vmem>>, vector<16x128xbf16>
    tpu.vector_store %arg5[%c1744, %c0_101], %273 {strides = array<i32>} : memref<2016x128xbf16, #tpu.memory_space<vmem>>, vector<16x128xbf16>,
    %275 = arith.mulf %3, %9 : vector<16x128xf32>
    %276 = arith.truncf %275 : vector<16x128xf32> to vector<16x128xbf16>
    %c224 = arith.constant 224 : index
    %c0_102 = arith.constant 0 : index
    %277 = vector.load %arg5[%c224, %c0_102] : memref<2016x128xbf16, #tpu.memory_space<vmem>>, vector<16x128xbf16>
    tpu.vector_store %arg5[%c224, %c0_102], %276 {strides = array<i32>} : memref<2016x128xbf16, #tpu.memory_space<vmem>>, vector<16x128xbf16>,
    %278 = arith.mulf %275, %9 : vector<16x128xf32>
    %279 = arith.truncf %278 : vector<16x128xf32> to vector<16x128xbf16>
    %c720 = arith.constant 720 : index
    %c0_103 = arith.constant 0 : index
    %280 = vector.load %arg5[%c720, %c0_103] : memref<2016x128xbf16, #tpu.memory_space<vmem>>, vector<16x128xbf16>
    tpu.vector_store %arg5[%c720, %c0_103], %279 {strides = array<i32>} : memref<2016x128xbf16, #tpu.memory_space<vmem>>, vector<16x128xbf16>,
    %281 = arith.mulf %278, %9 : vector<16x128xf32>
    %282 = arith.truncf %281 : vector<16x128xf32> to vector<16x128xbf16>
    %c1760 = arith.constant 1760 : index
    %c0_104 = arith.constant 0 : index
    %283 = vector.load %arg5[%c1760, %c0_104] : memref<2016x128xbf16, #tpu.memory_space<vmem>>, vector<16x128xbf16>
    tpu.vector_store %arg5[%c1760, %c0_104], %282 {strides = array<i32>} : memref<2016x128xbf16, #tpu.memory_space<vmem>>, vector<16x128xbf16>,
    %284 = arith.truncf %5 : vector<16x128xf32> to vector<16x128xbf16>
    %c48_105 = arith.constant 48 : index
    %c0_106 = arith.constant 0 : index
    %285 = vector.load %arg5[%c48_105, %c0_106] : memref<2016x128xbf16, #tpu.memory_space<vmem>>, vector<16x128xbf16>
    tpu.vector_store %arg5[%c48_105, %c0_106], %284 {strides = array<i32>} : memref<2016x128xbf16, #tpu.memory_space<vmem>>, vector<16x128xbf16>,
    %286 = arith.mulf %5, %5 : vector<16x128xf32>
    %287 = arith.truncf %286 : vector<16x128xf32> to vector<16x128xbf16>
    %c240 = arith.constant 240 : index
    %c0_107 = arith.constant 0 : index
    %288 = vector.load %arg5[%c240, %c0_107] : memref<2016x128xbf16, #tpu.memory_space<vmem>>, vector<16x128xbf16>
    tpu.vector_store %arg5[%c240, %c0_107], %287 {strides = array<i32>} : memref<2016x128xbf16, #tpu.memory_space<vmem>>, vector<16x128xbf16>,
    %289 = arith.mulf %286, %5 : vector<16x128xf32>
    %290 = arith.truncf %289 : vector<16x128xf32> to vector<16x128xbf16>
    %c736 = arith.constant 736 : index
    %c0_108 = arith.constant 0 : index
    %291 = vector.load %arg5[%c736, %c0_108] : memref<2016x128xbf16, #tpu.memory_space<vmem>>, vector<16x128xbf16>
    tpu.vector_store %arg5[%c736, %c0_108], %290 {strides = array<i32>} : memref<2016x128xbf16, #tpu.memory_space<vmem>>, vector<16x128xbf16>,
    %292 = arith.mulf %289, %5 : vector<16x128xf32>
    %293 = arith.truncf %292 : vector<16x128xf32> to vector<16x128xbf16>
    %c1776 = arith.constant 1776 : index
    %c0_109 = arith.constant 0 : index
    %294 = vector.load %arg5[%c1776, %c0_109] : memref<2016x128xbf16, #tpu.memory_space<vmem>>, vector<16x128xbf16>
    tpu.vector_store %arg5[%c1776, %c0_109], %293 {strides = array<i32>} : memref<2016x128xbf16, #tpu.memory_space<vmem>>, vector<16x128xbf16>,
    %295 = arith.mulf %289, %7 : vector<16x128xf32>
    %296 = arith.truncf %295 : vector<16x128xf32> to vector<16x128xbf16>
    %c1792 = arith.constant 1792 : index
    %c0_110 = arith.constant 0 : index
    %297 = vector.load %arg5[%c1792, %c0_110] : memref<2016x128xbf16, #tpu.memory_space<vmem>>, vector<16x128xbf16>
    tpu.vector_store %arg5[%c1792, %c0_110], %296 {strides = array<i32>} : memref<2016x128xbf16, #tpu.memory_space<vmem>>, vector<16x128xbf16>,
    %298 = arith.mulf %289, %9 : vector<16x128xf32>
    %299 = arith.truncf %298 : vector<16x128xf32> to vector<16x128xbf16>
    %c1808 = arith.constant 1808 : index
    %c0_111 = arith.constant 0 : index
    %300 = vector.load %arg5[%c1808, %c0_111] : memref<2016x128xbf16, #tpu.memory_space<vmem>>, vector<16x128xbf16>
    tpu.vector_store %arg5[%c1808, %c0_111], %299 {strides = array<i32>} : memref<2016x128xbf16, #tpu.memory_space<vmem>>, vector<16x128xbf16>,
    %301 = arith.mulf %286, %7 : vector<16x128xf32>
    %302 = arith.truncf %301 : vector<16x128xf32> to vector<16x128xbf16>
    %c752 = arith.constant 752 : index
    %c0_112 = arith.constant 0 : index
    %303 = vector.load %arg5[%c752, %c0_112] : memref<2016x128xbf16, #tpu.memory_space<vmem>>, vector<16x128xbf16>
    tpu.vector_store %arg5[%c752, %c0_112], %302 {strides = array<i32>} : memref<2016x128xbf16, #tpu.memory_space<vmem>>, vector<16x128xbf16>,
    %304 = arith.mulf %301, %7 : vector<16x128xf32>
    %305 = arith.truncf %304 : vector<16x128xf32> to vector<16x128xbf16>
    %c1824 = arith.constant 1824 : index
    %c0_113 = arith.constant 0 : index
    %306 = vector.load %arg5[%c1824, %c0_113] : memref<2016x128xbf16, #tpu.memory_space<vmem>>, vector<16x128xbf16>
    tpu.vector_store %arg5[%c1824, %c0_113], %305 {strides = array<i32>} : memref<2016x128xbf16, #tpu.memory_space<vmem>>, vector<16x128xbf16>,
    %307 = arith.mulf %301, %9 : vector<16x128xf32>
    %308 = arith.truncf %307 : vector<16x128xf32> to vector<16x128xbf16>
    %c1840 = arith.constant 1840 : index
    %c0_114 = arith.constant 0 : index
    %309 = vector.load %arg5[%c1840, %c0_114] : memref<2016x128xbf16, #tpu.memory_space<vmem>>, vector<16x128xbf16>
    tpu.vector_store %arg5[%c1840, %c0_114], %308 {strides = array<i32>} : memref<2016x128xbf16, #tpu.memory_space<vmem>>, vector<16x128xbf16>,
    %310 = arith.mulf %286, %9 : vector<16x128xf32>
    %311 = arith.truncf %310 : vector<16x128xf32> to vector<16x128xbf16>
    %c768 = arith.constant 768 : index
    %c0_115 = arith.constant 0 : index
    %312 = vector.load %arg5[%c768, %c0_115] : memref<2016x128xbf16, #tpu.memory_space<vmem>>, vector<16x128xbf16>
    tpu.vector_store %arg5[%c768, %c0_115], %311 {strides = array<i32>} : memref<2016x128xbf16, #tpu.memory_space<vmem>>, vector<16x128xbf16>,
    %313 = arith.mulf %310, %9 : vector<16x128xf32>
    %314 = arith.truncf %313 : vector<16x128xf32> to vector<16x128xbf16>
    %c1856 = arith.constant 1856 : index
    %c0_116 = arith.constant 0 : index
    %315 = vector.load %arg5[%c1856, %c0_116] : memref<2016x128xbf16, #tpu.memory_space<vmem>>, vector<16x128xbf16>
    tpu.vector_store %arg5[%c1856, %c0_116], %314 {strides = array<i32>} : memref<2016x128xbf16, #tpu.memory_space<vmem>>, vector<16x128xbf16>,
    %316 = arith.mulf %5, %7 : vector<16x128xf32>
    %317 = arith.truncf %316 : vector<16x128xf32> to vector<16x128xbf16>
    %c256 = arith.constant 256 : index
    %c0_117 = arith.constant 0 : index
    %318 = vector.load %arg5[%c256, %c0_117] : memref<2016x128xbf16, #tpu.memory_space<vmem>>, vector<16x128xbf16>
    tpu.vector_store %arg5[%c256, %c0_117], %317 {strides = array<i32>} : memref<2016x128xbf16, #tpu.memory_space<vmem>>, vector<16x128xbf16>,
    %319 = arith.mulf %316, %7 : vector<16x128xf32>
    %320 = arith.truncf %319 : vector<16x128xf32> to vector<16x128xbf16>
    %c784 = arith.constant 784 : index
    %c0_118 = arith.constant 0 : index
    %321 = vector.load %arg5[%c784, %c0_118] : memref<2016x128xbf16, #tpu.memory_space<vmem>>, vector<16x128xbf16>
    tpu.vector_store %arg5[%c784, %c0_118], %320 {strides = array<i32>} : memref<2016x128xbf16, #tpu.memory_space<vmem>>, vector<16x128xbf16>,
    %322 = arith.mulf %319, %7 : vector<16x128xf32>
    %323 = arith.truncf %322 : vector<16x128xf32> to vector<16x128xbf16>
    %c1872 = arith.constant 1872 : index
    %c0_119 = arith.constant 0 : index
    %324 = vector.load %arg5[%c1872, %c0_119] : memref<2016x128xbf16, #tpu.memory_space<vmem>>, vector<16x128xbf16>
    tpu.vector_store %arg5[%c1872, %c0_119], %323 {strides = array<i32>} : memref<2016x128xbf16, #tpu.memory_space<vmem>>, vector<16x128xbf16>,
    %325 = arith.mulf %319, %9 : vector<16x128xf32>
    %326 = arith.truncf %325 : vector<16x128xf32> to vector<16x128xbf16>
    %c1888 = arith.constant 1888 : index
    %c0_120 = arith.constant 0 : index
    %327 = vector.load %arg5[%c1888, %c0_120] : memref<2016x128xbf16, #tpu.memory_space<vmem>>, vector<16x128xbf16>
    tpu.vector_store %arg5[%c1888, %c0_120], %326 {strides = array<i32>} : memref<2016x128xbf16, #tpu.memory_space<vmem>>, vector<16x128xbf16>,
    %328 = arith.mulf %316, %9 : vector<16x128xf32>
    %329 = arith.truncf %328 : vector<16x128xf32> to vector<16x128xbf16>
    %c800 = arith.constant 800 : index
    %c0_121 = arith.constant 0 : index
    %330 = vector.load %arg5[%c800, %c0_121] : memref<2016x128xbf16, #tpu.memory_space<vmem>>, vector<16x128xbf16>
    tpu.vector_store %arg5[%c800, %c0_121], %329 {strides = array<i32>} : memref<2016x128xbf16, #tpu.memory_space<vmem>>, vector<16x128xbf16>,
    %331 = arith.mulf %328, %9 : vector<16x128xf32>
    %332 = arith.truncf %331 : vector<16x128xf32> to vector<16x128xbf16>
    %c1904 = arith.constant 1904 : index
    %c0_122 = arith.constant 0 : index
    %333 = vector.load %arg5[%c1904, %c0_122] : memref<2016x128xbf16, #tpu.memory_space<vmem>>, vector<16x128xbf16>
    tpu.vector_store %arg5[%c1904, %c0_122], %332 {strides = array<i32>} : memref<2016x128xbf16, #tpu.memory_space<vmem>>, vector<16x128xbf16>,
    %334 = arith.mulf %5, %9 : vector<16x128xf32>
    %335 = arith.truncf %334 : vector<16x128xf32> to vector<16x128xbf16>
    %c272 = arith.constant 272 : index
    %c0_123 = arith.constant 0 : index
    %336 = vector.load %arg5[%c272, %c0_123] : memref<2016x128xbf16, #tpu.memory_space<vmem>>, vector<16x128xbf16>
    tpu.vector_store %arg5[%c272, %c0_123], %335 {strides = array<i32>} : memref<2016x128xbf16, #tpu.memory_space<vmem>>, vector<16x128xbf16>,
    %337 = arith.mulf %334, %9 : vector<16x128xf32>
    %338 = arith.truncf %337 : vector<16x128xf32> to vector<16x128xbf16>
    %c816 = arith.constant 816 : index
    %c0_124 = arith.constant 0 : index
    %339 = vector.load %arg5[%c816, %c0_124] : memref<2016x128xbf16, #tpu.memory_space<vmem>>, vector<16x128xbf16>
    tpu.vector_store %arg5[%c816, %c0_124], %338 {strides = array<i32>} : memref<2016x128xbf16, #tpu.memory_space<vmem>>, vector<16x128xbf16>,
    %340 = arith.mulf %337, %9 : vector<16x128xf32>
    %341 = arith.truncf %340 : vector<16x128xf32> to vector<16x128xbf16>
    %c1920 = arith.constant 1920 : index
    %c0_125 = arith.constant 0 : index
    %342 = vector.load %arg5[%c1920, %c0_125] : memref<2016x128xbf16, #tpu.memory_space<vmem>>, vector<16x128xbf16>
    tpu.vector_store %arg5[%c1920, %c0_125], %341 {strides = array<i32>} : memref<2016x128xbf16, #tpu.memory_space<vmem>>, vector<16x128xbf16>,
    %343 = arith.truncf %7 : vector<16x128xf32> to vector<16x128xbf16>
    %c64_126 = arith.constant 64 : index
    %c0_127 = arith.constant 0 : index
    %344 = vector.load %arg5[%c64_126, %c0_127] : memref<2016x128xbf16, #tpu.memory_space<vmem>>, vector<16x128xbf16>
    tpu.vector_store %arg5[%c64_126, %c0_127], %343 {strides = array<i32>} : memref<2016x128xbf16, #tpu.memory_space<vmem>>, vector<16x128xbf16>,
    %345 = arith.mulf %7, %7 : vector<16x128xf32>
    %346 = arith.truncf %345 : vector<16x128xf32> to vector<16x128xbf16>
    %c288 = arith.constant 288 : index
    %c0_128 = arith.constant 0 : index
    %347 = vector.load %arg5[%c288, %c0_128] : memref<2016x128xbf16, #tpu.memory_space<vmem>>, vector<16x128xbf16>
    tpu.vector_store %arg5[%c288, %c0_128], %346 {strides = array<i32>} : memref<2016x128xbf16, #tpu.memory_space<vmem>>, vector<16x128xbf16>,
    %348 = arith.mulf %345, %7 : vector<16x128xf32>
    %349 = arith.truncf %348 : vector<16x128xf32> to vector<16x128xbf16>
    %c832 = arith.constant 832 : index
    %c0_129 = arith.constant 0 : index
    %350 = vector.load %arg5[%c832, %c0_129] : memref<2016x128xbf16, #tpu.memory_space<vmem>>, vector<16x128xbf16>
    tpu.vector_store %arg5[%c832, %c0_129], %349 {strides = array<i32>} : memref<2016x128xbf16, #tpu.memory_space<vmem>>, vector<16x128xbf16>,
    %351 = arith.mulf %348, %7 : vector<16x128xf32>
    %352 = arith.truncf %351 : vector<16x128xf32> to vector<16x128xbf16>
    %c1936 = arith.constant 1936 : index
    %c0_130 = arith.constant 0 : index
    %353 = vector.load %arg5[%c1936, %c0_130] : memref<2016x128xbf16, #tpu.memory_space<vmem>>, vector<16x128xbf16>
    tpu.vector_store %arg5[%c1936, %c0_130], %352 {strides = array<i32>} : memref<2016x128xbf16, #tpu.memory_space<vmem>>, vector<16x128xbf16>,
    %354 = arith.mulf %348, %9 : vector<16x128xf32>
    %355 = arith.truncf %354 : vector<16x128xf32> to vector<16x128xbf16>
    %c1952 = arith.constant 1952 : index
    %c0_131 = arith.constant 0 : index
    %356 = vector.load %arg5[%c1952, %c0_131] : memref<2016x128xbf16, #tpu.memory_space<vmem>>, vector<16x128xbf16>
    tpu.vector_store %arg5[%c1952, %c0_131], %355 {strides = array<i32>} : memref<2016x128xbf16, #tpu.memory_space<vmem>>, vector<16x128xbf16>,
    %357 = arith.mulf %345, %9 : vector<16x128xf32>
    %358 = arith.truncf %357 : vector<16x128xf32> to vector<16x128xbf16>
    %c848 = arith.constant 848 : index
    %c0_132 = arith.constant 0 : index
    %359 = vector.load %arg5[%c848, %c0_132] : memref<2016x128xbf16, #tpu.memory_space<vmem>>, vector<16x128xbf16>
    tpu.vector_store %arg5[%c848, %c0_132], %358 {strides = array<i32>} : memref<2016x128xbf16, #tpu.memory_space<vmem>>, vector<16x128xbf16>,
    %360 = arith.mulf %357, %9 : vector<16x128xf32>
    %361 = arith.truncf %360 : vector<16x128xf32> to vector<16x128xbf16>
    %c1968 = arith.constant 1968 : index
    %c0_133 = arith.constant 0 : index
    %362 = vector.load %arg5[%c1968, %c0_133] : memref<2016x128xbf16, #tpu.memory_space<vmem>>, vector<16x128xbf16>
    tpu.vector_store %arg5[%c1968, %c0_133], %361 {strides = array<i32>} : memref<2016x128xbf16, #tpu.memory_space<vmem>>, vector<16x128xbf16>,
    %363 = arith.mulf %7, %9 : vector<16x128xf32>
    %364 = arith.truncf %363 : vector<16x128xf32> to vector<16x128xbf16>
    %c304 = arith.constant 304 : index
    %c0_134 = arith.constant 0 : index
    %365 = vector.load %arg5[%c304, %c0_134] : memref<2016x128xbf16, #tpu.memory_space<vmem>>, vector<16x128xbf16>
    tpu.vector_store %arg5[%c304, %c0_134], %364 {strides = array<i32>} : memref<2016x128xbf16, #tpu.memory_space<vmem>>, vector<16x128xbf16>,
    %366 = arith.mulf %363, %9 : vector<16x128xf32>
    %367 = arith.truncf %366 : vector<16x128xf32> to vector<16x128xbf16>
    %c864 = arith.constant 864 : index
    %c0_135 = arith.constant 0 : index
    %368 = vector.load %arg5[%c864, %c0_135] : memref<2016x128xbf16, #tpu.memory_space<vmem>>, vector<16x128xbf16>
    tpu.vector_store %arg5[%c864, %c0_135], %367 {strides = array<i32>} : memref<2016x128xbf16, #tpu.memory_space<vmem>>, vector<16x128xbf16>,
    %369 = arith.mulf %366, %9 : vector<16x128xf32>
    %370 = arith.truncf %369 : vector<16x128xf32> to vector<16x128xbf16>
    %c1984 = arith.constant 1984 : index
    %c0_136 = arith.constant 0 : index
    %371 = vector.load %arg5[%c1984, %c0_136] : memref<2016x128xbf16, #tpu.memory_space<vmem>>, vector<16x128xbf16>
    tpu.vector_store %arg5[%c1984, %c0_136], %370 {strides = array<i32>} : memref<2016x128xbf16, #tpu.memory_space<vmem>>, vector<16x128xbf16>,
    %372 = arith.truncf %9 : vector<16x128xf32> to vector<16x128xbf16>
    %c80 = arith.constant 80 : index
    %c0_137 = arith.constant 0 : index
    %373 = vector.load %arg5[%c80, %c0_137] : memref<2016x128xbf16, #tpu.memory_space<vmem>>, vector<16x128xbf16>
    tpu.vector_store %arg5[%c80, %c0_137], %372 {strides = array<i32>} : memref<2016x128xbf16, #tpu.memory_space<vmem>>, vector<16x128xbf16>,
    %374 = arith.mulf %9, %9 : vector<16x128xf32>
    %375 = arith.truncf %374 : vector<16x128xf32> to vector<16x128xbf16>
    %c320 = arith.constant 320 : index
    %c0_138 = arith.constant 0 : index
    %376 = vector.load %arg5[%c320, %c0_138] : memref<2016x128xbf16, #tpu.memory_space<vmem>>, vector<16x128xbf16>
    tpu.vector_store %arg5[%c320, %c0_138], %375 {strides = array<i32>} : memref<2016x128xbf16, #tpu.memory_space<vmem>>, vector<16x128xbf16>,
    %377 = arith.mulf %374, %9 : vector<16x128xf32>
    %378 = arith.truncf %377 : vector<16x128xf32> to vector<16x128xbf16>
    %c880 = arith.constant 880 : index
    %c0_139 = arith.constant 0 : index
    %379 = vector.load %arg5[%c880, %c0_139] : memref<2016x128xbf16, #tpu.memory_space<vmem>>, vector<16x128xbf16>
    tpu.vector_store %arg5[%c880, %c0_139], %378 {strides = array<i32>} : memref<2016x128xbf16, #tpu.memory_space<vmem>>, vector<16x128xbf16>,
    %380 = arith.mulf %377, %9 : vector<16x128xf32>
    %381 = arith.truncf %380 : vector<16x128xf32> to vector<16x128xbf16>
    %c2000 = arith.constant 2000 : index
    %c0_140 = arith.constant 0 : index
    %382 = vector.load %arg5[%c2000, %c0_140] : memref<2016x128xbf16, #tpu.memory_space<vmem>>, vector<16x128xbf16>
    tpu.vector_store %arg5[%c2000, %c0_140], %381 {strides = array<i32>} : memref<2016x128xbf16, #tpu.memory_space<vmem>>, vector<16x128xbf16>,
    %c0_141 = arith.constant 0 : index
    %c0_142 = arith.constant 0 : index
    %c0_143 = arith.constant 0 : index
    %383 = vector.load %arg2[%c0_141, %c0_142, %c0_143] : memref<1x48x2016xbf16, #tpu.memory_space<vmem>>, vector<1x48x2016xbf16>
    %384 = vector.shape_cast %383 : vector<1x48x2016xbf16> to vector<48x2016xbf16>
    %c0_144 = arith.constant 0 : index
    %c0_145 = arith.constant 0 : index
    %385 = vector.load %arg5[%c0_144, %c0_145] : memref<2016x128xbf16, #tpu.memory_space<vmem>>, vector<2016x128xbf16>
    %cst_146 = arith.constant dense<0.000000e+00> : vector<48x128xf32>
    %386 = tpu.matmul %384, %385, %cst_146 {dimension_numbers = #tpu.dot_dimension_numbers<[1], [0], [0], [1], [0, 0, 1, 1], [], []>} : vector<48x2016xbf16>, vector<2016x128xbf16>, vector<48x128xf32> -> vector<48x128xf32>
    %c0_147 = arith.constant 0 : index
    %c0_148 = arith.constant 0 : index
    %c0_149 = arith.constant 0 : index
    %387 = vector.load %arg4[%c0_147, %c0_148, %c0_149] : memref<1x48x128xf32, #tpu.memory_space<vmem>>, vector<1x48x128xf32>
    %388 = vector.shape_cast %387 : vector<1x48x128xf32> to vector<48x128xf32>
    %389 = vector.shape_cast %386 : vector<48x128xf32> to vector<1x48x128xf32>
    tpu.vector_store %arg4[%c0_147, %c0_148, %c0_149], %389 {strides = array<i32>} : memref<1x48x128xf32, #tpu.memory_space<vmem>>, vector<1x48x128xf32>,
    return
  }
  func.func @transform_0(%arg0: i32, %arg1: i32) -> (i32, i32, i32) {
    %c0_i32 = arith.constant 0 : i32
    %c0_i32_0 = arith.constant 0 : i32
    %c0_i32_1 = arith.constant 0 : i32
    return %arg0, %c0_i32, %c0_i32_0 : i32, i32, i32
  }
  func.func @transform_1(%arg0: i32, %arg1: i32) -> (i32, i32, i32) {
    %c0_i32 = arith.constant 0 : i32
    %c0_i32_0 = arith.constant 0 : i32
    return %arg0, %c0_i32, %arg1 : i32, i32, i32
  }
  func.func @transform_2(%arg0: i32, %arg1: i32) -> (i32, i32, i32) {
    %c0_i32 = arith.constant 0 : i32
    %c0_i32_0 = arith.constant 0 : i32
    return %arg0, %c0_i32, %arg1 : i32, i32, i32
  }
}

</mosaic_0001>

<llo_original>
// kernel: tpu_custom_call.1
$region0: #{tpu_custom_call.1}
  #allocation0 [shape = 'u32[]', space=smem, size = 0x4, offset = 0x4, fixed_abs, tag = 'smem constant byte address 0x4 - core index']
  #allocation1 [shape = 'u32[72,128]{1,0:T(1,128)}', space=vmem, size = 0x9000, scoped, tag = 'internal scratch']
  #allocation2 [shape = 'bf16[2016,128]{1,0:T(8,128)(2,1)}', space=vmem, size = 0x7e000, scoped, tag = 'scratch operand']
  %s0 = inlined_call_operand.hbm [shape: bf16[2,48,2016], index: 0, kind: input, shape index: {}]
  %s1 = inlined_call_operand.hbm [shape: f32[2,80,128], index: 1, kind: input, shape index: {}]
  %s2 = inlined_call_operand.hbm [shape: f32[2,48,128], index: 2, kind: output, shape index: {}]
  %s3 = sld [smem:[#allocation0]]
  $region49: #{tpu_custom_call.1} parent=0
    _
  %s5 = ssub.s32 1, %s3
  %s6 = scalar_select 0, %s5, %s3
  $region1: #{tpu_custom_call.1} parent=0
    #allocation3 [shape = 'u8[393216]{0}', space=vmem, size = 0x60000, scoped, tag = 'input window, operand 0']
    #allocation4 [shape = 's32[2]{0}', space=sflag, size = 0x8, scoped, tag = 'scoped memory for tpu_custom_call.1']
    #allocation5 [shape = 's32[2]{0}', space=sflag, size = 0x8, scoped, tag = 'scoped memory for tpu_custom_call.1']
    #allocation6 [shape = 'u8[81920]{0}', space=vmem, size = 0x14000, scoped, tag = 'input window, operand 1']
    #allocation7 [shape = 's32[2]{0}', space=sflag, size = 0x8, scoped, tag = 'scoped memory for tpu_custom_call.1']
    #allocation8 [shape = 'u8[49152]{0}', space=vmem, size = 0xc000, scoped, tag = 'output window, operand 0']
    %7 = vsyncpa [#allocation4], 0
    %s8 = scalar_lea.sflag [#allocation4], 1
    %9 = vsyncpa %s8, 0
    %10 = vsyncpa [#allocation7], 0
    %s11 = scalar_lea.sflag [#allocation7], 1
    %12 = vsyncpa %s11, 0
    %13 = vsyncpa [#allocation5], 0
    %s14 = scalar_lea.sflag [#allocation5], 1
    %15 = vsyncpa %s14, 0
    loop: start=0, step=1, limit=4
    $region2: #{tpu_custom_call.1} parent=1 // loop_pre_header
      _
    $region3: #{tpu_custom_call.1} parent=1 // loop_header
      %s17 = sphi 0, %s21
      %p18 = scmp.ge.s32.totalorder %s17, 4
      %s24 = sphi 0, %s36
      %s25 = sphi 0, %s32
      %s26 = sphi 0, %s24
      %s27 = sphi 0, %s25
      %s28 = sphi 0, %s26
      %s29 = sphi 0, %s27
      %s39 = sphi 0, %s41
      %s42 = sphi 0, %s39
      %s43 = sphi 0, %s42
      %s59 = sphi 0, %s43
      %s67 = sphi 0, %s69
      %s70 = sphi 0, %s67
      %s71 = sphi 0, %s70
      %s87 = sphi 0, %s71
      %s95 = sphi 0, %s97
      %s98 = sphi 0, %s95
      %s99 = sphi 0, %s98
      %s115 = sphi 0, %s99
    $region4: #{tpu_custom_call.1} parent=1 // loop_header_branch
      %20 = sbr.rel (%p18) target = $region8
    $region5: #{tpu_custom_call.1} parent=1 // loop_body
      %s22 = ssub.s32 %s17, 1
      %s23 = ssub.s32 %s17, 2
      %s30 = sadd.s32 1, %s25
      %p31 = scmp.ge.s32.totalorder %s30, 1
      %s32 = scalar_select %p31, 0, %s30
      %s33 = sadd.s32 1, %s24
      %s34 = scalar_select %p31, %s33, %s24
      %p35 = scmp.ge.s32.totalorder %s34, 2
      %s36 = scalar_select %p35, 0, %s34
      %s37 = ssub.s32 %s24, %s36
      %p38 = scmp.eq.s32.totalorder %s37, 0
      %s40 = sadd.s32 %s39, 1
      %s41 = scalar_select %p38, %s39, %s40
      %p44 = pneg %p38
      %p45 = scmp.eq.s32.totalorder %s17, 1
      %p46 = por %p44, %p45
      %p47 = scmp.ne.s32.totalorder %s39, %s42
      %p48 = scmp.eq.s32.totalorder %s17, 0
      %p49 = por %p47, %p48
      %p50 = scmp.ne.s32.totalorder %s39, %s42
      %p51 = scmp.eq.s32.totalorder %s22, 1
      %p52 = por %p50, %p51
      %p53 = scmp.ne.s32.totalorder %s42, %s43
      %p54 = scmp.eq.s32.totalorder %s22, 0
      %p55 = por %p53, %p54
      %p56 = scmp.ne.s32.totalorder %s42, %s43
      %p57 = scmp.eq.s32.totalorder %s23, 1
      %p58 = por %p56, %p57
      %p60 = scmp.ne.s32.totalorder %s43, %s59
      %p61 = scmp.eq.s32.totalorder %s23, 0
      %p62 = por %p60, %p61
      %s63 = ssub.s32 %s24, %s36
      %s64 = ssub.s32 %s25, %s32
      %s65 = sor.u32 %s63, %s64
      %p66 = scmp.eq.s32.totalorder %s65, 0
      %s68 = sadd.s32 %s67, 1
      %s69 = scalar_select %p66, %s67, %s68
      %p72 = pneg %p66
      %p73 = scmp.eq.s32.totalorder %s17, 1
      %p74 = por %p72, %p73
      %p75 = scmp.ne.s32.totalorder %s67, %s70
      %p76 = scmp.eq.s32.totalorder %s17, 0
      %p77 = por %p75, %p76
      %p78 = scmp.ne.s32.totalorder %s67, %s70
      %p79 = scmp.eq.s32.totalorder %s22, 1
      %p80 = por %p78, %p79
      %p81 = scmp.ne.s32.totalorder %s70, %s71
      %p82 = scmp.eq.s32.totalorder %s22, 0
      %p83 = por %p81, %p82
      %p84 = scmp.ne.s32.totalorder %s70, %s71
      %p85 = scmp.eq.s32.totalorder %s23, 1
      %p86 = por %p84, %p85
      %p88 = scmp.ne.s32.totalorder %s71, %s87
      %p89 = scmp.eq.s32.totalorder %s23, 0
      %p90 = por %p88, %p89
      %s91 = ssub.s32 %s24, %s36
      %s92 = ssub.s32 %s25, %s32
      %s93 = sor.u32 %s91, %s92
      %p94 = scmp.eq.s32.totalorder %s93, 0
      %s96 = sadd.s32 %s95, 1
      %s97 = scalar_select %p94, %s95, %s96
      %p100 = pneg %p94
      %p101 = scmp.eq.s32.totalorder %s17, 1
      %p102 = por %p100, %p101
      %p103 = scmp.ne.s32.totalorder %s95, %s98
      %p104 = scmp.eq.s32.totalorder %s17, 0
      %p105 = por %p103, %p104
      %p106 = scmp.ne.s32.totalorder %s95, %s98
      %p107 = scmp.eq.s32.totalorder %s22, 1
      %p108 = por %p106, %p107
      %p109 = scmp.ne.s32.totalorder %s98, %s99
      %p110 = scmp.eq.s32.totalorder %s22, 0
      %p111 = por %p109, %p110
      %p112 = scmp.ne.s32.totalorder %s98, %s99
      %p113 = scmp.eq.s32.totalorder %s23, 1
      %p114 = por %p112, %p113
      %p116 = scmp.ne.s32.totalorder %s99, %s115
      %p117 = scmp.eq.s32.totalorder %s23, 0
      %p118 = por %p116, %p117
      %p119 = scmp.le.s32.totalorder 1, %s17
      %p120 = scmp.lt.s32.totalorder %s17, 3
      %p121 = pnand %p119, %p120
      %p122 = pneg %p121
      // Predicated region
      $region9: #{tpu_custom_call.1} parent=5 // pred_check
        _
      $region10: #{tpu_custom_call.1} parent=5 // pred_check_branch
        %124 = sbr.rel (%p121) target = $region12
      $region11: #{tpu_custom_call.1} parent=5 // pred_region
        %s125 = ssub.s32 %s17, 1
      $region12: #{tpu_custom_call.1} parent=5 // pred_fallthru
        _
      %p126 = scmp.lt.s32.totalorder %s17, 2
      // Predicated region
      $region13: #{tpu_custom_call.1} parent=5 // pred_check
        %p127 = pneg %p126
      $region14: #{tpu_custom_call.1} parent=5 // pred_check_branch
        %129 = sbr.rel (%p127) target = $region16
      $region15: #{tpu_custom_call.1} parent=5 // pred_region
        // Predicated region
        $region17: #{tpu_custom_call.1} parent=15 // pred_check
          %p130 = pneg %p49
        $region18: #{tpu_custom_call.1} parent=15 // pred_check_branch
          %132 = sbr.rel (%p130) target = $region20
        $region19: #{tpu_custom_call.1} parent=15 // pred_region
          %s133 = sand.u32 %s39, 1
          %s134 = scalar_lea.sflag [#allocation4], %s133
          %s135 = sand.u32 %s39, 1
          %s136 = smul.addr %s135, 384
          %s137 = scalar_lea.vmem [#allocation3], %s136
          %139 = vsyncadd %s134, 0
          %s140 = smul.addr %s24, 96
          %s141 = smul.addr %s140, 4
          %s142 = scalar_lea.hbm %s0, %s141
          %s143 = sshll.u32 %s142, 4
          %s144 = int_to_ptr.hbm [resolvable:$true] %s143
          %s145 = sshll.u32 %s137, 4
          %s146 = int_to_ptr.vmem [resolvable:$true] %s145
          %151 = dma.hbm_to_vmem [thread:$0]  %s144, 6144, %s146, %s134, 1024, 1024, 64
        $region20: #{tpu_custom_call.1} parent=15 // pred_fallthru
          _
        // Predicated region
        $region21: #{tpu_custom_call.1} parent=15 // pred_check
          %p152 = pneg %p77
        $region22: #{tpu_custom_call.1} parent=15 // pred_check_branch
          %154 = sbr.rel (%p152) target = $region24
        $region23: #{tpu_custom_call.1} parent=15 // pred_region
          %s155 = sand.u32 %s67, 1
          %s156 = scalar_lea.sflag [#allocation7], %s155
          %s157 = sand.u32 %s67, 1
          %s158 = smul.addr %s157, 80
          %s159 = scalar_lea.vmem [#allocation6], %s158
          %161 = vsyncadd %s156, 0
          %s162 = smul.addr %s24, 10
          %s163 = sadd.s32 %s25, %s162
          %s164 = smul.addr %s163, 8
          %s165 = scalar_lea.hbm %s1, %s164
          %s166 = sshll.u32 %s165, 4
          %s167 = int_to_ptr.hbm [resolvable:$true] %s166
          %s168 = sshll.u32 %s159, 4
          %s169 = int_to_ptr.vmem [resolvable:$true] %s168
          %174 = dma.hbm_to_vmem [thread:$0]  %s167, 1280, %s169, %s156, 128, 128, 8
        $region24: #{tpu_custom_call.1} parent=15 // pred_fallthru
          _
      $region16: #{tpu_custom_call.1} parent=5 // pred_fallthru
        _
      %p175 = scmp.le.s32.totalorder 1, %s17
      %p176 = scmp.lt.s32.totalorder %s17, 3
      %p177 = pnand %p175, %p176
      %p178 = pneg %p177
      // Predicated region
      $region25: #{tpu_custom_call.1} parent=5 // pred_check
        _
      $region26: #{tpu_custom_call.1} parent=5 // pred_check_branch
        %180 = sbr.rel (%p177) target = $region28
      $region27: #{tpu_custom_call.1} parent=5 // pred_region
        %s181 = ssub.s32 %s17, 1
        %s182 = sand.u32 %s42, 1
        %s183 = scalar_lea.sflag [#allocation4], %s182
        %s184 = sand.u32 %s42, 1
        %s185 = smul.addr %s184, 384
        %s186 = scalar_lea.vmem [#allocation3], %s185
        // Predicated region
        $region29: #{tpu_custom_call.1} parent=27 // pred_check
          %p187 = pneg %p55
        $region30: #{tpu_custom_call.1} parent=27 // pred_check_branch
          %189 = sbr.rel (%p187) target = $region32
        $region31: #{tpu_custom_call.1} parent=27 // pred_region
          %191 = dma.done %s183, 6144
        $region32: #{tpu_custom_call.1} parent=27 // pred_fallthru
          _
        %s192 = sand.u32 %s70, 1
        %s193 = scalar_lea.sflag [#allocation7], %s192
        %s194 = sand.u32 %s70, 1
        %s195 = smul.addr %s194, 80
        %s196 = scalar_lea.vmem [#allocation6], %s195
        // Predicated region
        $region33: #{tpu_custom_call.1} parent=27 // pred_check
          %p197 = pneg %p83
        $region34: #{tpu_custom_call.1} parent=27 // pred_check_branch
          %199 = sbr.rel (%p197) target = $region36
        $region35: #{tpu_custom_call.1} parent=27 // pred_region
          %201 = dma.done %s193, 1280
        $region36: #{tpu_custom_call.1} parent=27 // pred_fallthru
          _
        %s202 = sand.u32 %s42, 1
        %s203 = scalar_lea.sflag [#allocation4], %s202
        %s204 = sand.u32 %s42, 1
        %s205 = smul.addr %s204, 384
        %s206 = scalar_lea.vmem [#allocation3], %s205
        %p207 = pneg %p55
        %p208 = pneg %p52
        %s209 = sand.u32 %s70, 1
        %s210 = scalar_lea.sflag [#allocation7], %s209
        %s211 = sand.u32 %s70, 1
        %s212 = smul.addr %s211, 80
        %s213 = scalar_lea.vmem [#allocation6], %s212
        %p214 = pneg %p83
        %p215 = pneg %p80
        %p216 = pneg %p111
        %p217 = pneg %p108
        %s218 = sand.u32 %s98, 1
        %s219 = scalar_lea.sflag [#allocation5], %s218
        %s220 = sand.u32 %s98, 1
        %s221 = smul.addr %s220, 48
        %s222 = scalar_lea.vmem [#allocation8], %s221
        %v225 = vld [vmem:[%s196] sm:$0xff]
        %v226 = vld [vmem:[%s196 + $0x8] sm:$0xff]
        %v227 = vld [vmem:[%s196 + $0x10] sm:$0xff]
        %v228 = vld [vmem:[%s196 + $0x18] sm:$0xff]
        %v229 = vld [vmem:[%s196 + $0x20] sm:$0xff]
        %v230 = vld [vmem:[%s196 + $0x28] sm:$0xff]
        %v231 = vld [vmem:[%s196 + $0x30] sm:$0xff]
        %v232 = vld [vmem:[%s196 + $0x38] sm:$0xff]
        %v233 = vld [vmem:[%s196 + $0x40] sm:$0xff]
        %v234 = vld [vmem:[%s196 + $0x48] sm:$0xff]
        %235 = vst [vmem:[#allocation2] sm:$0xf] 1065369472
        %236 = vst [vmem:[#allocation2 + $0x4] sm:$0xf] 1065369472
        %v237 = vpack.c.bf16 %v225, %v225
        %v238 = vpack.c.bf16 %v226, %v226
        %239 = vst [vmem:[#allocation2 + $0x8] sm:$0xf] %v237
        %240 = vst [vmem:[#allocation2 + $0xc] sm:$0xf] %v238
        %v241 = vmul.f32 %v225, %v225
        %v242 = vmul.f32 %v226, %v226
        %v243 = vpack.c.bf16 %v241, %v241
        %v244 = vpack.c.bf16 %v242, %v242
        %245 = vst [vmem:[#allocation2 + $0x30] sm:$0xf] %v243
        %246 = vst [vmem:[#allocation2 + $0x34] sm:$0xf] %v244
        %v247 = vmul.f32 %v241, %v225
        %v248 = vmul.f32 %v242, %v226
        %v249 = vpack.c.bf16 %v247, %v247
        %v250 = vpack.c.bf16 %v248, %v248
        %251 = vst [vmem:[#allocation2 + $0xa8] sm:$0xf] %v249
        %252 = vst [vmem:[#allocation2 + $0xac] sm:$0xf] %v250
        %v253 = vmul.f32 %v247, %v225
        %v254 = vmul.f32 %v248, %v226
        %v255 = vpack.c.bf16 %v253, %v253
        %v256 = vpack.c.bf16 %v254, %v254
        %257 = vst [vmem:[#allocation2 + $0x1c0] sm:$0xf] %v255
        %258 = vst [vmem:[#allocation2 + $0x1c4] sm:$0xf] %v256
        %v259 = vmul.f32 %v247, %v227
        %v260 = vmul.f32 %v248, %v228
        %v261 = vpack.c.bf16 %v259, %v259
        %v262 = vpack.c.bf16 %v260, %v260
        %263 = vst [vmem:[#allocation2 + $0x1c8] sm:$0xf] %v261
        %264 = vst [vmem:[#allocation2 + $0x1cc] sm:$0xf] %v262
        %v265 = vmul.f32 %v247, %v229
        %v266 = vmul.f32 %v248, %v230
        %v267 = vpack.c.bf16 %v265, %v265
        %v268 = vpack.c.bf16 %v266, %v266
        %269 = vst [vmem:[#allocation2 + $0x1d0] sm:$0xf] %v267
        %270 = vst [vmem:[#allocation2 + $0x1d4] sm:$0xf] %v268
        %v271 = vmul.f32 %v247, %v231
        %v272 = vmul.f32 %v248, %v232
        %v273 = vpack.c.bf16 %v271, %v271
        %v274 = vpack.c.bf16 %v272, %v272
        %275 = vst [vmem:[#allocation2 + $0x1d8] sm:$0xf] %v273
        %276 = vst [vmem:[#allocation2 + $0x1dc] sm:$0xf] %v274
        %v277 = vmul.f32 %v247, %v233
        %v278 = vmul.f32 %v248, %v234
        %v279 = vpack.c.bf16 %v277, %v277
        %v280 = vpack.c.bf16 %v278, %v278
        %281 = vst [vmem:[#allocation2 + $0x1e0] sm:$0xf] %v279
        %282 = vst [vmem:[#allocation2 + $0x1e4] sm:$0xf] %v280
        %v283 = vmul.f32 %v241, %v227
        %v284 = vmul.f32 %v242, %v228
        %v285 = vpack.c.bf16 %v283, %v283
        %v286 = vpack.c.bf16 %v284, %v284
        %287 = vst [vmem:[#allocation2 + $0xb0] sm:$0xf] %v285
        %288 = vst [vmem:[#allocation2 + $0xb4] sm:$0xf] %v286
        %v289 = vmul.f32 %v283, %v227
        %v290 = vmul.f32 %v284, %v228
        %v291 = vpack.c.bf16 %v289, %v289
        %v292 = vpack.c.bf16 %v290, %v290
        %293 = vst [vmem:[#allocation2 + $0x1e8] sm:$0xf] %v291
        %294 = vst [vmem:[#allocation2 + $0x1ec] sm:$0xf] %v292
        %v295 = vmul.f32 %v283, %v229
        %v296 = vmul.f32 %v284, %v230
        %v297 = vpack.c.bf16 %v295, %v295
        %v298 = vpack.c.bf16 %v296, %v296
        %299 = vst [vmem:[#allocation2 + $0x1f0] sm:$0xf] %v297
        %300 = vst [vmem:[#allocation2 + $0x1f4] sm:$0xf] %v298
        %v301 = vmul.f32 %v283, %v231
        %v302 = vmul.f32 %v284, %v232
        %v303 = vpack.c.bf16 %v301, %v301
        %v304 = vpack.c.bf16 %v302, %v302
        %305 = vst [vmem:[#allocation2 + $0x1f8] sm:$0xf] %v303
        %306 = vst [vmem:[#allocation2 + $0x1fc] sm:$0xf] %v304
        %v307 = vmul.f32 %v283, %v233
        %v308 = vmul.f32 %v284, %v234
        %v309 = vpack.c.bf16 %v307, %v307
        %v310 = vpack.c.bf16 %v308, %v308
        %311 = vst [vmem:[#allocation2 + $0x200] sm:$0xf] %v309
        %312 = vst [vmem:[#allocation2 + $0x204] sm:$0xf] %v310
        %v313 = vmul.f32 %v241, %v229
        %v314 = vmul.f32 %v242, %v230
        %v315 = vpack.c.bf16 %v313, %v313
        %v316 = vpack.c.bf16 %v314, %v314
        %317 = vst [vmem:[#allocation2 + $0xb8] sm:$0xf] %v315
        %318 = vst [vmem:[#allocation2 + $0xbc] sm:$0xf] %v316
        %v319 = vmul.f32 %v313, %v229
        %v320 = vmul.f32 %v314, %v230
        %v321 = vpack.c.bf16 %v319, %v319
        %v322 = vpack.c.bf16 %v320, %v320
        %323 = vst [vmem:[#allocation2 + $0x208] sm:$0xf] %v321
        %324 = vst [vmem:[#allocation2 + $0x20c] sm:$0xf] %v322
        %v325 = vmul.f32 %v313, %v231
        %v326 = vmul.f32 %v314, %v232
        %v327 = vpack.c.bf16 %v325, %v325
        %v328 = vpack.c.bf16 %v326, %v326
        %329 = vst [vmem:[#allocation2 + $0x210] sm:$0xf] %v327
        %330 = vst [vmem:[#allocation2 + $0x214] sm:$0xf] %v328
        %v331 = vmul.f32 %v313, %v233
        %v332 = vmul.f32 %v314, %v234
        %v333 = vpack.c.bf16 %v331, %v331
        %v334 = vpack.c.bf16 %v332, %v332
        %335 = vst [vmem:[#allocation2 + $0x218] sm:$0xf] %v333
        %336 = vst [vmem:[#allocation2 + $0x21c] sm:$0xf] %v334
        %v337 = vmul.f32 %v241, %v231
        %v338 = vmul.f32 %v242, %v232
        %v339 = vpack.c.bf16 %v337, %v337
        %v340 = vpack.c.bf16 %v338, %v338
        %341 = vst [vmem:[#allocation2 + $0xc0] sm:$0xf] %v339
        %342 = vst [vmem:[#allocation2 + $0xc4] sm:$0xf] %v340
        %v343 = vmul.f32 %v337, %v231
        %v344 = vmul.f32 %v338, %v232
        %v345 = vpack.c.bf16 %v343, %v343
        %v346 = vpack.c.bf16 %v344, %v344
        %347 = vst [vmem:[#allocation2 + $0x220] sm:$0xf] %v345
        %348 = vst [vmem:[#allocation2 + $0x224] sm:$0xf] %v346
        %v349 = vmul.f32 %v337, %v233
        %v350 = vmul.f32 %v338, %v234
        %v351 = vpack.c.bf16 %v349, %v349
        %v352 = vpack.c.bf16 %v350, %v350
        %353 = vst [vmem:[#allocation2 + $0x228] sm:$0xf] %v351
        %354 = vst [vmem:[#allocation2 + $0x22c] sm:$0xf] %v352
        %v355 = vmul.f32 %v241, %v233
        %v356 = vmul.f32 %v242, %v234
        %v357 = vpack.c.bf16 %v355, %v355
        %v358 = vpack.c.bf16 %v356, %v356
        %359 = vst [vmem:[#allocation2 + $0xc8] sm:$0xf] %v357
        %360 = vst [vmem:[#allocation2 + $0xcc] sm:$0xf] %v358
        %v361 = vmul.f32 %v355, %v233
        %v362 = vmul.f32 %v356, %v234
        %v363 = vpack.c.bf16 %v361, %v361
        %v364 = vpack.c.bf16 %v362, %v362
        %365 = vst [vmem:[#allocation2 + $0x230] sm:$0xf] %v363
        %366 = vst [vmem:[#allocation2 + $0x234] sm:$0xf] %v364
        %v367 = vmul.f32 %v225, %v227
        %v368 = vmul.f32 %v226, %v228
        %v369 = vpack.c.bf16 %v367, %v367
        %v370 = vpack.c.bf16 %v368, %v368
        %371 = vst [vmem:[#allocation2 + $0x38] sm:$0xf] %v369
        %372 = vst [vmem:[#allocation2 + $0x3c] sm:$0xf] %v370
        %v373 = vmul.f32 %v367, %v227
        %v374 = vmul.f32 %v368, %v228
        %v375 = vpack.c.bf16 %v373, %v373
        %v376 = vpack.c.bf16 %v374, %v374
        %377 = vst [vmem:[#allocation2 + $0xd0] sm:$0xf] %v375
        %378 = vst [vmem:[#allocation2 + $0xd4] sm:$0xf] %v376
        %v379 = vmul.f32 %v373, %v227
        %v380 = vmul.f32 %v374, %v228
        %v381 = vpack.c.bf16 %v379, %v379
        %v382 = vpack.c.bf16 %v380, %v380
        %383 = vst [vmem:[#allocation2 + $0x238] sm:$0xf] %v381
        %384 = vst [vmem:[#allocation2 + $0x23c] sm:$0xf] %v382
        %v385 = vmul.f32 %v373, %v229
        %v386 = vmul.f32 %v374, %v230
        %v387 = vpack.c.bf16 %v385, %v385
        %v388 = vpack.c.bf16 %v386, %v386
        %389 = vst [vmem:[#allocation2 + $0x240] sm:$0xf] %v387
        %390 = vst [vmem:[#allocation2 + $0x244] sm:$0xf] %v388
        %v391 = vmul.f32 %v373, %v231
        %v392 = vmul.f32 %v374, %v232
        %v393 = vpack.c.bf16 %v391, %v391
        %v394 = vpack.c.bf16 %v392, %v392
        %395 = vst [vmem:[#allocation2 + $0x248] sm:$0xf] %v393
        %396 = vst [vmem:[#allocation2 + $0x24c] sm:$0xf] %v394
        %v397 = vmul.f32 %v373, %v233
        %v398 = vmul.f32 %v374, %v234
        %v399 = vpack.c.bf16 %v397, %v397
        %v400 = vpack.c.bf16 %v398, %v398
        %401 = vst [vmem:[#allocation2 + $0x250] sm:$0xf] %v399
        %402 = vst [vmem:[#allocation2 + $0x254] sm:$0xf] %v400
        %v403 = vmul.f32 %v367, %v229
        %v404 = vmul.f32 %v368, %v230
        %v405 = vpack.c.bf16 %v403, %v403
        %v406 = vpack.c.bf16 %v404, %v404
        %407 = vst [vmem:[#allocation2 + $0xd8] sm:$0xf] %v405
        %408 = vst [vmem:[#allocation2 + $0xdc] sm:$0xf] %v406
        %v409 = vmul.f32 %v403, %v229
        %v410 = vmul.f32 %v404, %v230
        %v411 = vpack.c.bf16 %v409, %v409
        %v412 = vpack.c.bf16 %v410, %v410
        %413 = vst [vmem:[#allocation2 + $0x258] sm:$0xf] %v411
        %414 = vst [vmem:[#allocation2 + $0x25c] sm:$0xf] %v412
        %v415 = vmul.f32 %v403, %v231
        %v416 = vmul.f32 %v404, %v232
        %v417 = vpack.c.bf16 %v415, %v415
        %v418 = vpack.c.bf16 %v416, %v416
        %419 = vst [vmem:[#allocation2 + $0x260] sm:$0xf] %v417
        %420 = vst [vmem:[#allocation2 + $0x264] sm:$0xf] %v418
        %v421 = vmul.f32 %v403, %v233
        %v422 = vmul.f32 %v404, %v234
        %v423 = vpack.c.bf16 %v421, %v421
        %v424 = vpack.c.bf16 %v422, %v422
        %425 = vst [vmem:[#allocation2 + $0x268] sm:$0xf] %v423
        %426 = vst [vmem:[#allocation2 + $0x26c] sm:$0xf] %v424
        %v427 = vmul.f32 %v367, %v231
        %v428 = vmul.f32 %v368, %v232
        %v429 = vpack.c.bf16 %v427, %v427
        %v430 = vpack.c.bf16 %v428, %v428
        %431 = vst [vmem:[#allocation2 + $0xe0] sm:$0xf] %v429
        %432 = vst [vmem:[#allocation2 + $0xe4] sm:$0xf] %v430
        %v433 = vmul.f32 %v427, %v231
        %v434 = vmul.f32 %v428, %v232
        %v435 = vpack.c.bf16 %v433, %v433
        %v436 = vpack.c.bf16 %v434, %v434
        %437 = vst [vmem:[#allocation2 + $0x270] sm:$0xf] %v435
        %438 = vst [vmem:[#allocation2 + $0x274] sm:$0xf] %v436
        %v439 = vmul.f32 %v427, %v233
        %v440 = vmul.f32 %v428, %v234
        %v441 = vpack.c.bf16 %v439, %v439
        %v442 = vpack.c.bf16 %v440, %v440
        %443 = vst [vmem:[#allocation2 + $0x278] sm:$0xf] %v441
        %444 = vst [vmem:[#allocation2 + $0x27c] sm:$0xf] %v442
        %v445 = vmul.f32 %v367, %v233
        %v446 = vmul.f32 %v368, %v234
        %v447 = vpack.c.bf16 %v445, %v445
        %v448 = vpack.c.bf16 %v446, %v446
        %449 = vst [vmem:[#allocation2 + $0xe8] sm:$0xf] %v447
        %450 = vst [vmem:[#allocation2 + $0xec] sm:$0xf] %v448
        %v451 = vmul.f32 %v445, %v233
        %v452 = vmul.f32 %v446, %v234
        %v453 = vpack.c.bf16 %v451, %v451
        %v454 = vpack.c.bf16 %v452, %v452
        %455 = vst [vmem:[#allocation2 + $0x280] sm:$0xf] %v453
        %456 = vst [vmem:[#allocation2 + $0x284] sm:$0xf] %v454
        %v457 = vmul.f32 %v225, %v229
        %v458 = vmul.f32 %v226, %v230
        %v459 = vpack.c.bf16 %v457, %v457
        %v460 = vpack.c.bf16 %v458, %v458
        %461 = vst [vmem:[#allocation2 + $0x40] sm:$0xf] %v459
        %462 = vst [vmem:[#allocation2 + $0x44] sm:$0xf] %v460
        %v463 = vmul.f32 %v457, %v229
        %v464 = vmul.f32 %v458, %v230
        %v465 = vpack.c.bf16 %v463, %v463
        %v466 = vpack.c.bf16 %v464, %v464
        %467 = vst [vmem:[#allocation2 + $0xf0] sm:$0xf] %v465
        %468 = vst [vmem:[#allocation2 + $0xf4] sm:$0xf] %v466
        %v469 = vmul.f32 %v463, %v229
        %v470 = vmul.f32 %v464, %v230
        %v471 = vpack.c.bf16 %v469, %v469
        %v472 = vpack.c.bf16 %v470, %v470
        %473 = vst [vmem:[#allocation2 + $0x288] sm:$0xf] %v471
        %474 = vst [vmem:[#allocation2 + $0x28c] sm:$0xf] %v472
        %v475 = vmul.f32 %v463, %v231
        %v476 = vmul.f32 %v464, %v232
        %v477 = vpack.c.bf16 %v475, %v475
        %v478 = vpack.c.bf16 %v476, %v476
        %479 = vst [vmem:[#allocation2 + $0x290] sm:$0xf] %v477
        %480 = vst [vmem:[#allocation2 + $0x294] sm:$0xf] %v478
        %v481 = vmul.f32 %v463, %v233
        %v482 = vmul.f32 %v464, %v234
        %v483 = vpack.c.bf16 %v481, %v481
        %v484 = vpack.c.bf16 %v482, %v482
        %485 = vst [vmem:[#allocation2 + $0x298] sm:$0xf] %v483
        %486 = vst [vmem:[#allocation2 + $0x29c] sm:$0xf] %v484
        %v487 = vmul.f32 %v457, %v231
        %v488 = vmul.f32 %v458, %v232
        %v489 = vpack.c.bf16 %v487, %v487
        %v490 = vpack.c.bf16 %v488, %v488
        %491 = vst [vmem:[#allocation2 + $0xf8] sm:$0xf] %v489
        %492 = vst [vmem:[#allocation2 + $0xfc] sm:$0xf] %v490
        %v493 = vmul.f32 %v487, %v231
        %v494 = vmul.f32 %v488, %v232
        %v495 = vpack.c.bf16 %v493, %v493
        %v496 = vpack.c.bf16 %v494, %v494
        %497 = vst [vmem:[#allocation2 + $0x2a0] sm:$0xf] %v495
        %498 = vst [vmem:[#allocation2 + $0x2a4] sm:$0xf] %v496
        %v499 = vmul.f32 %v487, %v233
        %v500 = vmul.f32 %v488, %v234
        %v501 = vpack.c.bf16 %v499, %v499
        %v502 = vpack.c.bf16 %v500, %v500
        %503 = vst [vmem:[#allocation2 + $0x2a8] sm:$0xf] %v501
        %504 = vst [vmem:[#allocation2 + $0x2ac] sm:$0xf] %v502
        %v505 = vmul.f32 %v457, %v233
        %v506 = vmul.f32 %v458, %v234
        %v507 = vpack.c.bf16 %v505, %v505
        %v508 = vpack.c.bf16 %v506, %v506
        %509 = vst [vmem:[#allocation2 + $0x100] sm:$0xf] %v507
        %510 = vst [vmem:[#allocation2 + $0x104] sm:$0xf] %v508
        %v511 = vmul.f32 %v505, %v233
        %v512 = vmul.f32 %v506, %v234
        %v513 = vpack.c.bf16 %v511, %v511
        %v514 = vpack.c.bf16 %v512, %v512
        %515 = vst [vmem:[#allocation2 + $0x2b0] sm:$0xf] %v513
        %516 = vst [vmem:[#allocation2 + $0x2b4] sm:$0xf] %v514
        %v517 = vmul.f32 %v225, %v231
        %v518 = vmul.f32 %v226, %v232
        %v519 = vpack.c.bf16 %v517, %v517
        %v520 = vpack.c.bf16 %v518, %v518
        %521 = vst [vmem:[#allocation2 + $0x48] sm:$0xf] %v519
        %522 = vst [vmem:[#allocation2 + $0x4c] sm:$0xf] %v520
        %v523 = vmul.f32 %v517, %v231
        %v524 = vmul.f32 %v518, %v232
        %v525 = vpack.c.bf16 %v523, %v523
        %v526 = vpack.c.bf16 %v524, %v524
        %527 = vst [vmem:[#allocation2 + $0x108] sm:$0xf] %v525
        %528 = vst [vmem:[#allocation2 + $0x10c] sm:$0xf] %v526
        %v529 = vmul.f32 %v523, %v231
        %v530 = vmul.f32 %v524, %v232
        %v531 = vpack.c.bf16 %v529, %v529
        %v532 = vpack.c.bf16 %v530, %v530
        %533 = vst [vmem:[#allocation2 + $0x2b8] sm:$0xf] %v531
        %534 = vst [vmem:[#allocation2 + $0x2bc] sm:$0xf] %v532
        %v535 = vmul.f32 %v523, %v233
        %v536 = vmul.f32 %v524, %v234
        %v537 = vpack.c.bf16 %v535, %v535
        %v538 = vpack.c.bf16 %v536, %v536
        %539 = vst [vmem:[#allocation2 + $0x2c0] sm:$0xf] %v537
        %540 = vst [vmem:[#allocation2 + $0x2c4] sm:$0xf] %v538
        %v541 = vmul.f32 %v517, %v233
        %v542 = vmul.f32 %v518, %v234
        %v543 = vpack.c.bf16 %v541, %v541
        %v544 = vpack.c.bf16 %v542, %v542
        %545 = vst [vmem:[#allocation2 + $0x110] sm:$0xf] %v543
        %546 = vst [vmem:[#allocation2 + $0x114] sm:$0xf] %v544
        %v547 = vmul.f32 %v541, %v233
        %v548 = vmul.f32 %v542, %v234
        %v549 = vpack.c.bf16 %v547, %v547
        %v550 = vpack.c.bf16 %v548, %v548
        %551 = vst [vmem:[#allocation2 + $0x2c8] sm:$0xf] %v549
        %552 = vst [vmem:[#allocation2 + $0x2cc] sm:$0xf] %v550
        %v553 = vmul.f32 %v225, %v233
        %v554 = vmul.f32 %v226, %v234
        %v555 = vpack.c.bf16 %v553, %v553
        %v556 = vpack.c.bf16 %v554, %v554
        %557 = vst [vmem:[#allocation2 + $0x50] sm:$0xf] %v555
        %558 = vst [vmem:[#allocation2 + $0x54] sm:$0xf] %v556
        %v559 = vmul.f32 %v553, %v233
        %v560 = vmul.f32 %v554, %v234
        %v561 = vpack.c.bf16 %v559, %v559
        %v562 = vpack.c.bf16 %v560, %v560
        %563 = vst [vmem:[#allocation2 + $0x118] sm:$0xf] %v561
        %564 = vst [vmem:[#allocation2 + $0x11c] sm:$0xf] %v562
        %v565 = vmul.f32 %v559, %v233
        %v566 = vmul.f32 %v560, %v234
        %v567 = vpack.c.bf16 %v565, %v565
        %v568 = vpack.c.bf16 %v566, %v566
        %569 = vst [vmem:[#allocation2 + $0x2d0] sm:$0xf] %v567
        %570 = vst [vmem:[#allocation2 + $0x2d4] sm:$0xf] %v568
        %v571 = vpack.c.bf16 %v227, %v227
        %v572 = vpack.c.bf16 %v228, %v228
        %573 = vst [vmem:[#allocation2 + $0x10] sm:$0xf] %v571
        %574 = vst [vmem:[#allocation2 + $0x14] sm:$0xf] %v572
        %v575 = vmul.f32 %v227, %v227
        %v576 = vmul.f32 %v228, %v228
        %v577 = vpack.c.bf16 %v575, %v575
        %v578 = vpack.c.bf16 %v576, %v576
        %579 = vst [vmem:[#allocation2 + $0x58] sm:$0xf] %v577
        %580 = vst [vmem:[#allocation2 + $0x5c] sm:$0xf] %v578
        %v581 = vmul.f32 %v575, %v227
        %v582 = vmul.f32 %v576, %v228
        %v583 = vpack.c.bf16 %v581, %v581
        %v584 = vpack.c.bf16 %v582, %v582
        %585 = vst [vmem:[#allocation2 + $0x120] sm:$0xf] %v583
        %586 = vst [vmem:[#allocation2 + $0x124] sm:$0xf] %v584
        %v587 = vmul.f32 %v581, %v227
        %v588 = vmul.f32 %v582, %v228
        %v589 = vpack.c.bf16 %v587, %v587
        %v590 = vpack.c.bf16 %v588, %v588
        %591 = vst [vmem:[#allocation2 + $0x2d8] sm:$0xf] %v589
        %592 = vst [vmem:[#allocation2 + $0x2dc] sm:$0xf] %v590
        %v593 = vmul.f32 %v581, %v229
        %v594 = vmul.f32 %v582, %v230
        %v595 = vpack.c.bf16 %v593, %v593
        %v596 = vpack.c.bf16 %v594, %v594
        %597 = vst [vmem:[#allocation2 + $0x2e0] sm:$0xf] %v595
        %598 = vst [vmem:[#allocation2 + $0x2e4] sm:$0xf] %v596
        %v599 = vmul.f32 %v581, %v231
        %v600 = vmul.f32 %v582, %v232
        %v601 = vpack.c.bf16 %v599, %v599
        %v602 = vpack.c.bf16 %v600, %v600
        %603 = vst [vmem:[#allocation2 + $0x2e8] sm:$0xf] %v601
        %604 = vst [vmem:[#allocation2 + $0x2ec] sm:$0xf] %v602
        %v605 = vmul.f32 %v581, %v233
        %v606 = vmul.f32 %v582, %v234
        %v607 = vpack.c.bf16 %v605, %v605
        %v608 = vpack.c.bf16 %v606, %v606
        %609 = vst [vmem:[#allocation2 + $0x2f0] sm:$0xf] %v607
        %610 = vst [vmem:[#allocation2 + $0x2f4] sm:$0xf] %v608
        %v611 = vmul.f32 %v575, %v229
        %v612 = vmul.f32 %v576, %v230
        %v613 = vpack.c.bf16 %v611, %v611
        %v614 = vpack.c.bf16 %v612, %v612
        %615 = vst [vmem:[#allocation2 + $0x128] sm:$0xf] %v613
        %616 = vst [vmem:[#allocation2 + $0x12c] sm:$0xf] %v614
        %v617 = vmul.f32 %v611, %v229
        %v618 = vmul.f32 %v612, %v230
        %v619 = vpack.c.bf16 %v617, %v617
        %v620 = vpack.c.bf16 %v618, %v618
        %621 = vst [vmem:[#allocation2 + $0x2f8] sm:$0xf] %v619
        %622 = vst [vmem:[#allocation2 + $0x2fc] sm:$0xf] %v620
        %v623 = vmul.f32 %v611, %v231
        %v624 = vmul.f32 %v612, %v232
        %v625 = vpack.c.bf16 %v623, %v623
        %v626 = vpack.c.bf16 %v624, %v624
        %627 = vst [vmem:[#allocation2 + $0x300] sm:$0xf] %v625
        %628 = vst [vmem:[#allocation2 + $0x304] sm:$0xf] %v626
        %v629 = vmul.f32 %v611, %v233
        %v630 = vmul.f32 %v612, %v234
        %v631 = vpack.c.bf16 %v629, %v629
        %v632 = vpack.c.bf16 %v630, %v630
        %633 = vst [vmem:[#allocation2 + $0x308] sm:$0xf] %v631
        %634 = vst [vmem:[#allocation2 + $0x30c] sm:$0xf] %v632
        %v635 = vmul.f32 %v575, %v231
        %v636 = vmul.f32 %v576, %v232
        %v637 = vpack.c.bf16 %v635, %v635
        %v638 = vpack.c.bf16 %v636, %v636
        %639 = vst [vmem:[#allocation2 + $0x130] sm:$0xf] %v637
        %640 = vst [vmem:[#allocation2 + $0x134] sm:$0xf] %v638
        %v641 = vmul.f32 %v635, %v231
        %v642 = vmul.f32 %v636, %v232
        %v643 = vpack.c.bf16 %v641, %v641
        %v644 = vpack.c.bf16 %v642, %v642
        %645 = vst [vmem:[#allocation2 + $0x310] sm:$0xf] %v643
        %646 = vst [vmem:[#allocation2 + $0x314] sm:$0xf] %v644
        %v647 = vmul.f32 %v635, %v233
        %v648 = vmul.f32 %v636, %v234
        %v649 = vpack.c.bf16 %v647, %v647
        %v650 = vpack.c.bf16 %v648, %v648
        %651 = vst [vmem:[#allocation2 + $0x318] sm:$0xf] %v649
        %652 = vst [vmem:[#allocation2 + $0x31c] sm:$0xf] %v650
        %v653 = vmul.f32 %v575, %v233
        %v654 = vmul.f32 %v576, %v234
        %v655 = vpack.c.bf16 %v653, %v653
        %v656 = vpack.c.bf16 %v654, %v654
        %657 = vst [vmem:[#allocation2 + $0x138] sm:$0xf] %v655
        %658 = vst [vmem:[#allocation2 + $0x13c] sm:$0xf] %v656
        %v659 = vmul.f32 %v653, %v233
        %v660 = vmul.f32 %v654, %v234
        %v661 = vpack.c.bf16 %v659, %v659
        %v662 = vpack.c.bf16 %v660, %v660
        %663 = vst [vmem:[#allocation2 + $0x320] sm:$0xf] %v661
        %664 = vst [vmem:[#allocation2 + $0x324] sm:$0xf] %v662
        %v665 = vmul.f32 %v227, %v229
        %v666 = vmul.f32 %v228, %v230
        %v667 = vpack.c.bf16 %v665, %v665
        %v668 = vpack.c.bf16 %v666, %v666
        %669 = vst [vmem:[#allocation2 + $0x60] sm:$0xf] %v667
        %670 = vst [vmem:[#allocation2 + $0x64] sm:$0xf] %v668
        %v671 = vmul.f32 %v665, %v229
        %v672 = vmul.f32 %v666, %v230
        %v673 = vpack.c.bf16 %v671, %v671
        %v674 = vpack.c.bf16 %v672, %v672
        %675 = vst [vmem:[#allocation2 + $0x140] sm:$0xf] %v673
        %676 = vst [vmem:[#allocation2 + $0x144] sm:$0xf] %v674
        %v677 = vmul.f32 %v671, %v229
        %v678 = vmul.f32 %v672, %v230
        %v679 = vpack.c.bf16 %v677, %v677
        %v680 = vpack.c.bf16 %v678, %v678
        %681 = vst [vmem:[#allocation2 + $0x328] sm:$0xf] %v679
        %682 = vst [vmem:[#allocation2 + $0x32c] sm:$0xf] %v680
        %v683 = vmul.f32 %v671, %v231
        %v684 = vmul.f32 %v672, %v232
        %v685 = vpack.c.bf16 %v683, %v683
        %v686 = vpack.c.bf16 %v684, %v684
        %687 = vst [vmem:[#allocation2 + $0x330] sm:$0xf] %v685
        %688 = vst [vmem:[#allocation2 + $0x334] sm:$0xf] %v686
        %v689 = vmul.f32 %v671, %v233
        %v690 = vmul.f32 %v672, %v234
        %v691 = vpack.c.bf16 %v689, %v689
        %v692 = vpack.c.bf16 %v690, %v690
        %693 = vst [vmem:[#allocation2 + $0x338] sm:$0xf] %v691
        %694 = vst [vmem:[#allocation2 + $0x33c] sm:$0xf] %v692
        %v695 = vmul.f32 %v665, %v231
        %v696 = vmul.f32 %v666, %v232
        %v697 = vpack.c.bf16 %v695, %v695
        %v698 = vpack.c.bf16 %v696, %v696
        %699 = vst [vmem:[#allocation2 + $0x148] sm:$0xf] %v697
        %700 = vst [vmem:[#allocation2 + $0x14c] sm:$0xf] %v698
        %v701 = vmul.f32 %v695, %v231
        %v702 = vmul.f32 %v696, %v232
        %v703 = vpack.c.bf16 %v701, %v701
        %v704 = vpack.c.bf16 %v702, %v702
        %705 = vst [vmem:[#allocation2 + $0x340] sm:$0xf] %v703
        %706 = vst [vmem:[#allocation2 + $0x344] sm:$0xf] %v704
        %v707 = vmul.f32 %v695, %v233
        %v708 = vmul.f32 %v696, %v234
        %v709 = vpack.c.bf16 %v707, %v707
        %v710 = vpack.c.bf16 %v708, %v708
        %711 = vst [vmem:[#allocation2 + $0x348] sm:$0xf] %v709
        %712 = vst [vmem:[#allocation2 + $0x34c] sm:$0xf] %v710
        %v713 = vmul.f32 %v665, %v233
        %v714 = vmul.f32 %v666, %v234
        %v715 = vpack.c.bf16 %v713, %v713
        %v716 = vpack.c.bf16 %v714, %v714
        %717 = vst [vmem:[#allocation2 + $0x150] sm:$0xf] %v715
        %718 = vst [vmem:[#allocation2 + $0x154] sm:$0xf] %v716
        %v719 = vmul.f32 %v713, %v233
        %v720 = vmul.f32 %v714, %v234
        %v721 = vpack.c.bf16 %v719, %v719
        %v722 = vpack.c.bf16 %v720, %v720
        %723 = vst [vmem:[#allocation2 + $0x350] sm:$0xf] %v721
        %724 = vst [vmem:[#allocation2 + $0x354] sm:$0xf] %v722
        %v725 = vmul.f32 %v227, %v231
        %v726 = vmul.f32 %v228, %v232
        %v727 = vpack.c.bf16 %v725, %v725
        %v728 = vpack.c.bf16 %v726, %v726
        %729 = vst [vmem:[#allocation2 + $0x68] sm:$0xf] %v727
        %730 = vst [vmem:[#allocation2 + $0x6c] sm:$0xf] %v728
        %v731 = vmul.f32 %v725, %v231
        %v732 = vmul.f32 %v726, %v232
        %v733 = vpack.c.bf16 %v731, %v731
        %v734 = vpack.c.bf16 %v732, %v732
        %735 = vst [vmem:[#allocation2 + $0x158] sm:$0xf] %v733
        %736 = vst [vmem:[#allocation2 + $0x15c] sm:$0xf] %v734
        %v737 = vmul.f32 %v731, %v231
        %v738 = vmul.f32 %v732, %v232
        %v739 = vpack.c.bf16 %v737, %v737
        %v740 = vpack.c.bf16 %v738, %v738
        %741 = vst [vmem:[#allocation2 + $0x358] sm:$0xf] %v739
        %742 = vst [vmem:[#allocation2 + $0x35c] sm:$0xf] %v740
        %v743 = vmul.f32 %v731, %v233
        %v744 = vmul.f32 %v732, %v234
        %v745 = vpack.c.bf16 %v743, %v743
        %v746 = vpack.c.bf16 %v744, %v744
        %747 = vst [vmem:[#allocation2 + $0x360] sm:$0xf] %v745
        %748 = vst [vmem:[#allocation2 + $0x364] sm:$0xf] %v746
        %v749 = vmul.f32 %v725, %v233
        %v750 = vmul.f32 %v726, %v234
        %v751 = vpack.c.bf16 %v749, %v749
        %v752 = vpack.c.bf16 %v750, %v750
        %753 = vst [vmem:[#allocation2 + $0x160] sm:$0xf] %v751
        %754 = vst [vmem:[#allocation2 + $0x164] sm:$0xf] %v752
        %v755 = vmul.f32 %v749, %v233
        %v756 = vmul.f32 %v750, %v234
        %v757 = vpack.c.bf16 %v755, %v755
        %v758 = vpack.c.bf16 %v756, %v756
        %759 = vst [vmem:[#allocation2 + $0x368] sm:$0xf] %v757
        %760 = vst [vmem:[#allocation2 + $0x36c] sm:$0xf] %v758
        %v761 = vmul.f32 %v227, %v233
        %v762 = vmul.f32 %v228, %v234
        %v763 = vpack.c.bf16 %v761, %v761
        %v764 = vpack.c.bf16 %v762, %v762
        %765 = vst [vmem:[#allocation2 + $0x70] sm:$0xf] %v763
        %766 = vst [vmem:[#allocation2 + $0x74] sm:$0xf] %v764
        %v767 = vmul.f32 %v761, %v233
        %v768 = vmul.f32 %v762, %v234
        %v769 = vpack.c.bf16 %v767, %v767
        %v770 = vpack.c.bf16 %v768, %v768
        %771 = vst [vmem:[#allocation2 + $0x168] sm:$0xf] %v769
        %772 = vst [vmem:[#allocation2 + $0x16c] sm:$0xf] %v770
        %v773 = vmul.f32 %v767, %v233
        %v774 = vmul.f32 %v768, %v234
        %v775 = vpack.c.bf16 %v773, %v773
        %v776 = vpack.c.bf16 %v774, %v774
        %777 = vst [vmem:[#allocation2 + $0x370] sm:$0xf] %v775
        %778 = vst [vmem:[#allocation2 + $0x374] sm:$0xf] %v776
        %v779 = vpack.c.bf16 %v229, %v229
        %v780 = vpack.c.bf16 %v230, %v230
        %781 = vst [vmem:[#allocation2 + $0x18] sm:$0xf] %v779
        %782 = vst [vmem:[#allocation2 + $0x1c] sm:$0xf] %v780
        %v783 = vmul.f32 %v229, %v229
        %v784 = vmul.f32 %v230, %v230
        %v785 = vpack.c.bf16 %v783, %v783
        %v786 = vpack.c.bf16 %v784, %v784
        %787 = vst [vmem:[#allocation2 + $0x78] sm:$0xf] %v785
        %788 = vst [vmem:[#allocation2 + $0x7c] sm:$0xf] %v786
        %v789 = vmul.f32 %v783, %v229
        %v790 = vmul.f32 %v784, %v230
        %v791 = vpack.c.bf16 %v789, %v789
        %v792 = vpack.c.bf16 %v790, %v790
        %793 = vst [vmem:[#allocation2 + $0x170] sm:$0xf] %v791
        %794 = vst [vmem:[#allocation2 + $0x174] sm:$0xf] %v792
        %v795 = vmul.f32 %v789, %v229
        %v796 = vmul.f32 %v790, %v230
        %v797 = vpack.c.bf16 %v795, %v795
        %v798 = vpack.c.bf16 %v796, %v796
        %799 = vst [vmem:[#allocation2 + $0x378] sm:$0xf] %v797
        %800 = vst [vmem:[#allocation2 + $0x37c] sm:$0xf] %v798
        %v801 = vmul.f32 %v789, %v231
        %v802 = vmul.f32 %v790, %v232
        %v803 = vpack.c.bf16 %v801, %v801
        %v804 = vpack.c.bf16 %v802, %v802
        %805 = vst [vmem:[#allocation2 + $0x380] sm:$0xf] %v803
        %806 = vst [vmem:[#allocation2 + $0x384] sm:$0xf] %v804
        %v807 = vmul.f32 %v789, %v233
        %v808 = vmul.f32 %v790, %v234
        %v809 = vpack.c.bf16 %v807, %v807
        %v810 = vpack.c.bf16 %v808, %v808
        %811 = vst [vmem:[#allocation2 + $0x388] sm:$0xf] %v809
        %812 = vst [vmem:[#allocation2 + $0x38c] sm:$0xf] %v810
        %v813 = vmul.f32 %v783, %v231
        %v814 = vmul.f32 %v784, %v232
        %v815 = vpack.c.bf16 %v813, %v813
        %v816 = vpack.c.bf16 %v814, %v814
        %817 = vst [vmem:[#allocation2 + $0x178] sm:$0xf] %v815
        %818 = vst [vmem:[#allocation2 + $0x17c] sm:$0xf] %v816
        %v819 = vmul.f32 %v813, %v231
        %v820 = vmul.f32 %v814, %v232
        %v821 = vpack.c.bf16 %v819, %v819
        %v822 = vpack.c.bf16 %v820, %v820
        %823 = vst [vmem:[#allocation2 + $0x390] sm:$0xf] %v821
        %824 = vst [vmem:[#allocation2 + $0x394] sm:$0xf] %v822
        %v825 = vmul.f32 %v813, %v233
        %v826 = vmul.f32 %v814, %v234
        %v827 = vpack.c.bf16 %v825, %v825
        %v828 = vpack.c.bf16 %v826, %v826
        %829 = vst [vmem:[#allocation2 + $0x398] sm:$0xf] %v827
        %830 = vst [vmem:[#allocation2 + $0x39c] sm:$0xf] %v828
        %v831 = vmul.f32 %v783, %v233
        %v832 = vmul.f32 %v784, %v234
        %v833 = vpack.c.bf16 %v831, %v831
        %v834 = vpack.c.bf16 %v832, %v832
        %835 = vst [vmem:[#allocation2 + $0x180] sm:$0xf] %v833
        %836 = vst [vmem:[#allocation2 + $0x184] sm:$0xf] %v834
        %v837 = vmul.f32 %v831, %v233
        %v838 = vmul.f32 %v832, %v234
        %v839 = vpack.c.bf16 %v837, %v837
        %v840 = vpack.c.bf16 %v838, %v838
        %841 = vst [vmem:[#allocation2 + $0x3a0] sm:$0xf] %v839
        %842 = vst [vmem:[#allocation2 + $0x3a4] sm:$0xf] %v840
        %v843 = vmul.f32 %v229, %v231
        %v844 = vmul.f32 %v230, %v232
        %v845 = vpack.c.bf16 %v843, %v843
        %v846 = vpack.c.bf16 %v844, %v844
        %847 = vst [vmem:[#allocation2 + $0x80] sm:$0xf] %v845
        %848 = vst [vmem:[#allocation2 + $0x84] sm:$0xf] %v846
        %v849 = vmul.f32 %v843, %v231
        %v850 = vmul.f32 %v844, %v232
        %v851 = vpack.c.bf16 %v849, %v849
        %v852 = vpack.c.bf16 %v850, %v850
        %853 = vst [vmem:[#allocation2 + $0x188] sm:$0xf] %v851
        %854 = vst [vmem:[#allocation2 + $0x18c] sm:$0xf] %v852
        %v855 = vmul.f32 %v849, %v231
        %v856 = vmul.f32 %v850, %v232
        %v857 = vpack.c.bf16 %v855, %v855
        %v858 = vpack.c.bf16 %v856, %v856
        %859 = vst [vmem:[#allocation2 + $0x3a8] sm:$0xf] %v857
        %860 = vst [vmem:[#allocation2 + $0x3ac] sm:$0xf] %v858
        %v861 = vmul.f32 %v849, %v233
        %v862 = vmul.f32 %v850, %v234
        %v863 = vpack.c.bf16 %v861, %v861
        %v864 = vpack.c.bf16 %v862, %v862
        %865 = vst [vmem:[#allocation2 + $0x3b0] sm:$0xf] %v863
        %866 = vst [vmem:[#allocation2 + $0x3b4] sm:$0xf] %v864
        %v867 = vmul.f32 %v843, %v233
        %v868 = vmul.f32 %v844, %v234
        %v869 = vpack.c.bf16 %v867, %v867
        %v870 = vpack.c.bf16 %v868, %v868
        %871 = vst [vmem:[#allocation2 + $0x190] sm:$0xf] %v869
        %872 = vst [vmem:[#allocation2 + $0x194] sm:$0xf] %v870
        %v873 = vmul.f32 %v867, %v233
        %v874 = vmul.f32 %v868, %v234
        %v875 = vpack.c.bf16 %v873, %v873
        %v876 = vpack.c.bf16 %v874, %v874
        %877 = vst [vmem:[#allocation2 + $0x3b8] sm:$0xf] %v875
        %878 = vst [vmem:[#allocation2 + $0x3bc] sm:$0xf] %v876
        %v879 = vmul.f32 %v229, %v233
        %v880 = vmul.f32 %v230, %v234
        %v881 = vpack.c.bf16 %v879, %v879
        %v882 = vpack.c.bf16 %v880, %v880
        %883 = vst [vmem:[#allocation2 + $0x88] sm:$0xf] %v881
        %884 = vst [vmem:[#allocation2 + $0x8c] sm:$0xf] %v882
        %v885 = vmul.f32 %v879, %v233
        %v886 = vmul.f32 %v880, %v234
        %v887 = vpack.c.bf16 %v885, %v885
        %v888 = vpack.c.bf16 %v886, %v886
        %889 = vst [vmem:[#allocation2 + $0x198] sm:$0xf] %v887
        %890 = vst [vmem:[#allocation2 + $0x19c] sm:$0xf] %v888
        %v891 = vmul.f32 %v885, %v233
        %v892 = vmul.f32 %v886, %v234
        %v893 = vpack.c.bf16 %v891, %v891
        %v894 = vpack.c.bf16 %v892, %v892
        %895 = vst [vmem:[#allocation2 + $0x3c0] sm:$0xf] %v893
        %896 = vst [vmem:[#allocation2 + $0x3c4] sm:$0xf] %v894
        %v897 = vpack.c.bf16 %v231, %v231
        %v898 = vpack.c.bf16 %v232, %v232
        %899 = vst [vmem:[#allocation2 + $0x20] sm:$0xf] %v897
        %900 = vst [vmem:[#allocation2 + $0x24] sm:$0xf] %v898
        %v901 = vmul.f32 %v231, %v231
        %v902 = vmul.f32 %v232, %v232
        %v903 = vpack.c.bf16 %v901, %v901
        %v904 = vpack.c.bf16 %v902, %v902
        %905 = vst [vmem:[#allocation2 + $0x90] sm:$0xf] %v903
        %906 = vst [vmem:[#allocation2 + $0x94] sm:$0xf] %v904
        %v907 = vmul.f32 %v901, %v231
        %v908 = vmul.f32 %v902, %v232
        %v909 = vpack.c.bf16 %v907, %v907
        %v910 = vpack.c.bf16 %v908, %v908
        %911 = vst [vmem:[#allocation2 + $0x1a0] sm:$0xf] %v909
        %912 = vst [vmem:[#allocation2 + $0x1a4] sm:$0xf] %v910
        %v913 = vmul.f32 %v907, %v231
        %v914 = vmul.f32 %v908, %v232
        %v915 = vpack.c.bf16 %v913, %v913
        %v916 = vpack.c.bf16 %v914, %v914
        %917 = vst [vmem:[#allocation2 + $0x3c8] sm:$0xf] %v915
        %918 = vst [vmem:[#allocation2 + $0x3cc] sm:$0xf] %v916
        %v919 = vmul.f32 %v907, %v233
        %v920 = vmul.f32 %v908, %v234
        %v921 = vpack.c.bf16 %v919, %v919
        %v922 = vpack.c.bf16 %v920, %v920
        %923 = vst [vmem:[#allocation2 + $0x3d0] sm:$0xf] %v921
        %924 = vst [vmem:[#allocation2 + $0x3d4] sm:$0xf] %v922
        %v925 = vmul.f32 %v901, %v233
        %v926 = vmul.f32 %v902, %v234
        %v927 = vpack.c.bf16 %v925, %v925
        %v928 = vpack.c.bf16 %v926, %v926
        %929 = vst [vmem:[#allocation2 + $0x1a8] sm:$0xf] %v927
        %930 = vst [vmem:[#allocation2 + $0x1ac] sm:$0xf] %v928
        %v931 = vmul.f32 %v925, %v233
        %v932 = vmul.f32 %v926, %v234
        %v933 = vpack.c.bf16 %v931, %v931
        %v934 = vpack.c.bf16 %v932, %v932
        %935 = vst [vmem:[#allocation2 + $0x3d8] sm:$0xf] %v933
        %936 = vst [vmem:[#allocation2 + $0x3dc] sm:$0xf] %v934
        %v937 = vmul.f32 %v231, %v233
        %v938 = vmul.f32 %v232, %v234
        %v939 = vpack.c.bf16 %v937, %v937
        %v940 = vpack.c.bf16 %v938, %v938
        %941 = vst [vmem:[#allocation2 + $0x98] sm:$0xf] %v939
        %942 = vst [vmem:[#allocation2 + $0x9c] sm:$0xf] %v940
        %v943 = vmul.f32 %v937, %v233
        %v944 = vmul.f32 %v938, %v234
        %v945 = vpack.c.bf16 %v943, %v943
        %v946 = vpack.c.bf16 %v944, %v944
        %947 = vst [vmem:[#allocation2 + $0x1b0] sm:$0xf] %v945
        %948 = vst [vmem:[#allocation2 + $0x1b4] sm:$0xf] %v946
        %v949 = vmul.f32 %v943, %v233
        %v950 = vmul.f32 %v944, %v234
        %v951 = vpack.c.bf16 %v949, %v949
        %v952 = vpack.c.bf16 %v950, %v950
        %953 = vst [vmem:[#allocation2 + $0x3e0] sm:$0xf] %v951
        %954 = vst [vmem:[#allocation2 + $0x3e4] sm:$0xf] %v952
        %v955 = vpack.c.bf16 %v233, %v233
        %v956 = vpack.c.bf16 %v234, %v234
        %957 = vst [vmem:[#allocation2 + $0x28] sm:$0xf] %v955
        %958 = vst [vmem:[#allocation2 + $0x2c] sm:$0xf] %v956
        %v959 = vmul.f32 %v233, %v233
        %v960 = vmul.f32 %v234, %v234
        %v961 = vpack.c.bf16 %v959, %v959
        %v962 = vpack.c.bf16 %v960, %v960
        %963 = vst [vmem:[#allocation2 + $0xa0] sm:$0xf] %v961
        %964 = vst [vmem:[#allocation2 + $0xa4] sm:$0xf] %v962
        %v965 = vmul.f32 %v959, %v233
        %v966 = vmul.f32 %v960, %v234
        %v967 = vpack.c.bf16 %v965, %v965
        %v968 = vpack.c.bf16 %v966, %v966
        %969 = vst [vmem:[#allocation2 + $0x1b8] sm:$0xf] %v967
        %970 = vst [vmem:[#allocation2 + $0x1bc] sm:$0xf] %v968
        %v971 = vmul.f32 %v965, %v233
        %v972 = vmul.f32 %v966, %v234
        %v973 = vpack.c.bf16 %v971, %v971
        %v974 = vpack.c.bf16 %v972, %v972
        %975 = vst [vmem:[#allocation2 + $0x3e8] sm:$0xf] %v973
        %976 = vst [vmem:[#allocation2 + $0x3ec] sm:$0xf] %v974
        %v977 = vld [vmem:[%s186] sm:$0xff]
        %v978 = vld [vmem:[%s186 + $0x8] sm:$0xff]
        %v979 = vld [vmem:[%s186 + $0x10] sm:$0xff]
        %v980 = vld [vmem:[%s186 + $0x18] sm:$0xff]
        %v981 = vld [vmem:[%s186 + $0x20] sm:$0xff]
        %v982 = vld [vmem:[%s186 + $0x28] sm:$0xff]
        %v983 = vld [vmem:[%s186 + $0x30] sm:$0xff]
        %v984 = vld [vmem:[%s186 + $0x38] sm:$0xff]
        %v985 = vld [vmem:[%s186 + $0x40] sm:$0xff]
        %v986 = vld [vmem:[%s186 + $0x48] sm:$0xff]
        %v987 = vld [vmem:[%s186 + $0x50] sm:$0xff]
        %v988 = vld [vmem:[%s186 + $0x58] sm:$0xff]
        %v989 = vld [vmem:[%s186 + $0x60] sm:$0xff]
        %v990 = vld [vmem:[%s186 + $0x68] sm:$0xff]
        %v991 = vld [vmem:[%s186 + $0x70] sm:$0xff]
        %v992 = vld [vmem:[%s186 + $0x78] sm:$0xff]
        %v993 = vld [vmem:[%s186 + $0x80] sm:$0xff]
        %v994 = vld [vmem:[%s186 + $0x88] sm:$0xff]
        %v995 = vld [vmem:[%s186 + $0x90] sm:$0xff]
        %v996 = vld [vmem:[%s186 + $0x98] sm:$0xff]
        %v997 = vld [vmem:[%s186 + $0xa0] sm:$0xff]
        %v998 = vld [vmem:[%s186 + $0xa8] sm:$0xff]
        %v999 = vld [vmem:[%s186 + $0xb0] sm:$0xff]
        %v1000 = vld [vmem:[%s186 + $0xb8] sm:$0xff]
        %v1001 = vld [vmem:[%s186 + $0xc0] sm:$0xff]
        %v1002 = vld [vmem:[%s186 + $0xc8] sm:$0xff]
        %v1003 = vld [vmem:[%s186 + $0xd0] sm:$0xff]
        %v1004 = vld [vmem:[%s186 + $0xd8] sm:$0xff]
        %v1005 = vld [vmem:[%s186 + $0xe0] sm:$0xff]
        %v1006 = vld [vmem:[%s186 + $0xe8] sm:$0xff]
        %v1007 = vld [vmem:[%s186 + $0xf0] sm:$0xff]
        %v1008 = vld [vmem:[%s186 + $0xf8] sm:$0xff]
        %v1009 = vld [vmem:[%s186 + $0x100] sm:$0xff]
        %v1010 = vld [vmem:[%s186 + $0x108] sm:$0xff]
        %v1011 = vld [vmem:[%s186 + $0x110] sm:$0xff]
        %v1012 = vld [vmem:[%s186 + $0x118] sm:$0xff]
        %v1013 = vld [vmem:[%s186 + $0x120] sm:$0xff]
        %v1014 = vld [vmem:[%s186 + $0x128] sm:$0xff]
        %v1015 = vld [vmem:[%s186 + $0x130] sm:$0xff]
        %v1016 = vld [vmem:[%s186 + $0x138] sm:$0xff]
        %v1017 = vld [vmem:[%s186 + $0x140] sm:$0xff]
        %v1018 = vld [vmem:[%s186 + $0x148] sm:$0xff]
        %v1019 = vld [vmem:[%s186 + $0x150] sm:$0xff]
        %v1020 = vld [vmem:[%s186 + $0x158] sm:$0xff]
        %v1021 = vld [vmem:[%s186 + $0x160] sm:$0xff]
        %v1022 = vld [vmem:[%s186 + $0x168] sm:$0xff]
        %v1023 = vld [vmem:[%s186 + $0x170] sm:$0xff]
        %v1024 = vld [vmem:[%s186 + $0x178] sm:$0xff]
        %v1025 = vld [vmem:[#allocation2] sm:$0xf]
        %v1026 = vld [vmem:[#allocation2 + $0x4] sm:$0xf]
        %v1027 = vld [vmem:[#allocation2 + $0x8] sm:$0xf]
        %v1028 = vld [vmem:[#allocation2 + $0xc] sm:$0xf]
        %v1029 = vld [vmem:[#allocation2 + $0x10] sm:$0xf]
        %v1030 = vld [vmem:[#allocation2 + $0x14] sm:$0xf]
        %v1031 = vld [vmem:[#allocation2 + $0x18] sm:$0xf]
        %v1032 = vld [vmem:[#allocation2 + $0x1c] sm:$0xf]
        %v1033 = vld [vmem:[#allocation2 + $0x20] sm:$0xf]
        %v1034 = vld [vmem:[#allocation2 + $0x24] sm:$0xf]
        %v1035 = vld [vmem:[#allocation2 + $0x28] sm:$0xf]
        %v1036 = vld [vmem:[#allocation2 + $0x2c] sm:$0xf]
        %v1037 = vld [vmem:[#allocation2 + $0x30] sm:$0xf]
        %v1038 = vld [vmem:[#allocation2 + $0x34] sm:$0xf]
        %v1039 = vld [vmem:[#allocation2 + $0x38] sm:$0xf]
        %v1040 = vld [vmem:[#allocation2 + $0x3c] sm:$0xf]
        %v1041 = vld [vmem:[#allocation2 + $0x40] sm:$0xf]
        %v1042 = vld [vmem:[#allocation2 + $0x44] sm:$0xf]
        %v1043 = vld [vmem:[#allocation2 + $0x48] sm:$0xf]
        %v1044 = vld [vmem:[#allocation2 + $0x4c] sm:$0xf]
        %v1045 = vld [vmem:[#allocation2 + $0x50] sm:$0xf]
        %v1046 = vld [vmem:[#allocation2 + $0x54] sm:$0xf]
        %v1047 = vld [vmem:[#allocation2 + $0x58] sm:$0xf]
        %v1048 = vld [vmem:[#allocation2 + $0x5c] sm:$0xf]
        %v1049 = vld [vmem:[#allocation2 + $0x60] sm:$0xf]
        %v1050 = vld [vmem:[#allocation2 + $0x64] sm:$0xf]
        %v1051 = vld [vmem:[#allocation2 + $0x68] sm:$0xf]
        %v1052 = vld [vmem:[#allocation2 + $0x6c] sm:$0xf]
        %v1053 = vld [vmem:[#allocation2 + $0x70] sm:$0xf]
        %v1054 = vld [vmem:[#allocation2 + $0x74] sm:$0xf]
        %v1055 = vld [vmem:[#allocation2 + $0x78] sm:$0xf]
        %v1056 = vld [vmem:[#allocation2 + $0x7c] sm:$0xf]
        %v1057 = vld [vmem:[#allocation2 + $0x80] sm:$0xf]
        %v1058 = vld [vmem:[#allocation2 + $0x84] sm:$0xf]
        %v1059 = vld [vmem:[#allocation2 + $0x88] sm:$0xf]
        %v1060 = vld [vmem:[#allocation2 + $0x8c] sm:$0xf]
        %v1061 = vld [vmem:[#allocation2 + $0x90] sm:$0xf]
        %v1062 = vld [vmem:[#allocation2 + $0x94] sm:$0xf]
        %v1063 = vld [vmem:[#allocation2 + $0x98] sm:$0xf]
        %v1064 = vld [vmem:[#allocation2 + $0x9c] sm:$0xf]
        %v1065 = vld [vmem:[#allocation2 + $0xa0] sm:$0xf]
        %v1066 = vld [vmem:[#allocation2 + $0xa4] sm:$0xf]
        %v1067 = vld [vmem:[#allocation2 + $0xa8] sm:$0xf]
        %v1068 = vld [vmem:[#allocation2 + $0xac] sm:$0xf]
        %v1069 = vld [vmem:[#allocation2 + $0xb0] sm:$0xf]
        %v1070 = vld [vmem:[#allocation2 + $0xb4] sm:$0xf]
        %v1071 = vld [vmem:[#allocation2 + $0xb8] sm:$0xf]
        %v1072 = vld [vmem:[#allocation2 + $0xbc] sm:$0xf]
        %v1073 = vld [vmem:[#allocation2 + $0xc0] sm:$0xf]
        %v1074 = vld [vmem:[#allocation2 + $0xc4] sm:$0xf]
        %v1075 = vld [vmem:[#allocation2 + $0xc8] sm:$0xf]
        %v1076 = vld [vmem:[#allocation2 + $0xcc] sm:$0xf]
        %v1077 = vld [vmem:[#allocation2 + $0xd0] sm:$0xf]
        %v1078 = vld [vmem:[#allocation2 + $0xd4] sm:$0xf]
        %v1079 = vld [vmem:[#allocation2 + $0xd8] sm:$0xf]
        %v1080 = vld [vmem:[#allocation2 + $0xdc] sm:$0xf]
        %v1081 = vld [vmem:[#allocation2 + $0xe0] sm:$0xf]
        %v1082 = vld [vmem:[#allocation2 + $0xe4] sm:$0xf]
        %v1083 = vld [vmem:[#allocation2 + $0xe8] sm:$0xf]
        %v1084 = vld [vmem:[#allocation2 + $0xec] sm:$0xf]
        %v1085 = vld [vmem:[#allocation2 + $0xf0] sm:$0xf]
        %v1086 = vld [vmem:[#allocation2 + $0xf4] sm:$0xf]
        %v1087 = vld [vmem:[#allocation2 + $0xf8] sm:$0xf]
        %v1088 = vld [vmem:[#allocation2 + $0xfc] sm:$0xf]
        %v1089 = vld [vmem:[#allocation2 + $0x100] sm:$0xf]
        %v1090 = vld [vmem:[#allocation2 + $0x104] sm:$0xf]
        %v1091 = vld [vmem:[#allocation2 + $0x108] sm:$0xf]
        %v1092 = vld [vmem:[#allocation2 + $0x10c] sm:$0xf]
        %v1093 = vld [vmem:[#allocation2 + $0x110] sm:$0xf]
        %v1094 = vld [vmem:[#allocation2 + $0x114] sm:$0xf]
        %v1095 = vld [vmem:[#allocation2 + $0x118] sm:$0xf]
        %v1096 = vld [vmem:[#allocation2 + $0x11c] sm:$0xf]
        %v1097 = vld [vmem:[#allocation2 + $0x120] sm:$0xf]
        %v1098 = vld [vmem:[#allocation2 + $0x124] sm:$0xf]
        %v1099 = vld [vmem:[#allocation2 + $0x128] sm:$0xf]
        %v1100 = vld [vmem:[#allocation2 + $0x12c] sm:$0xf]
        %v1101 = vld [vmem:[#allocation2 + $0x130] sm:$0xf]
        %v1102 = vld [vmem:[#allocation2 + $0x134] sm:$0xf]
        %v1103 = vld [vmem:[#allocation2 + $0x138] sm:$0xf]
        %v1104 = vld [vmem:[#allocation2 + $0x13c] sm:$0xf]
        %v1105 = vld [vmem:[#allocation2 + $0x140] sm:$0xf]
        %v1106 = vld [vmem:[#allocation2 + $0x144] sm:$0xf]
        %v1107 = vld [vmem:[#allocation2 + $0x148] sm:$0xf]
        %v1108 = vld [vmem:[#allocation2 + $0x14c] sm:$0xf]
        %v1109 = vld [vmem:[#allocation2 + $0x150] sm:$0xf]
        %v1110 = vld [vmem:[#allocation2 + $0x154] sm:$0xf]
        %v1111 = vld [vmem:[#allocation2 + $0x158] sm:$0xf]
        %v1112 = vld [vmem:[#allocation2 + $0x15c] sm:$0xf]
        %v1113 = vld [vmem:[#allocation2 + $0x160] sm:$0xf]
        %v1114 = vld [vmem:[#allocation2 + $0x164] sm:$0xf]
        %v1115 = vld [vmem:[#allocation2 + $0x168] sm:$0xf]
        %v1116 = vld [vmem:[#allocation2 + $0x16c] sm:$0xf]
        %v1117 = vld [vmem:[#allocation2 + $0x170] sm:$0xf]
        %v1118 = vld [vmem:[#allocation2 + $0x174] sm:$0xf]
        %v1119 = vld [vmem:[#allocation2 + $0x178] sm:$0xf]
        %v1120 = vld [vmem:[#allocation2 + $0x17c] sm:$0xf]
        %v1121 = vld [vmem:[#allocation2 + $0x180] sm:$0xf]
        %v1122 = vld [vmem:[#allocation2 + $0x184] sm:$0xf]
        %v1123 = vld [vmem:[#allocation2 + $0x188] sm:$0xf]
        %v1124 = vld [vmem:[#allocation2 + $0x18c] sm:$0xf]
        %v1125 = vld [vmem:[#allocation2 + $0x190] sm:$0xf]
        %v1126 = vld [vmem:[#allocation2 + $0x194] sm:$0xf]
        %v1127 = vld [vmem:[#allocation2 + $0x198] sm:$0xf]
        %v1128 = vld [vmem:[#allocation2 + $0x19c] sm:$0xf]
        %v1129 = vld [vmem:[#allocation2 + $0x1a0] sm:$0xf]
        %v1130 = vld [vmem:[#allocation2 + $0x1a4] sm:$0xf]
        %v1131 = vld [vmem:[#allocation2 + $0x1a8] sm:$0xf]
        %v1132 = vld [vmem:[#allocation2 + $0x1ac] sm:$0xf]
        %v1133 = vld [vmem:[#allocation2 + $0x1b0] sm:$0xf]
        %v1134 = vld [vmem:[#allocation2 + $0x1b4] sm:$0xf]
        %v1135 = vld [vmem:[#allocation2 + $0x1b8] sm:$0xf]
        %v1136 = vld [vmem:[#allocation2 + $0x1bc] sm:$0xf]
        %v1137 = vld [vmem:[#allocation2 + $0x1c0] sm:$0xf]
        %v1138 = vld [vmem:[#allocation2 + $0x1c4] sm:$0xf]
        %v1139 = vld [vmem:[#allocation2 + $0x1c8] sm:$0xf]
        %v1140 = vld [vmem:[#allocation2 + $0x1cc] sm:$0xf]
        %v1141 = vld [vmem:[#allocation2 + $0x1d0] sm:$0xf]
        %v1142 = vld [vmem:[#allocation2 + $0x1d4] sm:$0xf]
        %v1143 = vld [vmem:[#allocation2 + $0x1d8] sm:$0xf]
        %v1144 = vld [vmem:[#allocation2 + $0x1dc] sm:$0xf]
        %v1145 = vld [vmem:[#allocation2 + $0x1e0] sm:$0xf]
        %v1146 = vld [vmem:[#allocation2 + $0x1e4] sm:$0xf]
        %v1147 = vld [vmem:[#allocation2 + $0x1e8] sm:$0xf]
        %v1148 = vld [vmem:[#allocation2 + $0x1ec] sm:$0xf]
        %v1149 = vld [vmem:[#allocation2 + $0x1f0] sm:$0xf]
        %v1150 = vld [vmem:[#allocation2 + $0x1f4] sm:$0xf]
        %v1151 = vld [vmem:[#allocation2 + $0x1f8] sm:$0xf]
        %v1152 = vld [vmem:[#allocation2 + $0x1fc] sm:$0xf]
        %v1153 = vld [vmem:[#allocation2 + $0x200] sm:$0xf]
        %v1154 = vld [vmem:[#allocation2 + $0x204] sm:$0xf]
        %v1155 = vld [vmem:[#allocation2 + $0x208] sm:$0xf]
        %v1156 = vld [vmem:[#allocation2 + $0x20c] sm:$0xf]
        %v1157 = vld [vmem:[#allocation2 + $0x210] sm:$0xf]
        %v1158 = vld [vmem:[#allocation2 + $0x214] sm:$0xf]
        %v1159 = vld [vmem:[#allocation2 + $0x218] sm:$0xf]
        %v1160 = vld [vmem:[#allocation2 + $0x21c] sm:$0xf]
        %v1161 = vld [vmem:[#allocation2 + $0x220] sm:$0xf]
        %v1162 = vld [vmem:[#allocation2 + $0x224] sm:$0xf]
        %v1163 = vld [vmem:[#allocation2 + $0x228] sm:$0xf]
        %v1164 = vld [vmem:[#allocation2 + $0x22c] sm:$0xf]
        %v1165 = vld [vmem:[#allocation2 + $0x230] sm:$0xf]
        %v1166 = vld [vmem:[#allocation2 + $0x234] sm:$0xf]
        %v1167 = vld [vmem:[#allocation2 + $0x238] sm:$0xf]
        %v1168 = vld [vmem:[#allocation2 + $0x23c] sm:$0xf]
        %v1169 = vld [vmem:[#allocation2 + $0x240] sm:$0xf]
        %v1170 = vld [vmem:[#allocation2 + $0x244] sm:$0xf]
        %v1171 = vld [vmem:[#allocation2 + $0x248] sm:$0xf]
        %v1172 = vld [vmem:[#allocation2 + $0x24c] sm:$0xf]
        %v1173 = vld [vmem:[#allocation2 + $0x250] sm:$0xf]
        %v1174 = vld [vmem:[#allocation2 + $0x254] sm:$0xf]
        %v1175 = vld [vmem:[#allocation2 + $0x258] sm:$0xf]
        %v1176 = vld [vmem:[#allocation2 + $0x25c] sm:$0xf]
        %v1177 = vld [vmem:[#allocation2 + $0x260] sm:$0xf]
        %v1178 = vld [vmem:[#allocation2 + $0x264] sm:$0xf]
        %v1179 = vld [vmem:[#allocation2 + $0x268] sm:$0xf]
        %v1180 = vld [vmem:[#allocation2 + $0x26c] sm:$0xf]
        %v1181 = vld [vmem:[#allocation2 + $0x270] sm:$0xf]
        %v1182 = vld [vmem:[#allocation2 + $0x274] sm:$0xf]
        %v1183 = vld [vmem:[#allocation2 + $0x278] sm:$0xf]
        %v1184 = vld [vmem:[#allocation2 + $0x27c] sm:$0xf]
        %v1185 = vld [vmem:[#allocation2 + $0x280] sm:$0xf]
        %v1186 = vld [vmem:[#allocation2 + $0x284] sm:$0xf]
        %v1187 = vld [vmem:[#allocation2 + $0x288] sm:$0xf]
        %v1188 = vld [vmem:[#allocation2 + $0x28c] sm:$0xf]
        %v1189 = vld [vmem:[#allocation2 + $0x290] sm:$0xf]
        %v1190 = vld [vmem:[#allocation2 + $0x294] sm:$0xf]
        %v1191 = vld [vmem:[#allocation2 + $0x298] sm:$0xf]
        %v1192 = vld [vmem:[#allocation2 + $0x29c] sm:$0xf]
        %v1193 = vld [vmem:[#allocation2 + $0x2a0] sm:$0xf]
        %v1194 = vld [vmem:[#allocation2 + $0x2a4] sm:$0xf]
        %v1195 = vld [vmem:[#allocation2 + $0x2a8] sm:$0xf]
        %v1196 = vld [vmem:[#allocation2 + $0x2ac] sm:$0xf]
        %v1197 = vld [vmem:[#allocation2 + $0x2b0] sm:$0xf]
        %v1198 = vld [vmem:[#allocation2 + $0x2b4] sm:$0xf]
        %v1199 = vld [vmem:[#allocation2 + $0x2b8] sm:$0xf]
        %v1200 = vld [vmem:[#allocation2 + $0x2bc] sm:$0xf]
        %v1201 = vld [vmem:[#allocation2 + $0x2c0] sm:$0xf]
        %v1202 = vld [vmem:[#allocation2 + $0x2c4] sm:$0xf]
        %v1203 = vld [vmem:[#allocation2 + $0x2c8] sm:$0xf]
        %v1204 = vld [vmem:[#allocation2 + $0x2cc] sm:$0xf]
        %v1205 = vld [vmem:[#allocation2 + $0x2d0] sm:$0xf]
        %v1206 = vld [vmem:[#allocation2 + $0x2d4] sm:$0xf]
        %v1207 = vld [vmem:[#allocation2 + $0x2d8] sm:$0xf]
        %v1208 = vld [vmem:[#allocation2 + $0x2dc] sm:$0xf]
        %v1209 = vld [vmem:[#allocation2 + $0x2e0] sm:$0xf]
        %v1210 = vld [vmem:[#allocation2 + $0x2e4] sm:$0xf]
        %v1211 = vld [vmem:[#allocation2 + $0x2e8] sm:$0xf]
        %v1212 = vld [vmem:[#allocation2 + $0x2ec] sm:$0xf]
        %v1213 = vld [vmem:[#allocation2 + $0x2f0] sm:$0xf]
        %v1214 = vld [vmem:[#allocation2 + $0x2f4] sm:$0xf]
        %v1215 = vld [vmem:[#allocation2 + $0x2f8] sm:$0xf]
        %v1216 = vld [vmem:[#allocation2 + $0x2fc] sm:$0xf]
        %v1217 = vld [vmem:[#allocation2 + $0x300] sm:$0xf]
        %v1218 = vld [vmem:[#allocation2 + $0x304] sm:$0xf]
        %v1219 = vld [vmem:[#allocation2 + $0x308] sm:$0xf]
        %v1220 = vld [vmem:[#allocation2 + $0x30c] sm:$0xf]
        %v1221 = vld [vmem:[#allocation2 + $0x310] sm:$0xf]
        %v1222 = vld [vmem:[#allocation2 + $0x314] sm:$0xf]
        %v1223 = vld [vmem:[#allocation2 + $0x318] sm:$0xf]
        %v1224 = vld [vmem:[#allocation2 + $0x31c] sm:$0xf]
        %v1225 = vld [vmem:[#allocation2 + $0x320] sm:$0xf]
        %v1226 = vld [vmem:[#allocation2 + $0x324] sm:$0xf]
        %v1227 = vld [vmem:[#allocation2 + $0x328] sm:$0xf]
        %v1228 = vld [vmem:[#allocation2 + $0x32c] sm:$0xf]
        %v1229 = vld [vmem:[#allocation2 + $0x330] sm:$0xf]
        %v1230 = vld [vmem:[#allocation2 + $0x334] sm:$0xf]
        %v1231 = vld [vmem:[#allocation2 + $0x338] sm:$0xf]
        %v1232 = vld [vmem:[#allocation2 + $0x33c] sm:$0xf]
        %v1233 = vld [vmem:[#allocation2 + $0x340] sm:$0xf]
        %v1234 = vld [vmem:[#allocation2 + $0x344] sm:$0xf]
        %v1235 = vld [vmem:[#allocation2 + $0x348] sm:$0xf]
        %v1236 = vld [vmem:[#allocation2 + $0x34c] sm:$0xf]
        %v1237 = vld [vmem:[#allocation2 + $0x350] sm:$0xf]
        %v1238 = vld [vmem:[#allocation2 + $0x354] sm:$0xf]
        %v1239 = vld [vmem:[#allocation2 + $0x358] sm:$0xf]
        %v1240 = vld [vmem:[#allocation2 + $0x35c] sm:$0xf]
        %v1241 = vld [vmem:[#allocation2 + $0x360] sm:$0xf]
        %v1242 = vld [vmem:[#allocation2 + $0x364] sm:$0xf]
        %v1243 = vld [vmem:[#allocation2 + $0x368] sm:$0xf]
        %v1244 = vld [vmem:[#allocation2 + $0x36c] sm:$0xf]
        %v1245 = vld [vmem:[#allocation2 + $0x370] sm:$0xf]
        %v1246 = vld [vmem:[#allocation2 + $0x374] sm:$0xf]
        %v1247 = vld [vmem:[#allocation2 + $0x378] sm:$0xf]
        %v1248 = vld [vmem:[#allocation2 + $0x37c] sm:$0xf]
        %v1249 = vld [vmem:[#allocation2 + $0x380] sm:$0xf]
        %v1250 = vld [vmem:[#allocation2 + $0x384] sm:$0xf]
        %v1251 = vld [vmem:[#allocation2 + $0x388] sm:$0xf]
        %v1252 = vld [vmem:[#allocation2 + $0x38c] sm:$0xf]
        %v1253 = vld [vmem:[#allocation2 + $0x390] sm:$0xf]
        %v1254 = vld [vmem:[#allocation2 + $0x394] sm:$0xf]
        %v1255 = vld [vmem:[#allocation2 + $0x398] sm:$0xf]
        %v1256 = vld [vmem:[#allocation2 + $0x39c] sm:$0xf]
        %v1257 = vld [vmem:[#allocation2 + $0x3a0] sm:$0xf]
        %v1258 = vld [vmem:[#allocation2 + $0x3a4] sm:$0xf]
        %v1259 = vld [vmem:[#allocation2 + $0x3a8] sm:$0xf]
        %v1260 = vld [vmem:[#allocation2 + $0x3ac] sm:$0xf]
        %v1261 = vld [vmem:[#allocation2 + $0x3b0] sm:$0xf]
        %v1262 = vld [vmem:[#allocation2 + $0x3b4] sm:$0xf]
        %v1263 = vld [vmem:[#allocation2 + $0x3b8] sm:$0xf]
        %v1264 = vld [vmem:[#allocation2 + $0x3bc] sm:$0xf]
        %v1265 = vld [vmem:[#allocation2 + $0x3c0] sm:$0xf]
        %v1266 = vld [vmem:[#allocation2 + $0x3c4] sm:$0xf]
        %v1267 = vld [vmem:[#allocation2 + $0x3c8] sm:$0xf]
        %v1268 = vld [vmem:[#allocation2 + $0x3cc] sm:$0xf]
        %v1269 = vld [vmem:[#allocation2 + $0x3d0] sm:$0xf]
        %v1270 = vld [vmem:[#allocation2 + $0x3d4] sm:$0xf]
        %v1271 = vld [vmem:[#allocation2 + $0x3d8] sm:$0xf]
        %v1272 = vld [vmem:[#allocation2 + $0x3dc] sm:$0xf]
        %v1273 = vld [vmem:[#allocation2 + $0x3e0] sm:$0xf]
        %v1274 = vld [vmem:[#allocation2 + $0x3e4] sm:$0xf]
        %v1275 = vld [vmem:[#allocation2 + $0x3e8] sm:$0xf]
        %v1276 = vld [vmem:[#allocation2 + $0x3ec] sm:$0xf]
        %v1325 = vunpack.c.l.b16 %v977
        %v1326 = vunpack.c.h.b16 %v977
        %v1327 = vunpack.c.l.b16 %v978
        %v1328 = vunpack.c.h.b16 %v978
        %v1329 = vunpack.c.l.b16 %v979
        %v1330 = vunpack.c.h.b16 %v979
        %v1331 = vunpack.c.l.b16 %v980
        %v1332 = vunpack.c.h.b16 %v980
        %v1333 = vunpack.c.l.b16 %v981
        %v1334 = vunpack.c.h.b16 %v981
        %v1335 = vunpack.c.l.b16 %v982
        %v1336 = vunpack.c.h.b16 %v982
        %v1337 = vunpack.c.l.b16 %v983
        %v1338 = vunpack.c.h.b16 %v983
        %v1339 = vunpack.c.l.b16 %v984
        %v1340 = vunpack.c.h.b16 %v984
        %v1341 = vunpack.c.l.b16 %v985
        %v1342 = vunpack.c.h.b16 %v985
        %v1343 = vunpack.c.l.b16 %v986
        %v1344 = vunpack.c.h.b16 %v986
        %v1345 = vunpack.c.l.b16 %v987
        %v1346 = vunpack.c.h.b16 %v987
        %v1347 = vunpack.c.l.b16 %v988
        %v1348 = vunpack.c.h.b16 %v988
        %v1349 = vunpack.c.l.b16 %v989
        %v1350 = vunpack.c.h.b16 %v989
        %v1351 = vunpack.c.l.b16 %v990
        %v1352 = vunpack.c.h.b16 %v990
        %v1353 = vunpack.c.l.b16 %v991
        %v1354 = vunpack.c.h.b16 %v991
        %v1355 = vunpack.c.l.b16 %v992
        %v1356 = vunpack.c.h.b16 %v992
        %v1357 = vunpack.c.l.b16 %v993
        %v1358 = vunpack.c.h.b16 %v993
        %v1359 = vunpack.c.l.b16 %v994
        %v1360 = vunpack.c.h.b16 %v994
        %v1361 = vunpack.c.l.b16 %v995
        %v1362 = vunpack.c.h.b16 %v995
        %v1363 = vunpack.c.l.b16 %v996
        %v1364 = vunpack.c.h.b16 %v996
        %v1365 = vunpack.c.l.b16 %v997
        %v1366 = vunpack.c.h.b16 %v997
        %v1367 = vunpack.c.l.b16 %v998
        %v1368 = vunpack.c.h.b16 %v998
        %v1369 = vunpack.c.l.b16 %v999
        %v1370 = vunpack.c.h.b16 %v999
        %v1371 = vunpack.c.l.b16 %v1000
        %v1372 = vunpack.c.h.b16 %v1000
        %v1373 = vunpack.c.l.b16 %v1001
        %v1374 = vunpack.c.h.b16 %v1001
        %v1375 = vunpack.c.l.b16 %v1002
        %v1376 = vunpack.c.h.b16 %v1002
        %v1377 = vunpack.c.l.b16 %v1003
        %v1378 = vunpack.c.h.b16 %v1003
        %v1379 = vunpack.c.l.b16 %v1004
        %v1380 = vunpack.c.h.b16 %v1004
        %v1381 = vunpack.c.l.b16 %v1005
        %v1382 = vunpack.c.h.b16 %v1005
        %v1383 = vunpack.c.l.b16 %v1006
        %v1384 = vunpack.c.h.b16 %v1006
        %v1385 = vunpack.c.l.b16 %v1007
        %v1386 = vunpack.c.h.b16 %v1007
        %v1387 = vunpack.c.l.b16 %v1008
        %v1388 = vunpack.c.h.b16 %v1008
        %v1389 = vunpack.c.l.b16 %v1009
        %v1390 = vunpack.c.h.b16 %v1009
        %v1391 = vunpack.c.l.b16 %v1010
        %v1392 = vunpack.c.h.b16 %v1010
        %v1393 = vunpack.c.l.b16 %v1011
        %v1394 = vunpack.c.h.b16 %v1011
        %v1395 = vunpack.c.l.b16 %v1012
        %v1396 = vunpack.c.h.b16 %v1012
        %v1397 = vunpack.c.l.b16 %v1013
        %v1398 = vunpack.c.h.b16 %v1013
        %v1399 = vunpack.c.l.b16 %v1014
        %v1400 = vunpack.c.h.b16 %v1014
        %v1401 = vunpack.c.l.b16 %v1015
        %v1402 = vunpack.c.h.b16 %v1015
        %v1403 = vunpack.c.l.b16 %v1016
        %v1404 = vunpack.c.h.b16 %v1016
        %v1405 = vunpack.c.l.b16 %v1017
        %v1406 = vunpack.c.h.b16 %v1017
        %v1407 = vunpack.c.l.b16 %v1018
        %v1408 = vunpack.c.h.b16 %v1018
        %v1409 = vunpack.c.l.b16 %v1019
        %v1410 = vunpack.c.h.b16 %v1019
        %v1411 = vunpack.c.l.b16 %v1020
        %v1412 = vunpack.c.h.b16 %v1020
        %v1413 = vunpack.c.l.b16 %v1021
        %v1414 = vunpack.c.h.b16 %v1021
        %v1415 = vunpack.c.l.b16 %v1022
        %v1416 = vunpack.c.h.b16 %v1022
        %v1417 = vunpack.c.l.b16 %v1023
        %v1418 = vunpack.c.h.b16 %v1023
        %v1419 = vunpack.c.l.b16 %v1024
        %v1420 = vunpack.c.h.b16 %v1024
        %v1421 = vpack.c.b16 %v1341, %v1325
        %v1422 = vpack.c.b16 %v1342, %v1326
        %v1423 = vpack.c.b16 %v1343, %v1327
        %v1424 = vpack.c.b16 %v1344, %v1328
        %v1425 = vpack.c.b16 %v1345, %v1329
        %v1426 = vpack.c.b16 %v1346, %v1330
        %v1427 = vpack.c.b16 %v1347, %v1331
        %v1428 = vpack.c.b16 %v1348, %v1332
        %v1429 = vpack.c.b16 %v1349, %v1333
        %v1430 = vpack.c.b16 %v1350, %v1334
        %v1431 = vpack.c.b16 %v1351, %v1335
        %v1432 = vpack.c.b16 %v1352, %v1336
        %v1433 = vpack.c.b16 %v1353, %v1337
        %v1434 = vpack.c.b16 %v1354, %v1338
        %v1435 = vpack.c.b16 %v1355, %v1339
        %v1436 = vpack.c.b16 %v1356, %v1340
        %v1437 = vpack.c.b16 %v1373, %v1357
        %v1438 = vpack.c.b16 %v1374, %v1358
        %v1439 = vpack.c.b16 %v1375, %v1359
        %v1440 = vpack.c.b16 %v1376, %v1360
        %v1441 = vpack.c.b16 %v1377, %v1361
        %v1442 = vpack.c.b16 %v1378, %v1362
        %v1443 = vpack.c.b16 %v1379, %v1363
        %v1444 = vpack.c.b16 %v1380, %v1364
        %v1445 = vpack.c.b16 %v1381, %v1365
        %v1446 = vpack.c.b16 %v1382, %v1366
        %v1447 = vpack.c.b16 %v1383, %v1367
        %v1448 = vpack.c.b16 %v1384, %v1368
        %v1449 = vpack.c.b16 %v1385, %v1369
        %v1450 = vpack.c.b16 %v1386, %v1370
        %v1451 = vpack.c.b16 %v1387, %v1371
        %v1452 = vpack.c.b16 %v1388, %v1372
        %v1453 = vpack.c.b16 %v1405, %v1389
        %v1454 = vpack.c.b16 %v1406, %v1390
        %v1455 = vpack.c.b16 %v1407, %v1391
        %v1456 = vpack.c.b16 %v1408, %v1392
        %v1457 = vpack.c.b16 %v1409, %v1393
        %v1458 = vpack.c.b16 %v1410, %v1394
        %v1459 = vpack.c.b16 %v1411, %v1395
        %v1460 = vpack.c.b16 %v1412, %v1396
        %v1461 = vpack.c.b16 %v1413, %v1397
        %v1462 = vpack.c.b16 %v1414, %v1398
        %v1463 = vpack.c.b16 %v1415, %v1399
        %v1464 = vpack.c.b16 %v1416, %v1400
        %v1465 = vpack.c.b16 %v1417, %v1401
        %v1466 = vpack.c.b16 %v1418, %v1402
        %v1467 = vpack.c.b16 %v1419, %v1403
        %v1468 = vpack.c.b16 %v1420, %v1404
        %v1766 = vunpack.c.l.b16 %v1025
        %v1767 = vunpack.c.l.b16 %v1026
        %v1768 = vunpack.c.l.b16 %v1027
        %v1769 = vunpack.c.l.b16 %v1028
        %v1770 = vunpack.c.l.b16 %v1029
        %v1771 = vunpack.c.l.b16 %v1030
        %v1772 = vunpack.c.l.b16 %v1031
        %v1773 = vunpack.c.l.b16 %v1032
        %v1774 = vunpack.c.l.b16 %v1033
        %v1775 = vunpack.c.l.b16 %v1034
        %v1776 = vunpack.c.l.b16 %v1035
        %v1777 = vunpack.c.l.b16 %v1036
        %v1778 = vunpack.c.l.b16 %v1037
        %v1779 = vunpack.c.l.b16 %v1038
        %v1780 = vunpack.c.l.b16 %v1039
        %v1781 = vunpack.c.l.b16 %v1040
        %v1782 = vunpack.c.l.b16 %v1041
        %v1783 = vunpack.c.l.b16 %v1042
        %v1784 = vunpack.c.l.b16 %v1043
        %v1785 = vunpack.c.l.b16 %v1044
        %v1786 = vunpack.c.l.b16 %v1045
        %v1787 = vunpack.c.l.b16 %v1046
        %v1788 = vunpack.c.l.b16 %v1047
        %v1789 = vunpack.c.l.b16 %v1048
        %v1790 = vunpack.c.l.b16 %v1049
        %v1791 = vunpack.c.l.b16 %v1050
        %v1792 = vunpack.c.l.b16 %v1051
        %v1793 = vunpack.c.l.b16 %v1052
        %v1794 = vunpack.c.l.b16 %v1053
        %v1795 = vunpack.c.l.b16 %v1054
        %v1796 = vunpack.c.l.b16 %v1055
        %v1797 = vunpack.c.l.b16 %v1056
        %v1798 = vunpack.c.l.b16 %v1057
        %v1799 = vunpack.c.l.b16 %v1058
        %v1800 = vunpack.c.l.b16 %v1059
        %v1801 = vunpack.c.l.b16 %v1060
        %v1802 = vunpack.c.l.b16 %v1061
        %v1803 = vunpack.c.l.b16 %v1062
        %v1804 = vunpack.c.l.b16 %v1063
        %v1805 = vunpack.c.l.b16 %v1064
        %v1806 = vunpack.c.l.b16 %v1065
        %v1807 = vunpack.c.l.b16 %v1066
        %v1808 = vunpack.c.l.b16 %v1067
        %v1809 = vunpack.c.l.b16 %v1068
        %v1810 = vunpack.c.l.b16 %v1069
        %v1811 = vunpack.c.l.b16 %v1070
        %v1812 = vunpack.c.l.b16 %v1071
        %v1813 = vunpack.c.l.b16 %v1072
        %v1814 = vunpack.c.l.b16 %v1073
        %v1815 = vunpack.c.l.b16 %v1074
        %v1816 = vunpack.c.l.b16 %v1075
        %v1817 = vunpack.c.l.b16 %v1076
        %v1818 = vunpack.c.l.b16 %v1077
        %v1819 = vunpack.c.l.b16 %v1078
        %v1820 = vunpack.c.l.b16 %v1079
        %v1821 = vunpack.c.l.b16 %v1080
        %v1822 = vunpack.c.l.b16 %v1081
        %v1823 = vunpack.c.l.b16 %v1082
        %v1824 = vunpack.c.l.b16 %v1083
        %v1825 = vunpack.c.l.b16 %v1084
        %v1826 = vunpack.c.l.b16 %v1085
        %v1827 = vunpack.c.l.b16 %v1086
        %v1828 = vunpack.c.l.b16 %v1087
        %v1829 = vunpack.c.l.b16 %v1088
        %v1830 = vunpack.c.l.b16 %v1089
        %v1831 = vunpack.c.l.b16 %v1090
        %v1832 = vunpack.c.l.b16 %v1091
        %v1833 = vunpack.c.l.b16 %v1092
        %v1834 = vunpack.c.l.b16 %v1093
        %v1835 = vunpack.c.l.b16 %v1094
        %v1836 = vunpack.c.l.b16 %v1095
        %v1837 = vunpack.c.l.b16 %v1096
        %v1838 = vunpack.c.l.b16 %v1097
        %v1839 = vunpack.c.l.b16 %v1098
        %v1840 = vunpack.c.l.b16 %v1099
        %v1841 = vunpack.c.l.b16 %v1100
        %v1842 = vunpack.c.l.b16 %v1101
        %v1843 = vunpack.c.l.b16 %v1102
        %v1844 = vunpack.c.l.b16 %v1103
        %v1845 = vunpack.c.l.b16 %v1104
        %v1846 = vunpack.c.l.b16 %v1105
        %v1847 = vunpack.c.l.b16 %v1106
        %v1848 = vunpack.c.l.b16 %v1107
        %v1849 = vunpack.c.l.b16 %v1108
        %v1850 = vunpack.c.l.b16 %v1109
        %v1851 = vunpack.c.l.b16 %v1110
        %v1852 = vunpack.c.l.b16 %v1111
        %v1853 = vunpack.c.l.b16 %v1112
        %v1854 = vunpack.c.l.b16 %v1113
        %v1855 = vunpack.c.l.b16 %v1114
        %v1856 = vunpack.c.l.b16 %v1115
        %v1857 = vunpack.c.l.b16 %v1116
        %v1858 = vunpack.c.l.b16 %v1117
        %v1859 = vunpack.c.l.b16 %v1118
        %v1860 = vunpack.c.l.b16 %v1119
        %v1861 = vunpack.c.l.b16 %v1120
        %v1862 = vunpack.c.l.b16 %v1121
        %v1863 = vunpack.c.l.b16 %v1122
        %v1864 = vunpack.c.l.b16 %v1123
        %v1865 = vunpack.c.l.b16 %v1124
        %v1866 = vunpack.c.l.b16 %v1125
        %v1867 = vunpack.c.l.b16 %v1126
        %v1868 = vunpack.c.l.b16 %v1127
        %v1869 = vunpack.c.l.b16 %v1128
        %v1870 = vunpack.c.l.b16 %v1129
        %v1871 = vunpack.c.l.b16 %v1130
        %v1872 = vunpack.c.l.b16 %v1131
        %v1873 = vunpack.c.l.b16 %v1132
        %v1874 = vunpack.c.l.b16 %v1133
        %v1875 = vunpack.c.l.b16 %v1134
        %v1876 = vunpack.c.l.b16 %v1135
        %v1877 = vunpack.c.l.b16 %v1136
        %v1878 = vunpack.c.l.b16 %v1137
        %v1879 = vunpack.c.l.b16 %v1138
        %v1880 = vunpack.c.l.b16 %v1139
        %v1881 = vunpack.c.l.b16 %v1140
        %v1882 = vunpack.c.l.b16 %v1141
        %v1883 = vunpack.c.l.b16 %v1142
        %v1884 = vunpack.c.l.b16 %v1143
        %v1885 = vunpack.c.l.b16 %v1144
        %v1886 = vunpack.c.l.b16 %v1145
        %v1887 = vunpack.c.l.b16 %v1146
        %v1888 = vunpack.c.l.b16 %v1147
        %v1889 = vunpack.c.l.b16 %v1148
        %v1890 = vunpack.c.l.b16 %v1149
        %v1891 = vunpack.c.l.b16 %v1150
        %v1892 = vunpack.c.l.b16 %v1151
        %v1893 = vunpack.c.l.b16 %v1152
        %v1894 = vunpack.c.l.b16 %v1153
        %v1895 = vunpack.c.l.b16 %v1154
        %v1896 = vunpack.c.l.b16 %v1155
        %v1897 = vunpack.c.l.b16 %v1156
        %v1898 = vunpack.c.l.b16 %v1157
        %v1899 = vunpack.c.l.b16 %v1158
        %v1900 = vunpack.c.l.b16 %v1159
        %v1901 = vunpack.c.l.b16 %v1160
        %v1902 = vunpack.c.l.b16 %v1161
        %v1903 = vunpack.c.l.b16 %v1162
        %v1904 = vunpack.c.l.b16 %v1163
        %v1905 = vunpack.c.l.b16 %v1164
        %v1906 = vunpack.c.l.b16 %v1165
        %v1907 = vunpack.c.l.b16 %v1166
        %v1908 = vunpack.c.l.b16 %v1167
        %v1909 = vunpack.c.l.b16 %v1168
        %v1910 = vunpack.c.l.b16 %v1169
        %v1911 = vunpack.c.l.b16 %v1170
        %v1912 = vunpack.c.l.b16 %v1171
        %v1913 = vunpack.c.l.b16 %v1172
        %v1914 = vunpack.c.l.b16 %v1173
        %v1915 = vunpack.c.l.b16 %v1174
        %v1916 = vunpack.c.l.b16 %v1175
        %v1917 = vunpack.c.l.b16 %v1176
        %v1918 = vunpack.c.l.b16 %v1177
        %v1919 = vunpack.c.l.b16 %v1178
        %v1920 = vunpack.c.l.b16 %v1179
        %v1921 = vunpack.c.l.b16 %v1180
        %v1922 = vunpack.c.l.b16 %v1181
        %v1923 = vunpack.c.l.b16 %v1182
        %v1924 = vunpack.c.l.b16 %v1183
        %v1925 = vunpack.c.l.b16 %v1184
        %v1926 = vunpack.c.l.b16 %v1185
        %v1927 = vunpack.c.l.b16 %v1186
        %v1928 = vunpack.c.l.b16 %v1187
        %v1929 = vunpack.c.l.b16 %v1188
        %v1930 = vunpack.c.l.b16 %v1189
        %v1931 = vunpack.c.l.b16 %v1190
        %v1932 = vunpack.c.l.b16 %v1191
        %v1933 = vunpack.c.l.b16 %v1192
        %v1934 = vunpack.c.l.b16 %v1193
        %v1935 = vunpack.c.l.b16 %v1194
        %v1936 = vunpack.c.l.b16 %v1195
        %v1937 = vunpack.c.l.b16 %v1196
        %v1938 = vunpack.c.l.b16 %v1197
        %v1939 = vunpack.c.l.b16 %v1198
        %v1940 = vunpack.c.l.b16 %v1199
        %v1941 = vunpack.c.l.b16 %v1200
        %v1942 = vunpack.c.l.b16 %v1201
        %v1943 = vunpack.c.l.b16 %v1202
        %v1944 = vunpack.c.l.b16 %v1203
        %v1945 = vunpack.c.l.b16 %v1204
        %v1946 = vunpack.c.l.b16 %v1205
        %v1947 = vunpack.c.l.b16 %v1206
        %v1948 = vunpack.c.l.b16 %v1207
        %v1949 = vunpack.c.l.b16 %v1208
        %v1950 = vunpack.c.l.b16 %v1209
        %v1951 = vunpack.c.l.b16 %v1210
        %v1952 = vunpack.c.l.b16 %v1211
        %v1953 = vunpack.c.l.b16 %v1212
        %v1954 = vunpack.c.l.b16 %v1213
        %v1955 = vunpack.c.l.b16 %v1214
        %v1956 = vunpack.c.l.b16 %v1215
        %v1957 = vunpack.c.l.b16 %v1216
        %v1958 = vunpack.c.l.b16 %v1217
        %v1959 = vunpack.c.l.b16 %v1218
        %v1960 = vunpack.c.l.b16 %v1219
        %v1961 = vunpack.c.l.b16 %v1220
        %v1962 = vunpack.c.l.b16 %v1221
        %v1963 = vunpack.c.l.b16 %v1222
        %v1964 = vunpack.c.l.b16 %v1223
        %v1965 = vunpack.c.l.b16 %v1224
        %v1966 = vunpack.c.l.b16 %v1225
        %v1967 = vunpack.c.l.b16 %v1226
        %v1968 = vunpack.c.l.b16 %v1227
        %v1969 = vunpack.c.l.b16 %v1228
        %v1970 = vunpack.c.l.b16 %v1229
        %v1971 = vunpack.c.l.b16 %v1230
        %v1972 = vunpack.c.l.b16 %v1231
        %v1973 = vunpack.c.l.b16 %v1232
        %v1974 = vunpack.c.l.b16 %v1233
        %v1975 = vunpack.c.l.b16 %v1234
        %v1976 = vunpack.c.l.b16 %v1235
        %v1977 = vunpack.c.l.b16 %v1236
        %v1978 = vunpack.c.l.b16 %v1237
        %v1979 = vunpack.c.l.b16 %v1238
        %v1980 = vunpack.c.l.b16 %v1239
        %v1981 = vunpack.c.l.b16 %v1240
        %v1982 = vunpack.c.l.b16 %v1241
        %v1983 = vunpack.c.l.b16 %v1242
        %v1984 = vunpack.c.l.b16 %v1243
        %v1985 = vunpack.c.l.b16 %v1244
        %v1986 = vunpack.c.l.b16 %v1245
        %v1987 = vunpack.c.l.b16 %v1246
        %v1988 = vunpack.c.l.b16 %v1247
        %v1989 = vunpack.c.l.b16 %v1248
        %v1990 = vunpack.c.l.b16 %v1249
        %v1991 = vunpack.c.l.b16 %v1250
        %v1992 = vunpack.c.l.b16 %v1251
        %v1993 = vunpack.c.l.b16 %v1252
        %v1994 = vunpack.c.l.b16 %v1253
        %v1995 = vunpack.c.l.b16 %v1254
        %v1996 = vunpack.c.l.b16 %v1255
        %v1997 = vunpack.c.l.b16 %v1256
        %v1998 = vunpack.c.l.b16 %v1257
        %v1999 = vunpack.c.l.b16 %v1258
        %v2000 = vunpack.c.l.b16 %v1259
        %v2001 = vunpack.c.l.b16 %v1260
        %v2002 = vunpack.c.l.b16 %v1261
        %v2003 = vunpack.c.l.b16 %v1262
        %v2004 = vunpack.c.l.b16 %v1263
        %v2005 = vunpack.c.l.b16 %v1264
        %v2006 = vunpack.c.l.b16 %v1265
        %v2007 = vunpack.c.l.b16 %v1266
        %v2008 = vunpack.c.l.b16 %v1267
        %v2009 = vunpack.c.l.b16 %v1268
        %v2010 = vunpack.c.l.b16 %v1269
        %v2011 = vunpack.c.l.b16 %v1270
        %v2012 = vunpack.c.l.b16 %v1271
        %v2013 = vunpack.c.l.b16 %v1272
        %v2014 = vunpack.c.l.b16 %v1273
        %v2015 = vunpack.c.l.b16 %v1274
        %v2016 = vunpack.c.l.b16 %v1275
        %v2017 = vunpack.c.l.b16 %v1276
        %v2018 = vpack.c.b16 %v1767, %v1766
        %v2019 = vpack.c.b16 %v1769, %v1768
        %v2020 = vpack.c.b16 %v1771, %v1770
        %v2021 = vpack.c.b16 %v1773, %v1772
        %v2022 = vpack.c.b16 %v1775, %v1774
        %v2023 = vpack.c.b16 %v1777, %v1776
        %v2024 = vpack.c.b16 %v1779, %v1778
        %v2025 = vpack.c.b16 %v1781, %v1780
        %v2026 = vpack.c.b16 %v1783, %v1782
        %v2027 = vpack.c.b16 %v1785, %v1784
        %v2028 = vpack.c.b16 %v1787, %v1786
        %v2029 = vpack.c.b16 %v1789, %v1788
        %v2030 = vpack.c.b16 %v1791, %v1790
        %v2031 = vpack.c.b16 %v1793, %v1792
        %v2032 = vpack.c.b16 %v1795, %v1794
        %v2033 = vpack.c.b16 %v1797, %v1796
        %v2034 = vpack.c.b16 %v1799, %v1798
        %v2035 = vpack.c.b16 %v1801, %v1800
        %v2036 = vpack.c.b16 %v1803, %v1802
        %v2037 = vpack.c.b16 %v1805, %v1804
        %v2038 = vpack.c.b16 %v1807, %v1806
        %v2039 = vpack.c.b16 %v1809, %v1808
        %v2040 = vpack.c.b16 %v1811, %v1810
        %v2041 = vpack.c.b16 %v1813, %v1812
        %v2042 = vpack.c.b16 %v1815, %v1814
        %v2043 = vpack.c.b16 %v1817, %v1816
        %v2044 = vpack.c.b16 %v1819, %v1818
        %v2045 = vpack.c.b16 %v1821, %v1820
        %v2046 = vpack.c.b16 %v1823, %v1822
        %v2047 = vpack.c.b16 %v1825, %v1824
        %v2048 = vpack.c.b16 %v1827, %v1826
        %v2049 = vpack.c.b16 %v1829, %v1828
        %v2050 = vpack.c.b16 %v1831, %v1830
        %v2051 = vpack.c.b16 %v1833, %v1832
        %v2052 = vpack.c.b16 %v1835, %v1834
        %v2053 = vpack.c.b16 %v1837, %v1836
        %v2054 = vpack.c.b16 %v1839, %v1838
        %v2055 = vpack.c.b16 %v1841, %v1840
        %v2056 = vpack.c.b16 %v1843, %v1842
        %v2057 = vpack.c.b16 %v1845, %v1844
        %v2058 = vpack.c.b16 %v1847, %v1846
        %v2059 = vpack.c.b16 %v1849, %v1848
        %v2060 = vpack.c.b16 %v1851, %v1850
        %v2061 = vpack.c.b16 %v1853, %v1852
        %v2062 = vpack.c.b16 %v1855, %v1854
        %v2063 = vpack.c.b16 %v1857, %v1856
        %v2064 = vpack.c.b16 %v1859, %v1858
        %v2065 = vpack.c.b16 %v1861, %v1860
        %v2066 = vpack.c.b16 %v1863, %v1862
        %v2067 = vpack.c.b16 %v1865, %v1864
        %v2068 = vpack.c.b16 %v1867, %v1866
        %v2069 = vpack.c.b16 %v1869, %v1868
        %v2070 = vpack.c.b16 %v1871, %v1870
        %v2071 = vpack.c.b16 %v1873, %v1872
        %v2072 = vpack.c.b16 %v1875, %v1874
        %v2073 = vpack.c.b16 %v1877, %v1876
        %v2074 = vpack.c.b16 %v1879, %v1878
        %v2075 = vpack.c.b16 %v1881, %v1880
        %v2076 = vpack.c.b16 %v1883, %v1882
        %v2077 = vpack.c.b16 %v1885, %v1884
        %v2078 = vpack.c.b16 %v1887, %v1886
        %v2079 = vpack.c.b16 %v1889, %v1888
        %v2080 = vpack.c.b16 %v1891, %v1890
        %v2081 = vpack.c.b16 %v1893, %v1892
        %v2082 = vpack.c.b16 %v1895, %v1894
        %v2083 = vpack.c.b16 %v1897, %v1896
        %v2084 = vpack.c.b16 %v1899, %v1898
        %v2085 = vpack.c.b16 %v1901, %v1900
        %v2086 = vpack.c.b16 %v1903, %v1902
        %v2087 = vpack.c.b16 %v1905, %v1904
        %v2088 = vpack.c.b16 %v1907, %v1906
        %v2089 = vpack.c.b16 %v1909, %v1908
        %v2090 = vpack.c.b16 %v1911, %v1910
        %v2091 = vpack.c.b16 %v1913, %v1912
        %v2092 = vpack.c.b16 %v1915, %v1914
        %v2093 = vpack.c.b16 %v1917, %v1916
        %v2094 = vpack.c.b16 %v1919, %v1918
        %v2095 = vpack.c.b16 %v1921, %v1920
        %v2096 = vpack.c.b16 %v1923, %v1922
        %v2097 = vpack.c.b16 %v1925, %v1924
        %v2098 = vpack.c.b16 %v1927, %v1926
        %v2099 = vpack.c.b16 %v1929, %v1928
        %v2100 = vpack.c.b16 %v1931, %v1930
        %v2101 = vpack.c.b16 %v1933, %v1932
        %v2102 = vpack.c.b16 %v1935, %v1934
        %v2103 = vpack.c.b16 %v1937, %v1936
        %v2104 = vpack.c.b16 %v1939, %v1938
        %v2105 = vpack.c.b16 %v1941, %v1940
        %v2106 = vpack.c.b16 %v1943, %v1942
        %v2107 = vpack.c.b16 %v1945, %v1944
        %v2108 = vpack.c.b16 %v1947, %v1946
        %v2109 = vpack.c.b16 %v1949, %v1948
        %v2110 = vpack.c.b16 %v1951, %v1950
        %v2111 = vpack.c.b16 %v1953, %v1952
        %v2112 = vpack.c.b16 %v1955, %v1954
        %v2113 = vpack.c.b16 %v1957, %v1956
        %v2114 = vpack.c.b16 %v1959, %v1958
        %v2115 = vpack.c.b16 %v1961, %v1960
        %v2116 = vpack.c.b16 %v1963, %v1962
        %v2117 = vpack.c.b16 %v1965, %v1964
        %v2118 = vpack.c.b16 %v1967, %v1966
        %v2119 = vpack.c.b16 %v1969, %v1968
        %v2120 = vpack.c.b16 %v1971, %v1970
        %v2121 = vpack.c.b16 %v1973, %v1972
        %v2122 = vpack.c.b16 %v1975, %v1974
        %v2123 = vpack.c.b16 %v1977, %v1976
        %v2124 = vpack.c.b16 %v1979, %v1978
        %v2125 = vpack.c.b16 %v1981, %v1980
        %v2126 = vpack.c.b16 %v1983, %v1982
        %v2127 = vpack.c.b16 %v1985, %v1984
        %v2128 = vpack.c.b16 %v1987, %v1986
        %v2129 = vpack.c.b16 %v1989, %v1988
        %v2130 = vpack.c.b16 %v1991, %v1990
        %v2131 = vpack.c.b16 %v1993, %v1992
        %v2132 = vpack.c.b16 %v1995, %v1994
        %v2133 = vpack.c.b16 %v1997, %v1996
        %v2134 = vpack.c.b16 %v1999, %v1998
        %v2135 = vpack.c.b16 %v2001, %v2000
        %v2136 = vpack.c.b16 %v2003, %v2002
        %v2137 = vpack.c.b16 %v2005, %v2004
        %v2138 = vpack.c.b16 %v2007, %v2006
        %v2139 = vpack.c.b16 %v2009, %v2008
        %v2140 = vpack.c.b16 %v2011, %v2010
        %v2141 = vpack.c.b16 %v2013, %v2012
        %v2142 = vpack.c.b16 %v2015, %v2014
        %v2143 = vpack.c.b16 %v2017, %v2016
        %vm2270 = vcmask 785408
        %v2272 = vsel %vm2270, %v1436, 0
        %v2275 = vsel %vm2270, %v1452, 0
        %v2278 = vsel %vm2270, %v1468, 0
        %2280 = vmatpush.bf16.msra.mxu0 %v2025
        %2281 = vmatpush.bf16.msra.mxu0 %v2024
        %2282 = vmatpush.bf16.msra.mxu0 %v2023
        %2283 = vmatpush.bf16.msra.mxu0 %v2022
        %2284 = vmatpush.bf16.msra.mxu0 %v2021
        %2285 = vmatpush.bf16.msra.mxu0 %v2020
        %2286 = vmatpush.bf16.msra.mxu0 %v2019
        %2287 = vmatpush.bf16.msra.mxu0 %v2018
        %2288 = vmatmul.bf16.gmra.mxu0 %v1421
        %v2289 = vpop.f32.mrf.mxu0
        %v2290 = vadd.f32 0.0, %v2289
        %v2291 = vpop.f32.mrf.mxu0
        %v2292 = vadd.f32 0.0, %v2291
        %2293 = vmatmul.bf16.gmra.mxu0 %v1437
        %v2294 = vpop.f32.mrf.mxu0
        %v2295 = vadd.f32 0.0, %v2294
        %v2296 = vpop.f32.mrf.mxu0
        %v2297 = vadd.f32 0.0, %v2296
        %2298 = vmatmul.bf16.gmra.mxu0 %v1453
        %v2299 = vpop.f32.mrf.mxu0
        %v2300 = vadd.f32 0.0, %v2299
        %v2301 = vpop.f32.mrf.mxu0
        %v2302 = vadd.f32 0.0, %v2301
        %2303 = vdwg.mxu0
        %2304 = vmatpush.bf16.msra.mxu0 %v2033
        %2305 = vmatpush.bf16.msra.mxu0 %v2032
        %2306 = vmatpush.bf16.msra.mxu0 %v2031
        %2307 = vmatpush.bf16.msra.mxu0 %v2030
        %2308 = vmatpush.bf16.msra.mxu0 %v2029
        %2309 = vmatpush.bf16.msra.mxu0 %v2028
        %2310 = vmatpush.bf16.msra.mxu0 %v2027
        %2311 = vmatpush.bf16.msra.mxu0 %v2026
        %2312 = vmatmul.bf16.gmra.mxu0 %v1422
        %v2313 = vpop.f32.mrf.mxu0
        %v2314 = vadd.f32 %v2290, %v2313
        %v2315 = vpop.f32.mrf.mxu0
        %v2316 = vadd.f32 %v2292, %v2315
        %2317 = vmatmul.bf16.gmra.mxu0 %v1438
        %v2318 = vpop.f32.mrf.mxu0
        %v2319 = vadd.f32 %v2295, %v2318
        %v2320 = vpop.f32.mrf.mxu0
        %v2321 = vadd.f32 %v2297, %v2320
        %2322 = vmatmul.bf16.gmra.mxu0 %v1454
        %v2323 = vpop.f32.mrf.mxu0
        %v2324 = vadd.f32 %v2300, %v2323
        %v2325 = vpop.f32.mrf.mxu0
        %v2326 = vadd.f32 %v2302, %v2325
        %2327 = vdwg.mxu0
        %2328 = vmatpush.bf16.msra.mxu0 %v2041
        %2329 = vmatpush.bf16.msra.mxu0 %v2040
        %2330 = vmatpush.bf16.msra.mxu0 %v2039
        %2331 = vmatpush.bf16.msra.mxu0 %v2038
        %2332 = vmatpush.bf16.msra.mxu0 %v2037
        %2333 = vmatpush.bf16.msra.mxu0 %v2036
        %2334 = vmatpush.bf16.msra.mxu0 %v2035
        %2335 = vmatpush.bf16.msra.mxu0 %v2034
        %2336 = vmatmul.bf16.gmra.mxu0 %v1423
        %v2337 = vpop.f32.mrf.mxu0
        %v2338 = vadd.f32 %v2314, %v2337
        %v2339 = vpop.f32.mrf.mxu0
        %v2340 = vadd.f32 %v2316, %v2339
        %2341 = vmatmul.bf16.gmra.mxu0 %v1439
        %v2342 = vpop.f32.mrf.mxu0
        %v2343 = vadd.f32 %v2319, %v2342
        %v2344 = vpop.f32.mrf.mxu0
        %v2345 = vadd.f32 %v2321, %v2344
        %2346 = vmatmul.bf16.gmra.mxu0 %v1455
        %v2347 = vpop.f32.mrf.mxu0
        %v2348 = vadd.f32 %v2324, %v2347
        %v2349 = vpop.f32.mrf.mxu0
        %v2350 = vadd.f32 %v2326, %v2349
        %2351 = vdwg.mxu0
        %2352 = vmatpush.bf16.msra.mxu0 %v2049
        %2353 = vmatpush.bf16.msra.mxu0 %v2048
        %2354 = vmatpush.bf16.msra.mxu0 %v2047
        %2355 = vmatpush.bf16.msra.mxu0 %v2046
        %2356 = vmatpush.bf16.msra.mxu0 %v2045
        %2357 = vmatpush.bf16.msra.mxu0 %v2044
        %2358 = vmatpush.bf16.msra.mxu0 %v2043
        %2359 = vmatpush.bf16.msra.mxu0 %v2042
        %2360 = vmatmul.bf16.gmra.mxu0 %v1424
        %v2361 = vpop.f32.mrf.mxu0
        %v2362 = vadd.f32 %v2338, %v2361
        %v2363 = vpop.f32.mrf.mxu0
        %v2364 = vadd.f32 %v2340, %v2363
        %2365 = vmatmul.bf16.gmra.mxu0 %v1440
        %v2366 = vpop.f32.mrf.mxu0
        %v2367 = vadd.f32 %v2343, %v2366
        %v2368 = vpop.f32.mrf.mxu0
        %v2369 = vadd.f32 %v2345, %v2368
        %2370 = vmatmul.bf16.gmra.mxu0 %v1456
        %v2371 = vpop.f32.mrf.mxu0
        %v2372 = vadd.f32 %v2348, %v2371
        %v2373 = vpop.f32.mrf.mxu0
        %v2374 = vadd.f32 %v2350, %v2373
        %2375 = vdwg.mxu0
        %2376 = vmatpush.bf16.msra.mxu0 %v2057
        %2377 = vmatpush.bf16.msra.mxu0 %v2056
        %2378 = vmatpush.bf16.msra.mxu0 %v2055
        %2379 = vmatpush.bf16.msra.mxu0 %v2054
        %2380 = vmatpush.bf16.msra.mxu0 %v2053
        %2381 = vmatpush.bf16.msra.mxu0 %v2052
        %2382 = vmatpush.bf16.msra.mxu0 %v2051
        %2383 = vmatpush.bf16.msra.mxu0 %v2050
        %2384 = vmatmul.bf16.gmra.mxu0 %v1425
        %v2385 = vpop.f32.mrf.mxu0
        %v2386 = vadd.f32 %v2362, %v2385
        %v2387 = vpop.f32.mrf.mxu0
        %v2388 = vadd.f32 %v2364, %v2387
        %2389 = vmatmul.bf16.gmra.mxu0 %v1441
        %v2390 = vpop.f32.mrf.mxu0
        %v2391 = vadd.f32 %v2367, %v2390
        %v2392 = vpop.f32.mrf.mxu0
        %v2393 = vadd.f32 %v2369, %v2392
        %2394 = vmatmul.bf16.gmra.mxu0 %v1457
        %v2395 = vpop.f32.mrf.mxu0
        %v2396 = vadd.f32 %v2372, %v2395
        %v2397 = vpop.f32.mrf.mxu0
        %v2398 = vadd.f32 %v2374, %v2397
        %2399 = vdwg.mxu0
        %2400 = vmatpush.bf16.msra.mxu0 %v2065
        %2401 = vmatpush.bf16.msra.mxu0 %v2064
        %2402 = vmatpush.bf16.msra.mxu0 %v2063
        %2403 = vmatpush.bf16.msra.mxu0 %v2062
        %2404 = vmatpush.bf16.msra.mxu0 %v2061
        %2405 = vmatpush.bf16.msra.mxu0 %v2060
        %2406 = vmatpush.bf16.msra.mxu0 %v2059
        %2407 = vmatpush.bf16.msra.mxu0 %v2058
        %2408 = vmatmul.bf16.gmra.mxu0 %v1426
        %v2409 = vpop.f32.mrf.mxu0
        %v2410 = vadd.f32 %v2386, %v2409
        %v2411 = vpop.f32.mrf.mxu0
        %v2412 = vadd.f32 %v2388, %v2411
        %2413 = vmatmul.bf16.gmra.mxu0 %v1442
        %v2414 = vpop.f32.mrf.mxu0
        %v2415 = vadd.f32 %v2391, %v2414
        %v2416 = vpop.f32.mrf.mxu0
        %v2417 = vadd.f32 %v2393, %v2416
        %2418 = vmatmul.bf16.gmra.mxu0 %v1458
        %v2419 = vpop.f32.mrf.mxu0
        %v2420 = vadd.f32 %v2396, %v2419
        %v2421 = vpop.f32.mrf.mxu0
        %v2422 = vadd.f32 %v2398, %v2421
        %2423 = vdwg.mxu0
        %2424 = vmatpush.bf16.msra.mxu0 %v2073
        %2425 = vmatpush.bf16.msra.mxu0 %v2072
        %2426 = vmatpush.bf16.msra.mxu0 %v2071
        %2427 = vmatpush.bf16.msra.mxu0 %v2070
        %2428 = vmatpush.bf16.msra.mxu0 %v2069
        %2429 = vmatpush.bf16.msra.mxu0 %v2068
        %2430 = vmatpush.bf16.msra.mxu0 %v2067
        %2431 = vmatpush.bf16.msra.mxu0 %v2066
        %2432 = vmatmul.bf16.gmra.mxu0 %v1427
        %v2433 = vpop.f32.mrf.mxu0
        %v2434 = vadd.f32 %v2410, %v2433
        %v2435 = vpop.f32.mrf.mxu0
        %v2436 = vadd.f32 %v2412, %v2435
        %2437 = vmatmul.bf16.gmra.mxu0 %v1443
        %v2438 = vpop.f32.mrf.mxu0
        %v2439 = vadd.f32 %v2415, %v2438
        %v2440 = vpop.f32.mrf.mxu0
        %v2441 = vadd.f32 %v2417, %v2440
        %2442 = vmatmul.bf16.gmra.mxu0 %v1459
        %v2443 = vpop.f32.mrf.mxu0
        %v2444 = vadd.f32 %v2420, %v2443
        %v2445 = vpop.f32.mrf.mxu0
        %v2446 = vadd.f32 %v2422, %v2445
        %2447 = vdwg.mxu0
        %2448 = vmatpush.bf16.msra.mxu0 %v2081
        %2449 = vmatpush.bf16.msra.mxu0 %v2080
        %2450 = vmatpush.bf16.msra.mxu0 %v2079
        %2451 = vmatpush.bf16.msra.mxu0 %v2078
        %2452 = vmatpush.bf16.msra.mxu0 %v2077
        %2453 = vmatpush.bf16.msra.mxu0 %v2076
        %2454 = vmatpush.bf16.msra.mxu0 %v2075
        %2455 = vmatpush.bf16.msra.mxu0 %v2074
        %2456 = vmatmul.bf16.gmra.mxu0 %v1428
        %v2457 = vpop.f32.mrf.mxu0
        %v2458 = vadd.f32 %v2434, %v2457
        %v2459 = vpop.f32.mrf.mxu0
        %v2460 = vadd.f32 %v2436, %v2459
        %2461 = vmatmul.bf16.gmra.mxu0 %v1444
        %v2462 = vpop.f32.mrf.mxu0
        %v2463 = vadd.f32 %v2439, %v2462
        %v2464 = vpop.f32.mrf.mxu0
        %v2465 = vadd.f32 %v2441, %v2464
        %2466 = vmatmul.bf16.gmra.mxu0 %v1460
        %v2467 = vpop.f32.mrf.mxu0
        %v2468 = vadd.f32 %v2444, %v2467
        %v2469 = vpop.f32.mrf.mxu0
        %v2470 = vadd.f32 %v2446, %v2469
        %2471 = vdwg.mxu0
        %2472 = vmatpush.bf16.msra.mxu0 %v2089
        %2473 = vmatpush.bf16.msra.mxu0 %v2088
        %2474 = vmatpush.bf16.msra.mxu0 %v2087
        %2475 = vmatpush.bf16.msra.mxu0 %v2086
        %2476 = vmatpush.bf16.msra.mxu0 %v2085
        %2477 = vmatpush.bf16.msra.mxu0 %v2084
        %2478 = vmatpush.bf16.msra.mxu0 %v2083
        %2479 = vmatpush.bf16.msra.mxu0 %v2082
        %2480 = vmatmul.bf16.gmra.mxu0 %v1429
        %v2481 = vpop.f32.mrf.mxu0
        %v2482 = vadd.f32 %v2458, %v2481
        %v2483 = vpop.f32.mrf.mxu0
        %v2484 = vadd.f32 %v2460, %v2483
        %2485 = vmatmul.bf16.gmra.mxu0 %v1445
        %v2486 = vpop.f32.mrf.mxu0
        %v2487 = vadd.f32 %v2463, %v2486
        %v2488 = vpop.f32.mrf.mxu0
        %v2489 = vadd.f32 %v2465, %v2488
        %2490 = vmatmul.bf16.gmra.mxu0 %v1461
        %v2491 = vpop.f32.mrf.mxu0
        %v2492 = vadd.f32 %v2468, %v2491
        %v2493 = vpop.f32.mrf.mxu0
        %v2494 = vadd.f32 %v2470, %v2493
        %2495 = vdwg.mxu0
        %2496 = vmatpush.bf16.msra.mxu0 %v2097
        %2497 = vmatpush.bf16.msra.mxu0 %v2096
        %2498 = vmatpush.bf16.msra.mxu0 %v2095
        %2499 = vmatpush.bf16.msra.mxu0 %v2094
        %2500 = vmatpush.bf16.msra.mxu0 %v2093
        %2501 = vmatpush.bf16.msra.mxu0 %v2092
        %2502 = vmatpush.bf16.msra.mxu0 %v2091
        %2503 = vmatpush.bf16.msra.mxu0 %v2090
        %2504 = vmatmul.bf16.gmra.mxu0 %v1430
        %v2505 = vpop.f32.mrf.mxu0
        %v2506 = vadd.f32 %v2482, %v2505
        %v2507 = vpop.f32.mrf.mxu0
        %v2508 = vadd.f32 %v2484, %v2507
        %2509 = vmatmul.bf16.gmra.mxu0 %v1446
        %v2510 = vpop.f32.mrf.mxu0
        %v2511 = vadd.f32 %v2487, %v2510
        %v2512 = vpop.f32.mrf.mxu0
        %v2513 = vadd.f32 %v2489, %v2512
        %2514 = vmatmul.bf16.gmra.mxu0 %v1462
        %v2515 = vpop.f32.mrf.mxu0
        %v2516 = vadd.f32 %v2492, %v2515
        %v2517 = vpop.f32.mrf.mxu0
        %v2518 = vadd.f32 %v2494, %v2517
        %2519 = vdwg.mxu0
        %2520 = vmatpush.bf16.msra.mxu0 %v2105
        %2521 = vmatpush.bf16.msra.mxu0 %v2104
        %2522 = vmatpush.bf16.msra.mxu0 %v2103
        %2523 = vmatpush.bf16.msra.mxu0 %v2102
        %2524 = vmatpush.bf16.msra.mxu0 %v2101
        %2525 = vmatpush.bf16.msra.mxu0 %v2100
        %2526 = vmatpush.bf16.msra.mxu0 %v2099
        %2527 = vmatpush.bf16.msra.mxu0 %v2098
        %2528 = vmatmul.bf16.gmra.mxu0 %v1431
        %v2529 = vpop.f32.mrf.mxu0
        %v2530 = vadd.f32 %v2506, %v2529
        %v2531 = vpop.f32.mrf.mxu0
        %v2532 = vadd.f32 %v2508, %v2531
        %2533 = vmatmul.bf16.gmra.mxu0 %v1447
        %v2534 = vpop.f32.mrf.mxu0
        %v2535 = vadd.f32 %v2511, %v2534
        %v2536 = vpop.f32.mrf.mxu0
        %v2537 = vadd.f32 %v2513, %v2536
        %2538 = vmatmul.bf16.gmra.mxu0 %v1463
        %v2539 = vpop.f32.mrf.mxu0
        %v2540 = vadd.f32 %v2516, %v2539
        %v2541 = vpop.f32.mrf.mxu0
        %v2542 = vadd.f32 %v2518, %v2541
        %2543 = vdwg.mxu0
        %2544 = vmatpush.bf16.msra.mxu0 %v2113
        %2545 = vmatpush.bf16.msra.mxu0 %v2112
        %2546 = vmatpush.bf16.msra.mxu0 %v2111
        %2547 = vmatpush.bf16.msra.mxu0 %v2110
        %2548 = vmatpush.bf16.msra.mxu0 %v2109
        %2549 = vmatpush.bf16.msra.mxu0 %v2108
        %2550 = vmatpush.bf16.msra.mxu0 %v2107
        %2551 = vmatpush.bf16.msra.mxu0 %v2106
        %2552 = vmatmul.bf16.gmra.mxu0 %v1432
        %v2553 = vpop.f32.mrf.mxu0
        %v2554 = vadd.f32 %v2530, %v2553
        %v2555 = vpop.f32.mrf.mxu0
        %v2556 = vadd.f32 %v2532, %v2555
        %2557 = vmatmul.bf16.gmra.mxu0 %v1448
        %v2558 = vpop.f32.mrf.mxu0
        %v2559 = vadd.f32 %v2535, %v2558
        %v2560 = vpop.f32.mrf.mxu0
        %v2561 = vadd.f32 %v2537, %v2560
        %2562 = vmatmul.bf16.gmra.mxu0 %v1464
        %v2563 = vpop.f32.mrf.mxu0
        %v2564 = vadd.f32 %v2540, %v2563
        %v2565 = vpop.f32.mrf.mxu0
        %v2566 = vadd.f32 %v2542, %v2565
        %2567 = vdwg.mxu0
        %2568 = vmatpush.bf16.msra.mxu0 %v2121
        %2569 = vmatpush.bf16.msra.mxu0 %v2120
        %2570 = vmatpush.bf16.msra.mxu0 %v2119
        %2571 = vmatpush.bf16.msra.mxu0 %v2118
        %2572 = vmatpush.bf16.msra.mxu0 %v2117
        %2573 = vmatpush.bf16.msra.mxu0 %v2116
        %2574 = vmatpush.bf16.msra.mxu0 %v2115
        %2575 = vmatpush.bf16.msra.mxu0 %v2114
        %2576 = vmatmul.bf16.gmra.mxu0 %v1433
        %v2577 = vpop.f32.mrf.mxu0
        %v2578 = vadd.f32 %v2554, %v2577
        %v2579 = vpop.f32.mrf.mxu0
        %v2580 = vadd.f32 %v2556, %v2579
        %2581 = vmatmul.bf16.gmra.mxu0 %v1449
        %v2582 = vpop.f32.mrf.mxu0
        %v2583 = vadd.f32 %v2559, %v2582
        %v2584 = vpop.f32.mrf.mxu0
        %v2585 = vadd.f32 %v2561, %v2584
        %2586 = vmatmul.bf16.gmra.mxu0 %v1465
        %v2587 = vpop.f32.mrf.mxu0
        %v2588 = vadd.f32 %v2564, %v2587
        %v2589 = vpop.f32.mrf.mxu0
        %v2590 = vadd.f32 %v2566, %v2589
        %2591 = vdwg.mxu0
        %2592 = vmatpush.bf16.msra.mxu0 %v2129
        %2593 = vmatpush.bf16.msra.mxu0 %v2128
        %2594 = vmatpush.bf16.msra.mxu0 %v2127
        %2595 = vmatpush.bf16.msra.mxu0 %v2126
        %2596 = vmatpush.bf16.msra.mxu0 %v2125
        %2597 = vmatpush.bf16.msra.mxu0 %v2124
        %2598 = vmatpush.bf16.msra.mxu0 %v2123
        %2599 = vmatpush.bf16.msra.mxu0 %v2122
        %2600 = vmatmul.bf16.gmra.mxu0 %v1434
        %v2601 = vpop.f32.mrf.mxu0
        %v2602 = vadd.f32 %v2578, %v2601
        %v2603 = vpop.f32.mrf.mxu0
        %v2604 = vadd.f32 %v2580, %v2603
        %2605 = vmatmul.bf16.gmra.mxu0 %v1450
        %v2606 = vpop.f32.mrf.mxu0
        %v2607 = vadd.f32 %v2583, %v2606
        %v2608 = vpop.f32.mrf.mxu0
        %v2609 = vadd.f32 %v2585, %v2608
        %2610 = vmatmul.bf16.gmra.mxu0 %v1466
        %v2611 = vpop.f32.mrf.mxu0
        %v2612 = vadd.f32 %v2588, %v2611
        %v2613 = vpop.f32.mrf.mxu0
        %v2614 = vadd.f32 %v2590, %v2613
        %2615 = vdwg.mxu0
        %2616 = vmatpush.bf16.msra.mxu0 %v2137
        %2617 = vmatpush.bf16.msra.mxu0 %v2136
        %2618 = vmatpush.bf16.msra.mxu0 %v2135
        %2619 = vmatpush.bf16.msra.mxu0 %v2134
        %2620 = vmatpush.bf16.msra.mxu0 %v2133
        %2621 = vmatpush.bf16.msra.mxu0 %v2132
        %2622 = vmatpush.bf16.msra.mxu0 %v2131
        %2623 = vmatpush.bf16.msra.mxu0 %v2130
        %2624 = vmatmul.bf16.gmra.mxu0 %v1435
        %v2625 = vpop.f32.mrf.mxu0
        %v2626 = vadd.f32 %v2602, %v2625
        %v2627 = vpop.f32.mrf.mxu0
        %v2628 = vadd.f32 %v2604, %v2627
        %2629 = vmatmul.bf16.gmra.mxu0 %v1451
        %v2630 = vpop.f32.mrf.mxu0
        %v2631 = vadd.f32 %v2607, %v2630
        %v2632 = vpop.f32.mrf.mxu0
        %v2633 = vadd.f32 %v2609, %v2632
        %2634 = vmatmul.bf16.gmra.mxu0 %v1467
        %v2635 = vpop.f32.mrf.mxu0
        %v2636 = vadd.f32 %v2612, %v2635
        %v2637 = vpop.f32.mrf.mxu0
        %v2638 = vadd.f32 %v2614, %v2637
        %2639 = vdwg.mxu0
        %2640 = vmatpush.bf16.msra.mxu0 0
        %2641 = vmatpush.bf16.msra.mxu0 0
        %2642 = vmatpush.bf16.msra.mxu0 %v2143
        %2643 = vmatpush.bf16.msra.mxu0 %v2142
        %2644 = vmatpush.bf16.msra.mxu0 %v2141
        %2645 = vmatpush.bf16.msra.mxu0 %v2140
        %2646 = vmatpush.bf16.msra.mxu0 %v2139
        %2647 = vmatpush.bf16.msra.mxu0 %v2138
        %2648 = vmatmul.bf16.gmra.mxu0 %v2272
        %v2649 = vpop.f32.mrf.mxu0
        %v2650 = vadd.f32 %v2626, %v2649
        %v2651 = vpop.f32.mrf.mxu0
        %v2652 = vadd.f32 %v2628, %v2651
        %2653 = vmatmul.bf16.gmra.mxu0 %v2275
        %v2654 = vpop.f32.mrf.mxu0
        %v2655 = vadd.f32 %v2631, %v2654
        %v2656 = vpop.f32.mrf.mxu0
        %v2657 = vadd.f32 %v2633, %v2656
        %2658 = vmatmul.bf16.gmra.mxu0 %v2278
        %v2659 = vpop.f32.mrf.mxu0
        %v2660 = vadd.f32 %v2636, %v2659
        %v2661 = vpop.f32.mrf.mxu0
        %v2662 = vadd.f32 %v2638, %v2661
        %2663 = vdwg.mxu0
        %2664 = vst [vmem:[%s222] sm:$0xff] %v2650
        %2665 = vst [vmem:[%s222 + $0x8] sm:$0xff] %v2652
        %2666 = vst [vmem:[%s222 + $0x10] sm:$0xff] %v2655
        %2667 = vst [vmem:[%s222 + $0x18] sm:$0xff] %v2657
        %2668 = vst [vmem:[%s222 + $0x20] sm:$0xff] %v2660
        %2669 = vst [vmem:[%s222 + $0x28] sm:$0xff] %v2662
        %s2670 = sand.u32 %s98, 1
        %s2671 = scalar_lea.sflag [#allocation5], %s2670
        %s2672 = sand.u32 %s98, 1
        %s2673 = smul.addr %s2672, 48
        %s2674 = scalar_lea.vmem [#allocation8], %s2673
        // Predicated region
        $region37: #{tpu_custom_call.1} parent=27 // pred_check
          %p2675 = pneg %p108
        $region38: #{tpu_custom_call.1} parent=27 // pred_check_branch
          %2677 = sbr.rel (%p2675) target = $region40
        $region39: #{tpu_custom_call.1} parent=27 // pred_region
          %2679 = vsyncadd %s2671, 0
          %s2680 = smul.addr %s26, 6
          %s2681 = sadd.s32 %s27, %s2680
          %s2682 = smul.addr %s2681, 8
          %s2683 = scalar_lea.hbm %s2, %s2682
          %s2684 = sshll.u32 %s2674, 4
          %s2685 = int_to_ptr.vmem [resolvable:$true] %s2684
          %s2686 = sshll.u32 %s2683, 4
          %s2687 = int_to_ptr.hbm [resolvable:$true] %s2686
          %2692 = dma.vmem_to_hbm [thread:$0]  %s2685, 768, %s2687, %s2671, 128, 128, 8
        $region40: #{tpu_custom_call.1} parent=27 // pred_fallthru
          _
      $region28: #{tpu_custom_call.1} parent=5 // pred_fallthru
        _
      %p2693 = scmp.le.s32.totalorder 2, %s17
      // Predicated region
      $region41: #{tpu_custom_call.1} parent=5 // pred_check
        %p2694 = pneg %p2693
      $region42: #{tpu_custom_call.1} parent=5 // pred_check_branch
        %2696 = sbr.rel (%p2694) target = $region44
      $region43: #{tpu_custom_call.1} parent=5 // pred_region
        %s2697 = ssub.s32 %s17, 2
        // Predicated region
        $region45: #{tpu_custom_call.1} parent=43 // pred_check
          %p2698 = pneg %p114
        $region46: #{tpu_custom_call.1} parent=43 // pred_check_branch
          %2700 = sbr.rel (%p2698) target = $region48
        $region47: #{tpu_custom_call.1} parent=43 // pred_region
          %s2701 = sand.u32 %s99, 1
          %s2702 = scalar_lea.sflag [#allocation5], %s2701
          %s2703 = sand.u32 %s99, 1
          %s2704 = smul.addr %s2703, 48
          %s2705 = scalar_lea.vmem [#allocation8], %s2704
          %2707 = dma.done %s2702, 768
        $region48: #{tpu_custom_call.1} parent=43 // pred_fallthru
          _
      $region44: #{tpu_custom_call.1} parent=5 // pred_fallthru
        _
    $region6: #{tpu_custom_call.1} parent=1 // loop_footer
      %s21 = sadd.s32 1, %s17
    $region7: #{tpu_custom_call.1} parent=1 // loop_footer_branch
      %16 = sbr.rel target = $region3
    $region8: #{tpu_custom_call.1} parent=1 // loop_exit
      _
    %2708 = vsyncpa [#allocation4], 1
    %s2709 = scalar_lea.sflag [#allocation4], 1
    %2710 = vsyncpa %s2709, 1
    %2711 = vsyncpa [#allocation7], 1
    %s2712 = scalar_lea.sflag [#allocation7], 1
    %2713 = vsyncpa %s2712, 1
    %2714 = vsyncpa [#allocation5], 1
    %s2715 = scalar_lea.sflag [#allocation5], 1
    %2716 = vsyncpa %s2715, 1

</llo_original>
